<compile_context>
chip_gen: v7x
topology: tpu7x:2x2x1
jax: 0.10.0
libtpu: 0.0.40
codegen_flags: <defaults>
</compile_context>

<pallas_src>
import functools

import jax
import jax.numpy as jnp
from jax import lax
from jax.experimental import pallas as pl
from jax.experimental.pallas import tpu as pltpu

MASK_VALUE = -3.4028234663852886e+38   # -torch.finfo(float32).max
LN_EPS = 1e-5                          # nn.LayerNorm default eps
_VMEM_LIMIT_BYTES = 48 * 1024 * 1024   # explicit scoped-VMEM budget


# ----------------------------- Pallas kernels -------------------------------

def _ln_summary_kernel(eps, scale,
                       q_ref, g_ref, b_ref,
                       mem_ref, maskc_ref, chunkany_ref, pos_ref,
                       wsq_ref, bsq_ref, wsk_ref, bsk_ref,
                       sim_ref, membf_ref):
    """Fused LayerNorm + masked chunk-mean summary + chunk similarity (f32),
    plus the pos-emb-folded bf16 memories for kernel 2."""
    # ---- LayerNorm (f32 on the VPU/EUP); only needed here for the summary queries ----
    x = q_ref[0]                                              # (N, D)
    mu = jnp.mean(x, axis=-1, keepdims=True)
    var = jnp.mean((x - mu) ** 2, axis=-1, keepdims=True)
    nq = (x - mu) * lax.rsqrt(var + LN_EPS) * g_ref[...] + b_ref[...]

    # ---- masked mean over each memory chunk ----
    mem_flat = mem_ref[0]                                     # (NC*c, D) f32
    maskf = maskc_ref[0]                                      # (NC, c)   f32
    nc, c = maskf.shape
    d = mem_flat.shape[-1]
    memc = mem_flat.reshape(nc, c, d)                         # sublane-aligned split
    numer = jnp.sum(memc * maskf[:, :, None], axis=1)         # (NC, D)
    denom = jnp.sum(maskf, axis=1, keepdims=True)             # (NC, 1)
    summ = numer / (denom + eps)

    # ---- summary projections + scaled similarity, all on the MXU ----
    sq = jnp.dot(nq, wsq_ref[...], preferred_element_type=jnp.float32) + bsq_ref[...]
    sk = jnp.dot(summ, wsk_ref[...], preferred_element_type=jnp.float32) + bsk_ref[...]
    sim = lax.dot_general(sq, sk, (((1,), (1,)), ((), ())),   # sq @ sk^T  -> (N, NC)
                          preferred_element_type=jnp.float32) * scale
    sim_ref[0] = jnp.where(chunkany_ref[0] > 0, sim, MASK_VALUE)

    # ---- pos-emb folded into the memories + bf16 cast, consumed by kernel 2 ----
    membf_ref[0] = (mem_flat + pos_ref[...]).astype(jnp.bfloat16)


def _chunk_attn_kernel(heads, dim_head, topk,
                       q_ref, g_ref, b_ref, mem_ref, maskc_ref,
                       w_ref, idx_ref,
                       wq_ref, wkv_ref, wout_ref, bout_ref,
                       out_ref):
    """Within-chunk multi-head attention over ALL chunks of one batch element,
    combined with the top-k softmax gate, output projection and residual."""
    inner = heads * dim_head
    scale = dim_head ** -0.5

    # ---- recompute LayerNorm from the residual queries (avoids a norm_q HBM trip) ----
    x = q_ref[0]                                              # (N, D) f32
    mu = jnp.mean(x, axis=-1, keepdims=True)
    var = jnp.mean((x - mu) ** 2, axis=-1, keepdims=True)
    nq = (x - mu) * lax.rsqrt(var + LN_EPS) * g_ref[...] + b_ref[...]

    mem = mem_ref[0]                                          # (NC*c, D)  bf16 (+pos folded)
    maskf = maskc_ref[0]                                      # (NC, c)    f32
    n = nq.shape[0]
    nc, c = maskf.shape

    # ---- dense per-chunk gate built from the top-k indices / softmax weights ----
    wts = w_ref[0]                                            # (K, N) f32
    idx = idx_ref[0]                                          # (K, N) i32
    chunk_ids = lax.broadcasted_iota(jnp.int32, (nc, n), 0)   # (NC, N)
    gate = jnp.zeros((nc, n), jnp.float32)
    for k in range(topk):                                     # top-k indices are distinct
        gate = gate + jnp.where(chunk_ids == idx[k][None, :], wts[k][None, :], 0.0)

    # ---- projections: bf16 operands, f32 accumulation on the MXU ----
    q = jnp.dot(nq.astype(jnp.bfloat16), wq_ref[...],
                preferred_element_type=jnp.float32) * scale   # (N, inner)
    kv = jnp.dot(mem, wkv_ref[...],
                 preferred_element_type=jnp.float32)          # (NC*c, 2*inner)
    kv = kv.reshape(nc, c, 2 * inner)
    k_all = kv[:, :, :inner]                                  # (NC, c, inner)
    v_all = kv[:, :, inner:]                                  # (NC, c, inner)

    # ---- split heads via lane slices; batch all (head, chunk) pairs together ----
    q_hs = jnp.stack([q[:, h * dim_head:(h + 1) * dim_head]
                      for h in range(heads)], axis=0)         # (H, N, dh)
    q_b = jnp.broadcast_to(q_hs[:, None], (heads, nc, n, dim_head))
    q_b = q_b.reshape(heads * nc, n, dim_head)                # (H*NC, N, dh)
    k_b = jnp.stack([k_all[:, :, h * dim_head:(h + 1) * dim_head]
                     for h in range(heads)], axis=0).reshape(heads * nc, c, dim_head)
    v_b = jnp.stack([v_all[:, :, h * dim_head:(h + 1) * dim_head]
                     for h in range(heads)], axis=0).reshape(heads * nc, c, dim_head)

    # ---- attention scores for every (head, chunk) in ONE batched MXU contraction ----
    sim = jnp.einsum('gnd,gcd->gnc', q_b, k_b,
                     preferred_element_type=jnp.float32)      # (H*NC, N, c)
    sim = sim.reshape(heads, nc, n, c)
    sim = jnp.where(maskf[None, :, None, :] > 0, sim, MASK_VALUE)

    # ---- single masked-softmax pass (f32 on VPU/EUP) ----
    m = jnp.max(sim, axis=-1, keepdims=True)
    p = jnp.exp(sim - m)
    attn = p * pl.reciprocal(jnp.sum(p, axis=-1, keepdims=True), approx=True)

    # ---- fold the top-k gate in; the sum over the chunk axis below then realises
    #      the softmax-weighted top-k combination exactly (gate is zero elsewhere) ----
    attn = attn * gate[None, :, :, None]                      # (H, NC, N, c)
    attn = attn.reshape(heads * nc, n, c)

    o_b = jnp.einsum('gnc,gcd->gnd', attn, v_b,
                     preferred_element_type=jnp.float32)      # (H*NC, N, dh)
    o_h = jnp.sum(o_b.reshape(heads, nc, n, dim_head), axis=1)          # (H, N, dh)
    o_cat = jnp.concatenate([o_h[h] for h in range(heads)], axis=-1)    # (N, inner)

    # ---- single output projection (bf16 operands) + bias + residual ----
    proj = jnp.dot(o_cat.astype(jnp.bfloat16), wout_ref[...],
                   preferred_element_type=jnp.float32)        # (N, D)
    out_ref[0] = proj + bout_ref[...] + x


# ------------------------------- wrapper -------------------------------------

def hcam_block_forward(queries, memories, mask, params, *,
                       heads, dim_head, topk_mems, mem_chunk_size, eps):
    B, N, D = queries.shape
    c = mem_chunk_size
    K = topk_mems
    inner = heads * dim_head

    # pad memories / mask at the FRONT to a multiple of the chunk size
    M = memories.shape[1]
    pad = (-M) % c
    mem_p = jnp.pad(memories, ((0, 0), (pad, 0), (0, 0)))        # (B, NC*c, D)
    mask_p = jnp.pad(mask, ((0, 0), (pad, 0)), constant_values=False)
    NC = mem_p.shape[1] // c
    maskc = mask_p.reshape(B, NC, c).astype(jnp.float32)
    chunk_any = (maskc.max(axis=2) > 0).astype(jnp.float32).reshape(B, 1, NC)

    ln_g = params['ln_g'].reshape(1, D)
    ln_b = params['ln_b'].reshape(1, D)

    # sinusoidal positional embedding (tiled to the flat chunk layout; the add +
    # bf16 cast is done inside kernel 1 so the big memories tensor is only read once)
    freqs = jnp.arange(0.0, D, 2.0)
    inv_freqs = 10000.0 ** (-freqs / D)
    seq = jnp.arange(c - 1, -1, -1.0)
    sinu = seq[:, None] * inv_freqs[None, :]
    pos_emb = jnp.concatenate([jnp.sin(sinu), jnp.cos(sinu)], axis=-1)  # (c, D)
    pos_flat = jnp.tile(pos_emb, (NC, 1))                               # (NC*c, D)

    # ---- kernel 1: fused LayerNorm + chunk-summary similarity + bf16 memories ----
    sim, mem_bf = pl.pallas_call(
        functools.partial(_ln_summary_kernel, float(eps), D ** -0.5),
        out_shape=(jax.ShapeDtypeStruct((B, N, NC), jnp.float32),
                   jax.ShapeDtypeStruct((B, NC * c, D), jnp.bfloat16)),
        grid=(B,),
        in_specs=[pl.BlockSpec((1, N, D), lambda b: (b, 0, 0)),
                  pl.BlockSpec((1, D), lambda b: (0, 0)),
                  pl.BlockSpec((1, D), lambda b: (0, 0)),
                  pl.BlockSpec((1, NC * c, D), lambda b: (b, 0, 0)),
                  pl.BlockSpec((1, NC, c), lambda b: (b, 0, 0)),
                  pl.BlockSpec((1, 1, NC), lambda b: (b, 0, 0)),
                  pl.BlockSpec((NC * c, D), lambda b: (0, 0)),
                  pl.BlockSpec((D, D), lambda b: (0, 0)),
                  pl.BlockSpec((1, D), lambda b: (0, 0)),
                  pl.BlockSpec((D, D), lambda b: (0, 0)),
                  pl.BlockSpec((1, D), lambda b: (0, 0))],
        out_specs=(pl.BlockSpec((1, N, NC), lambda b: (b, 0, 0)),
                   pl.BlockSpec((1, NC * c, D), lambda b: (b, 0, 0))),
        compiler_params=pltpu.CompilerParams(
            dimension_semantics=("parallel",),
            vmem_limit_bytes=_VMEM_LIMIT_BYTES),
    )(queries, ln_g, ln_b, mem_p, maskc, chunk_any, pos_flat,
      params['w_sq'], params['b_sq'].reshape(1, D),
      params['w_sk'], params['b_sk'].reshape(1, D))

    # ---- glue: only the top-k selection stays in XLA; the dense per-chunk gate is
    #      built inside kernel 2 from these tiny (B, K, N) tensors.
    # TODO(synk): lax.top_k has no clean in-kernel Pallas equivalent; it stays in XLA.
    topk_logits, topk_idx = lax.top_k(sim, K)                 # (B, N, K)
    weights = jax.nn.softmax(topk_logits, axis=-1)            # (B, N, K)
    w_t = jnp.transpose(weights, (0, 2, 1))                   # (B, K, N)  (N on lanes)
    idx_t = jnp.transpose(topk_idx, (0, 2, 1)).astype(jnp.int32)

    wq_bf = params['w_q'].astype(jnp.bfloat16)
    wkv_bf = params['w_kv'].astype(jnp.bfloat16)
    wout_bf = params['w_out'].astype(jnp.bfloat16)

    # ---- kernel 2: per-batch chunked multi-head attention + gate + residual ----
    out = pl.pallas_call(
        functools.partial(_chunk_attn_kernel, heads, dim_head, K),
        out_shape=jax.ShapeDtypeStruct((B, N, D), jnp.float32),
        grid=(B,),
        in_specs=[pl.BlockSpec((1, N, D), lambda b: (b, 0, 0)),          # queries (LN recompute + residual)
                  pl.BlockSpec((1, D), lambda b: (0, 0)),                # ln gamma
                  pl.BlockSpec((1, D), lambda b: (0, 0)),                # ln beta
                  pl.BlockSpec((1, NC * c, D), lambda b: (b, 0, 0)),     # memories (+pos), bf16
                  pl.BlockSpec((1, NC, c), lambda b: (b, 0, 0)),         # chunk mask
                  pl.BlockSpec((1, K, N), lambda b: (b, 0, 0)),          # top-k softmax weights
                  pl.BlockSpec((1, K, N), lambda b: (b, 0, 0)),          # top-k chunk indices
                  pl.BlockSpec((D, inner), lambda b: (0, 0)),            # Wq   (bf16)
                  pl.BlockSpec((D, 2 * inner), lambda b: (0, 0)),        # Wkv  (bf16)
                  pl.BlockSpec((inner, D), lambda b: (0, 0)),            # Wout (bf16)
                  pl.BlockSpec((1, D), lambda b: (0, 0))],               # b_out
        out_specs=pl.BlockSpec((1, N, D), lambda b: (b, 0, 0)),
        compiler_params=pltpu.CompilerParams(
            dimension_semantics=("parallel",),
            vmem_limit_bytes=_VMEM_LIMIT_BYTES),
    )(queries, ln_g, ln_b, mem_bf, maskc, w_t, idx_t,
      wq_bf, wkv_bf, wout_bf, params['b_out'].reshape(1, D))
    return out


# --------------------------- pure-JAX reference -------------------------------

def hcam_block_reference(queries, memories, mask, params, *,
                         heads, dim_head, topk_mems, mem_chunk_size, eps):
    B, N, D = queries.shape
    c = mem_chunk_size
    inner = heads * dim_head

    mu = queries.mean(-1, keepdims=True)
    var = ((queries - mu) ** 2).mean(-1, keepdims=True)
    nq = (queries - mu) / jnp.sqrt(var + LN_EPS) * params['ln_g'] + params['ln_b']

    M = memories.shape[1]
    pad = (-M) % c
    mem_p = jnp.pad(memories, ((0, 0), (pad, 0), (0, 0)))
    mask_p = jnp.pad(mask, ((0, 0), (pad, 0)), constant_values=False)
    NC = mem_p.shape[1] // c
    memc = mem_p.reshape(B, NC, c, D)
    maskc = mask_p.reshape(B, NC, c)

    mm = jnp.where(maskc[..., None], memc, 0.0)
    summ = mm.sum(2) / (maskc.sum(2, keepdims=True).astype(jnp.float32) + eps)

    sq = nq @ params['w_sq'] + params['b_sq']
    sk = summ @ params['w_sk'] + params['b_sk']
    sim = jnp.einsum('bid,bjd->bij', sq, sk) * D ** -0.5
    sim = jnp.where(maskc.any(2)[:, None, :], sim, MASK_VALUE)

    topk_logits, topk_idx = lax.top_k(sim, topk_mems)
    weights = jax.nn.softmax(topk_logits, -1)                 # (B, N, K)

    idx = jnp.transpose(topk_idx, (0, 2, 1))
    bidx = jnp.arange(B)[:, None, None]
    sel_mem = memc[bidx, idx]                                 # (B, K, N, c, D)
    sel_mask = maskc[bidx, idx]                               # (B, K, N, c)

    freqs = jnp.arange(0.0, D, 2.0)
    inv_freqs = 10000.0 ** (-freqs / D)
    seq = jnp.arange(c - 1, -1, -1.0)
    sinu = seq[:, None] * inv_freqs[None, :]
    pos = jnp.concatenate([jnp.sin(sinu), jnp.cos(sinu)], -1)
    sel_mem = sel_mem + pos

    q = nq @ params['w_q']
    q = jnp.broadcast_to(q[:, None], (B, topk_mems, N, inner))
    kv = sel_mem @ params['w_kv']
    kk, vv = kv[..., :inner], kv[..., inner:]
    qh = q.reshape(B, topk_mems, N, heads, dim_head) * dim_head ** -0.5
    kh = kk.reshape(B, topk_mems, N, c, heads, dim_head)
    vh = vv.reshape(B, topk_mems, N, c, heads, dim_head)
    simh = jnp.einsum('bknhe,bknche->bknhc', qh, kh)
    simh = jnp.where(sel_mask[:, :, :, None, :], simh, MASK_VALUE)
    attn = jax.nn.softmax(simh, -1)
    outh = jnp.einsum('bknhc,bknche->bknhe', attn, vh)
    out = outh.reshape(B, topk_mems, N, inner) @ params['w_out'] + params['b_out']
    weighted = out * jnp.transpose(weights, (0, 2, 1))[..., None]
    return weighted.sum(1) + queries


# ------------------------------ parameters ------------------------------------

def init_params(key, dim, heads, dim_head):
    inner = heads * dim_head
    ks = jax.random.split(key, 10)

    def lin(k, fan_in, fan_out):
        return jax.random.normal(k, (fan_in, fan_out), jnp.float32) / jnp.sqrt(fan_in)

    return {
        'ln_g': 1.0 + 0.1 * jax.random.normal(ks[0], (dim,), jnp.float32),
        'ln_b': 0.1 * jax.random.normal(ks[1], (dim,), jnp.float32),
        'w_sq': lin(ks[2], dim, dim),
        'b_sq': 0.1 * jax.random.normal(ks[3], (dim,), jnp.float32),
        'w_sk': lin(ks[4], dim, dim),
        'b_sk': 0.1 * jax.random.normal(ks[5], (dim,), jnp.float32),
        'w_q': lin(ks[6], dim, inner),
        'w_kv': lin(ks[7], dim, 2 * inner),
        'w_out': lin(ks[8], inner, dim),
        'b_out': 0.1 * jax.random.normal(ks[9], (dim,), jnp.float32),
    }


if __name__ == "__main__":
    B, N, M, D = 2, 8, 20, 32          # batch, query len, memory len, dim
    heads, dim_head = 4, 8
    topk_mems, mem_chunk_size, eps = 2, 8, 1e-5

    key = jax.random.PRNGKey(0)
    k1, k2, k3, kp = jax.random.split(key, 4)
    queries = jax.random.normal(k1, (B, N, D), jnp.float32)
    memories = jax.random.normal(k2, (B, M, D), jnp.float32)
    mask = jax.random.uniform(k3, (B, M)) > 0.2
    params = init_params(kp, D, heads, dim_head)

    fwd = functools.partial(hcam_block_forward, heads=heads, dim_head=dim_head,
                            topk_mems=topk_mems, mem_chunk_size=mem_chunk_size, eps=eps)
    out = jax.jit(fwd)(queries, memories, mask, params)
    out = jax.block_until_ready(out)

    ref = hcam_block_reference(queries, memories, mask, params,
                               heads=heads, dim_head=dim_head,
                               topk_mems=topk_mems, mem_chunk_size=mem_chunk_size, eps=eps)
    ref = jax.block_until_ready(ref)

    assert out.shape == (B, N, D), out.shape
    # bf16 MXU operands (f32 accumulation) in the attention kernel => slightly
    # looser tolerance than a pure-f32 comparison.
    max_err = float(jnp.max(jnp.abs(out - ref)))
    assert max_err < 1e-1, f"max abs error too large: {max_err}"
    print("KERNEL_OK")
</pallas_src>

<mosaic_0001>
module attributes {stable_mosaic.version = 11 : i64} {
  func.func @_ln_summary_kernel(%arg0: i32, %arg1: memref<1x8x32xf32, #tpu.memory_space<vmem>>, %arg2: memref<1x32xf32, #tpu.memory_space<vmem>>, %arg3: memref<1x32xf32, #tpu.memory_space<vmem>>, %arg4: memref<1x24x32xf32, #tpu.memory_space<vmem>>, %arg5: memref<1x3x8xf32, #tpu.memory_space<vmem>>, %arg6: memref<1x1x3xf32, #tpu.memory_space<vmem>>, %arg7: memref<24x32xf32, #tpu.memory_space<vmem>>, %arg8: memref<32x32xf32, #tpu.memory_space<vmem>>, %arg9: memref<1x32xf32, #tpu.memory_space<vmem>>, %arg10: memref<32x32xf32, #tpu.memory_space<vmem>>, %arg11: memref<1x32xf32, #tpu.memory_space<vmem>>, %arg12: memref<1x8x3xf32, #tpu.memory_space<vmem>>, %arg13: memref<1x24x32xbf16, #tpu.memory_space<vmem>>) attributes {dimension_semantics = [#tpu.dimension_semantics<parallel>], iteration_bounds = array<i64: 2>, scalar_prefetch = 0 : i64, scratch_operands = 0 : i64, tpu.core_type = #tpu.core_type<tc>, window_params = [{transform_indices = @transform_0, window_bounds = array<i64: 1, 8, 32>}, {pipeline_mode = #tpu.pipeline_mode<synchronous>, transform_indices = @transform_1, window_bounds = array<i64: 1, 32>}, {pipeline_mode = #tpu.pipeline_mode<synchronous>, transform_indices = @transform_2, window_bounds = array<i64: 1, 32>}, {transform_indices = @transform_3, window_bounds = array<i64: 1, 24, 32>}, {transform_indices = @transform_4, window_bounds = array<i64: 1, 3, 8>}, {transform_indices = @transform_5, window_bounds = array<i64: 1, 1, 3>}, {pipeline_mode = #tpu.pipeline_mode<synchronous>, transform_indices = @transform_6, window_bounds = array<i64: 24, 32>}, {pipeline_mode = #tpu.pipeline_mode<synchronous>, transform_indices = @transform_7, window_bounds = array<i64: 32, 32>}, {pipeline_mode = #tpu.pipeline_mode<synchronous>, transform_indices = @transform_8, window_bounds = array<i64: 1, 32>}, {pipeline_mode = #tpu.pipeline_mode<synchronous>, transform_indices = @transform_9, window_bounds = array<i64: 32, 32>}, {pipeline_mode = #tpu.pipeline_mode<synchronous>, transform_indices = @transform_10, window_bounds = array<i64: 1, 32>}, {transform_indices = @transform_11, window_bounds = array<i64: 1, 8, 3>}, {transform_indices = @transform_12, window_bounds = array<i64: 1, 24, 32>}]} {
    %c0 = arith.constant 0 : index
    %c0_0 = arith.constant 0 : index
    %c0_1 = arith.constant 0 : index
    %0 = vector.load %arg1[%c0, %c0_0, %c0_1] : memref<1x8x32xf32, #tpu.memory_space<vmem>>, vector<1x8x32xf32>
    %1 = vector.shape_cast %0 : vector<1x8x32xf32> to vector<8x32xf32>
    %cst = arith.constant dense<0.000000e+00> : vector<8xf32>
    %2 = vector.multi_reduction <add>, %1, %cst [1] : vector<8x32xf32> to vector<8xf32>
    %3 = vector.shape_cast %2 : vector<8xf32> to vector<8x1xf32>
    %cst_2 = arith.constant 3.200000e+01 : f32
    %4 = vector.broadcast %cst_2 : f32 to vector<8x1xf32>
    %5 = arith.divf %3, %4 : vector<8x1xf32>
    %6 = vector.broadcast %5 : vector<8x1xf32> to vector<8x32xf32>
    %7 = arith.subf %1, %6 : vector<8x32xf32>
    %8 = arith.mulf %7, %7 : vector<8x32xf32>
    %cst_3 = arith.constant dense<0.000000e+00> : vector<8xf32>
    %9 = vector.multi_reduction <add>, %8, %cst_3 [1] : vector<8x32xf32> to vector<8xf32>
    %10 = vector.shape_cast %9 : vector<8xf32> to vector<8x1xf32>
    %cst_4 = arith.constant 3.200000e+01 : f32
    %11 = vector.broadcast %cst_4 : f32 to vector<8x1xf32>
    %12 = arith.divf %10, %11 : vector<8x1xf32>
    %13 = vector.broadcast %5 : vector<8x1xf32> to vector<8x32xf32>
    %14 = arith.subf %1, %13 : vector<8x32xf32>
    %cst_5 = arith.constant 9.99999974E-6 : f32
    %15 = vector.broadcast %cst_5 : f32 to vector<8x1xf32>
    %16 = arith.addf %12, %15 : vector<8x1xf32>
    %17 = math.rsqrt %16 : vector<8x1xf32>
    %18 = vector.broadcast %17 : vector<8x1xf32> to vector<8x32xf32>
    %19 = arith.mulf %14, %18 : vector<8x32xf32>
    %c0_6 = arith.constant 0 : index
    %c0_7 = arith.constant 0 : index
    %20 = vector.load %arg2[%c0_6, %c0_7] : memref<1x32xf32, #tpu.memory_space<vmem>>, vector<1x32xf32>
    %21 = vector.broadcast %20 : vector<1x32xf32> to vector<8x32xf32>
    %22 = arith.mulf %19, %21 : vector<8x32xf32>
    %c0_8 = arith.constant 0 : index
    %c0_9 = arith.constant 0 : index
    %23 = vector.load %arg3[%c0_8, %c0_9] : memref<1x32xf32, #tpu.memory_space<vmem>>, vector<1x32xf32>
    %24 = vector.broadcast %23 : vector<1x32xf32> to vector<8x32xf32>
    %25 = arith.addf %22, %24 : vector<8x32xf32>
    %c0_10 = arith.constant 0 : index
    %c0_11 = arith.constant 0 : index
    %c0_12 = arith.constant 0 : index
    %26 = vector.load %arg4[%c0_10, %c0_11, %c0_12] : memref<1x24x32xf32, #tpu.memory_space<vmem>>, vector<1x24x32xf32>
    %27 = vector.shape_cast %26 : vector<1x24x32xf32> to vector<24x32xf32>
    %c0_13 = arith.constant 0 : index
    %c0_14 = arith.constant 0 : index
    %c0_15 = arith.constant 0 : index
    %28 = vector.load %arg5[%c0_13, %c0_14, %c0_15] : memref<1x3x8xf32, #tpu.memory_space<vmem>>, vector<1x3x8xf32>
    %29 = vector.shape_cast %28 : vector<1x3x8xf32> to vector<3x8xf32>
    %30 = vector.shape_cast %27 : vector<24x32xf32> to vector<3x8x32xf32>
    %31 = vector.shape_cast %29 : vector<3x8xf32> to vector<3x8x1xf32>
    %32 = vector.broadcast %31 : vector<3x8x1xf32> to vector<3x8x32xf32>
    %33 = arith.mulf %30, %32 : vector<3x8x32xf32>
    %cst_16 = arith.constant dense<0.000000e+00> : vector<3x32xf32>
    %34 = vector.multi_reduction <add>, %33, %cst_16 [1] : vector<3x8x32xf32> to vector<3x32xf32>
    %cst_17 = arith.constant dense<0.000000e+00> : vector<3xf32>
    %35 = vector.multi_reduction <add>, %29, %cst_17 [1] : vector<3x8xf32> to vector<3xf32>
    %36 = vector.shape_cast %35 : vector<3xf32> to vector<3x1xf32>
    %cst_18 = arith.constant 9.99999974E-6 : f32
    %37 = vector.broadcast %cst_18 : f32 to vector<3x1xf32>
    %38 = arith.addf %36, %37 : vector<3x1xf32>
    %39 = vector.broadcast %38 : vector<3x1xf32> to vector<3x32xf32>
    %40 = arith.divf %34, %39 : vector<3x32xf32>
    %c0_19 = arith.constant 0 : index
    %c0_20 = arith.constant 0 : index
    %41 = vector.load %arg8[%c0_19, %c0_20] : memref<32x32xf32, #tpu.memory_space<vmem>>, vector<32x32xf32>
    %cst_21 = arith.constant dense<0.000000e+00> : vector<8x32xf32>
    %42 = tpu.matmul %25, %41, %cst_21 {dimension_numbers = #tpu.dot_dimension_numbers<[1], [0], [0], [1], [0, 0, 1, 1], [], []>} : vector<8x32xf32>, vector<32x32xf32>, vector<8x32xf32> -> vector<8x32xf32>
    %c0_22 = arith.constant 0 : index
    %c0_23 = arith.constant 0 : index
    %43 = vector.load %arg9[%c0_22, %c0_23] : memref<1x32xf32, #tpu.memory_space<vmem>>, vector<1x32xf32>
    %44 = vector.broadcast %43 : vector<1x32xf32> to vector<8x32xf32>
    %45 = arith.addf %42, %44 : vector<8x32xf32>
    %c0_24 = arith.constant 0 : index
    %c0_25 = arith.constant 0 : index
    %46 = vector.load %arg10[%c0_24, %c0_25] : memref<32x32xf32, #tpu.memory_space<vmem>>, vector<32x32xf32>
    %cst_26 = arith.constant dense<0.000000e+00> : vector<3x32xf32>
    %47 = tpu.matmul %40, %46, %cst_26 {dimension_numbers = #tpu.dot_dimension_numbers<[1], [0], [0], [1], [0, 0, 1, 1], [], []>} : vector<3x32xf32>, vector<32x32xf32>, vector<3x32xf32> -> vector<3x32xf32>
    %c0_27 = arith.constant 0 : index
    %c0_28 = arith.constant 0 : index
    %48 = vector.load %arg11[%c0_27, %c0_28] : memref<1x32xf32, #tpu.memory_space<vmem>>, vector<1x32xf32>
    %49 = vector.broadcast %48 : vector<1x32xf32> to vector<3x32xf32>
    %50 = arith.addf %47, %49 : vector<3x32xf32>
    %cst_29 = arith.constant dense<0.000000e+00> : vector<8x3xf32>
    %51 = tpu.matmul %45, %50, %cst_29 {dimension_numbers = #tpu.dot_dimension_numbers<[1], [1], [0], [0], [0, 0, 1, 0], [], []>} : vector<8x32xf32>, vector<3x32xf32>, vector<8x3xf32> -> vector<8x3xf32>
    %cst_30 = arith.constant 0.176776692 : f32
    %52 = vector.broadcast %cst_30 : f32 to vector<8x3xf32>
    %53 = arith.mulf %51, %52 : vector<8x3xf32>
    %c0_31 = arith.constant 0 : index
    %c0_32 = arith.constant 0 : index
    %c0_33 = arith.constant 0 : index
    %54 = vector.load %arg6[%c0_31, %c0_32, %c0_33] : memref<1x1x3xf32, #tpu.memory_space<vmem>>, vector<1x1x3xf32>
    %55 = vector.shape_cast %54 : vector<1x1x3xf32> to vector<1x3xf32>
    %cst_34 = arith.constant 0.000000e+00 : f32
    %56 = vector.broadcast %cst_34 : f32 to vector<1x3xf32>
    %57 = arith.cmpf ogt, %55, %56 : vector<1x3xf32>
    %cst_35 = arith.constant -3.40282347E+38 : f32
    %58 = vector.shape_cast %57 : vector<1x3xi1> to vector<1x3xi1>
    %59 = vector.broadcast %58 : vector<1x3xi1> to vector<8x3xi1>
    %60 = vector.broadcast %cst_35 : f32 to vector<8x3xf32>
    %61 = arith.select %59, %53, %60 : vector<8x3xi1>, vector<8x3xf32>
    %c0_36 = arith.constant 0 : index
    %c0_37 = arith.constant 0 : index
    %c0_38 = arith.constant 0 : index
    %62 = vector.load %arg12[%c0_36, %c0_37, %c0_38] : memref<1x8x3xf32, #tpu.memory_space<vmem>>, vector<1x8x3xf32>
    %63 = vector.shape_cast %62 : vector<1x8x3xf32> to vector<8x3xf32>
    %64 = vector.shape_cast %61 : vector<8x3xf32> to vector<1x8x3xf32>
    tpu.vector_store %arg12[%c0_36, %c0_37, %c0_38], %64 {strides = array<i32>} : memref<1x8x3xf32, #tpu.memory_space<vmem>>, vector<1x8x3xf32>,
    %c0_39 = arith.constant 0 : index
    %c0_40 = arith.constant 0 : index
    %65 = vector.load %arg7[%c0_39, %c0_40] : memref<24x32xf32, #tpu.memory_space<vmem>>, vector<24x32xf32>
    %66 = arith.addf %27, %65 : vector<24x32xf32>
    %67 = arith.truncf %66 : vector<24x32xf32> to vector<24x32xbf16>
    %c0_41 = arith.constant 0 : index
    %c0_42 = arith.constant 0 : index
    %c0_43 = arith.constant 0 : index
    %68 = vector.load %arg13[%c0_41, %c0_42, %c0_43] : memref<1x24x32xbf16, #tpu.memory_space<vmem>>, vector<1x24x32xbf16>
    %69 = vector.shape_cast %68 : vector<1x24x32xbf16> to vector<24x32xbf16>
    %70 = vector.shape_cast %67 : vector<24x32xbf16> to vector<1x24x32xbf16>
    tpu.vector_store %arg13[%c0_41, %c0_42, %c0_43], %70 {strides = array<i32>} : memref<1x24x32xbf16, #tpu.memory_space<vmem>>, vector<1x24x32xbf16>,
    return
  }
  func.func @transform_0(%arg0: i32) -> (i32, i32, i32) {
    %c0_i32 = arith.constant 0 : i32
    %c0_i32_0 = arith.constant 0 : i32
    %c0_i32_1 = arith.constant 0 : i32
    return %arg0, %c0_i32, %c0_i32_0 : i32, i32, i32
  }
  func.func @transform_1(%arg0: i32) -> (i32, i32) {
    %c0_i32 = arith.constant 0 : i32
    %c0_i32_0 = arith.constant 0 : i32
    %c0_i32_1 = arith.constant 0 : i32
    return %c0_i32, %c0_i32_0 : i32, i32
  }
  func.func @transform_2(%arg0: i32) -> (i32, i32) {
    %c0_i32 = arith.constant 0 : i32
    %c0_i32_0 = arith.constant 0 : i32
    %c0_i32_1 = arith.constant 0 : i32
    return %c0_i32, %c0_i32_0 : i32, i32
  }
  func.func @transform_3(%arg0: i32) -> (i32, i32, i32) {
    %c0_i32 = arith.constant 0 : i32
    %c0_i32_0 = arith.constant 0 : i32
    %c0_i32_1 = arith.constant 0 : i32
    return %arg0, %c0_i32, %c0_i32_0 : i32, i32, i32
  }
  func.func @transform_4(%arg0: i32) -> (i32, i32, i32) {
    %c0_i32 = arith.constant 0 : i32
    %c0_i32_0 = arith.constant 0 : i32
    %c0_i32_1 = arith.constant 0 : i32
    return %arg0, %c0_i32, %c0_i32_0 : i32, i32, i32
  }
  func.func @transform_5(%arg0: i32) -> (i32, i32, i32) {
    %c0_i32 = arith.constant 0 : i32
    %c0_i32_0 = arith.constant 0 : i32
    %c0_i32_1 = arith.constant 0 : i32
    return %arg0, %c0_i32, %c0_i32_0 : i32, i32, i32
  }
  func.func @transform_6(%arg0: i32) -> (i32, i32) {
    %c0_i32 = arith.constant 0 : i32
    %c0_i32_0 = arith.constant 0 : i32
    %c0_i32_1 = arith.constant 0 : i32
    return %c0_i32, %c0_i32_0 : i32, i32
  }
  func.func @transform_7(%arg0: i32) -> (i32, i32) {
    %c0_i32 = arith.constant 0 : i32
    %c0_i32_0 = arith.constant 0 : i32
    %c0_i32_1 = arith.constant 0 : i32
    return %c0_i32, %c0_i32_0 : i32, i32
  }
  func.func @transform_8(%arg0: i32) -> (i32, i32) {
    %c0_i32 = arith.constant 0 : i32
    %c0_i32_0 = arith.constant 0 : i32
    %c0_i32_1 = arith.constant 0 : i32
    return %c0_i32, %c0_i32_0 : i32, i32
  }
  func.func @transform_9(%arg0: i32) -> (i32, i32) {
    %c0_i32 = arith.constant 0 : i32
    %c0_i32_0 = arith.constant 0 : i32
    %c0_i32_1 = arith.constant 0 : i32
    return %c0_i32, %c0_i32_0 : i32, i32
  }
  func.func @transform_10(%arg0: i32) -> (i32, i32) {
    %c0_i32 = arith.constant 0 : i32
    %c0_i32_0 = arith.constant 0 : i32
    %c0_i32_1 = arith.constant 0 : i32
    return %c0_i32, %c0_i32_0 : i32, i32
  }
  func.func @transform_11(%arg0: i32) -> (i32, i32, i32) {
    %c0_i32 = arith.constant 0 : i32
    %c0_i32_0 = arith.constant 0 : i32
    %c0_i32_1 = arith.constant 0 : i32
    return %arg0, %c0_i32, %c0_i32_0 : i32, i32, i32
  }
  func.func @transform_12(%arg0: i32) -> (i32, i32, i32) {
    %c0_i32 = arith.constant 0 : i32
    %c0_i32_0 = arith.constant 0 : i32
    %c0_i32_1 = arith.constant 0 : i32
    return %arg0, %c0_i32, %c0_i32_0 : i32, i32, i32
  }
}

module attributes {stable_mosaic.version = 11 : i64} {
  func.func @_chunk_attn_kernel(%arg0: i32, %arg1: memref<1x8x32xf32, #tpu.memory_space<vmem>>, %arg2: memref<1x32xf32, #tpu.memory_space<vmem>>, %arg3: memref<1x32xf32, #tpu.memory_space<vmem>>, %arg4: memref<1x24x32xbf16, #tpu.memory_space<vmem>>, %arg5: memref<1x3x8xf32, #tpu.memory_space<vmem>>, %arg6: memref<1x2x8xf32, #tpu.memory_space<vmem>>, %arg7: memref<1x2x8xi32, #tpu.memory_space<vmem>>, %arg8: memref<32x32xbf16, #tpu.memory_space<vmem>>, %arg9: memref<32x64xbf16, #tpu.memory_space<vmem>>, %arg10: memref<32x32xbf16, #tpu.memory_space<vmem>>, %arg11: memref<1x32xf32, #tpu.memory_space<vmem>>, %arg12: memref<1x8x32xf32, #tpu.memory_space<vmem>>) attributes {dimension_semantics = [#tpu.dimension_semantics<parallel>], iteration_bounds = array<i64: 2>, scalar_prefetch = 0 : i64, scratch_operands = 0 : i64, tpu.core_type = #tpu.core_type<tc>, window_params = [{transform_indices = @transform_0, window_bounds = array<i64: 1, 8, 32>}, {pipeline_mode = #tpu.pipeline_mode<synchronous>, transform_indices = @transform_1, window_bounds = array<i64: 1, 32>}, {pipeline_mode = #tpu.pipeline_mode<synchronous>, transform_indices = @transform_2, window_bounds = array<i64: 1, 32>}, {transform_indices = @transform_3, window_bounds = array<i64: 1, 24, 32>}, {transform_indices = @transform_4, window_bounds = array<i64: 1, 3, 8>}, {transform_indices = @transform_5, window_bounds = array<i64: 1, 2, 8>}, {transform_indices = @transform_6, window_bounds = array<i64: 1, 2, 8>}, {pipeline_mode = #tpu.pipeline_mode<synchronous>, transform_indices = @transform_7, window_bounds = array<i64: 32, 32>}, {pipeline_mode = #tpu.pipeline_mode<synchronous>, transform_indices = @transform_8, window_bounds = array<i64: 32, 64>}, {pipeline_mode = #tpu.pipeline_mode<synchronous>, transform_indices = @transform_9, window_bounds = array<i64: 32, 32>}, {pipeline_mode = #tpu.pipeline_mode<synchronous>, transform_indices = @transform_10, window_bounds = array<i64: 1, 32>}, {transform_indices = @transform_11, window_bounds = array<i64: 1, 8, 32>}]} {
    %c0 = arith.constant 0 : index
    %c0_0 = arith.constant 0 : index
    %c0_1 = arith.constant 0 : index
    %0 = vector.load %arg1[%c0, %c0_0, %c0_1] : memref<1x8x32xf32, #tpu.memory_space<vmem>>, vector<1x8x32xf32>
    %1 = vector.shape_cast %0 : vector<1x8x32xf32> to vector<8x32xf32>
    %cst = arith.constant dense<0.000000e+00> : vector<8xf32>
    %2 = vector.multi_reduction <add>, %1, %cst [1] : vector<8x32xf32> to vector<8xf32>
    %3 = vector.shape_cast %2 : vector<8xf32> to vector<8x1xf32>
    %cst_2 = arith.constant 3.200000e+01 : f32
    %4 = vector.broadcast %cst_2 : f32 to vector<8x1xf32>
    %5 = arith.divf %3, %4 : vector<8x1xf32>
    %6 = vector.broadcast %5 : vector<8x1xf32> to vector<8x32xf32>
    %7 = arith.subf %1, %6 : vector<8x32xf32>
    %8 = arith.mulf %7, %7 : vector<8x32xf32>
    %cst_3 = arith.constant dense<0.000000e+00> : vector<8xf32>
    %9 = vector.multi_reduction <add>, %8, %cst_3 [1] : vector<8x32xf32> to vector<8xf32>
    %10 = vector.shape_cast %9 : vector<8xf32> to vector<8x1xf32>
    %cst_4 = arith.constant 3.200000e+01 : f32
    %11 = vector.broadcast %cst_4 : f32 to vector<8x1xf32>
    %12 = arith.divf %10, %11 : vector<8x1xf32>
    %13 = vector.broadcast %5 : vector<8x1xf32> to vector<8x32xf32>
    %14 = arith.subf %1, %13 : vector<8x32xf32>
    %cst_5 = arith.constant 9.99999974E-6 : f32
    %15 = vector.broadcast %cst_5 : f32 to vector<8x1xf32>
    %16 = arith.addf %12, %15 : vector<8x1xf32>
    %17 = math.rsqrt %16 : vector<8x1xf32>
    %18 = vector.broadcast %17 : vector<8x1xf32> to vector<8x32xf32>
    %19 = arith.mulf %14, %18 : vector<8x32xf32>
    %c0_6 = arith.constant 0 : index
    %c0_7 = arith.constant 0 : index
    %20 = vector.load %arg2[%c0_6, %c0_7] : memref<1x32xf32, #tpu.memory_space<vmem>>, vector<1x32xf32>
    %21 = vector.broadcast %20 : vector<1x32xf32> to vector<8x32xf32>
    %22 = arith.mulf %19, %21 : vector<8x32xf32>
    %c0_8 = arith.constant 0 : index
    %c0_9 = arith.constant 0 : index
    %23 = vector.load %arg3[%c0_8, %c0_9] : memref<1x32xf32, #tpu.memory_space<vmem>>, vector<1x32xf32>
    %24 = vector.broadcast %23 : vector<1x32xf32> to vector<8x32xf32>
    %25 = arith.addf %22, %24 : vector<8x32xf32>
    %c0_10 = arith.constant 0 : index
    %c0_11 = arith.constant 0 : index
    %c0_12 = arith.constant 0 : index
    %26 = vector.load %arg4[%c0_10, %c0_11, %c0_12] : memref<1x24x32xbf16, #tpu.memory_space<vmem>>, vector<1x24x32xbf16>
    %27 = vector.shape_cast %26 : vector<1x24x32xbf16> to vector<24x32xbf16>
    %c0_13 = arith.constant 0 : index
    %c0_14 = arith.constant 0 : index
    %c0_15 = arith.constant 0 : index
    %28 = vector.load %arg5[%c0_13, %c0_14, %c0_15] : memref<1x3x8xf32, #tpu.memory_space<vmem>>, vector<1x3x8xf32>
    %29 = vector.shape_cast %28 : vector<1x3x8xf32> to vector<3x8xf32>
    %c0_16 = arith.constant 0 : index
    %c0_17 = arith.constant 0 : index
    %c0_18 = arith.constant 0 : index
    %30 = vector.load %arg6[%c0_16, %c0_17, %c0_18] : memref<1x2x8xf32, #tpu.memory_space<vmem>>, vector<1x2x8xf32>
    %31 = vector.shape_cast %30 : vector<1x2x8xf32> to vector<2x8xf32>
    %c0_19 = arith.constant 0 : index
    %c0_20 = arith.constant 0 : index
    %c0_21 = arith.constant 0 : index
    %32 = vector.load %arg7[%c0_19, %c0_20, %c0_21] : memref<1x2x8xi32, #tpu.memory_space<vmem>>, vector<1x2x8xi32>
    %33 = vector.shape_cast %32 : vector<1x2x8xi32> to vector<2x8xi32>
    %34 = tpu.iota {dimensions = array<i32: 0>} : vector<3x8xi32>
    %cst_22 = arith.constant 0.000000e+00 : f32
    %35 = vector.broadcast %cst_22 : f32 to vector<3x8xf32>
    %36 = vector.extract_strided_slice %33 {offsets = [0, 0], sizes = [1, 8], strides = [1, 1]} : vector<2x8xi32> to vector<1x8xi32>
    %37 = vector.shape_cast %36 : vector<1x8xi32> to vector<8xi32>
    %38 = vector.shape_cast %37 : vector<8xi32> to vector<1x8xi32>
    %39 = vector.broadcast %38 : vector<1x8xi32> to vector<3x8xi32>
    %40 = arith.cmpi eq, %34, %39 : vector<3x8xi32>
    %41 = vector.extract_strided_slice %31 {offsets = [0, 0], sizes = [1, 8], strides = [1, 1]} : vector<2x8xf32> to vector<1x8xf32>
    %42 = vector.shape_cast %41 : vector<1x8xf32> to vector<8xf32>
    %43 = vector.shape_cast %42 : vector<8xf32> to vector<1x8xf32>
    %cst_23 = arith.constant 0.000000e+00 : f32
    %44 = vector.shape_cast %43 : vector<1x8xf32> to vector<1x8xf32>
    %45 = vector.broadcast %44 : vector<1x8xf32> to vector<3x8xf32>
    %46 = vector.broadcast %cst_23 : f32 to vector<3x8xf32>
    %47 = arith.select %40, %45, %46 : vector<3x8xi1>, vector<3x8xf32>
    %48 = arith.addf %35, %47 : vector<3x8xf32>
    %49 = vector.extract_strided_slice %33 {offsets = [1, 0], sizes = [1, 8], strides = [1, 1]} : vector<2x8xi32> to vector<1x8xi32>
    %50 = vector.shape_cast %49 : vector<1x8xi32> to vector<8xi32>
    %51 = vector.shape_cast %50 : vector<8xi32> to vector<1x8xi32>
    %52 = vector.broadcast %51 : vector<1x8xi32> to vector<3x8xi32>
    %53 = arith.cmpi eq, %34, %52 : vector<3x8xi32>
    %54 = vector.extract_strided_slice %31 {offsets = [1, 0], sizes = [1, 8], strides = [1, 1]} : vector<2x8xf32> to vector<1x8xf32>
    %55 = vector.shape_cast %54 : vector<1x8xf32> to vector<8xf32>
    %56 = vector.shape_cast %55 : vector<8xf32> to vector<1x8xf32>
    %cst_24 = arith.constant 0.000000e+00 : f32
    %57 = vector.shape_cast %56 : vector<1x8xf32> to vector<1x8xf32>
    %58 = vector.broadcast %57 : vector<1x8xf32> to vector<3x8xf32>
    %59 = vector.broadcast %cst_24 : f32 to vector<3x8xf32>
    %60 = arith.select %53, %58, %59 : vector<3x8xi1>, vector<3x8xf32>
    %61 = arith.addf %48, %60 : vector<3x8xf32>
    %62 = arith.truncf %25 : vector<8x32xf32> to vector<8x32xbf16>
    %c0_25 = arith.constant 0 : index
    %c0_26 = arith.constant 0 : index
    %63 = vector.load %arg8[%c0_25, %c0_26] : memref<32x32xbf16, #tpu.memory_space<vmem>>, vector<32x32xbf16>
    %cst_27 = arith.constant dense<0.000000e+00> : vector<8x32xf32>
    %64 = tpu.matmul %62, %63, %cst_27 {dimension_numbers = #tpu.dot_dimension_numbers<[1], [0], [0], [1], [0, 0, 1, 1], [], []>} : vector<8x32xbf16>, vector<32x32xbf16>, vector<8x32xf32> -> vector<8x32xf32>
    %cst_28 = arith.constant 0.353553385 : f32
    %65 = vector.broadcast %cst_28 : f32 to vector<8x32xf32>
    %66 = arith.mulf %64, %65 : vector<8x32xf32>
    %c0_29 = arith.constant 0 : index
    %c0_30 = arith.constant 0 : index
    %67 = vector.load %arg9[%c0_29, %c0_30] : memref<32x64xbf16, #tpu.memory_space<vmem>>, vector<32x64xbf16>
    %cst_31 = arith.constant dense<0.000000e+00> : vector<24x64xf32>
    %68 = tpu.matmul %27, %67, %cst_31 {dimension_numbers = #tpu.dot_dimension_numbers<[1], [0], [0], [1], [0, 0, 1, 1], [], []>} : vector<24x32xbf16>, vector<32x64xbf16>, vector<24x64xf32> -> vector<24x64xf32>
    %69 = vector.shape_cast %68 : vector<24x64xf32> to vector<3x8x64xf32>
    %70 = vector.extract_strided_slice %69 {offsets = [0, 0, 0], sizes = [3, 8, 32], strides = [1, 1, 1]} : vector<3x8x64xf32> to vector<3x8x32xf32>
    %71 = vector.extract_strided_slice %69 {offsets = [0, 0, 32], sizes = [3, 8, 32], strides = [1, 1, 1]} : vector<3x8x64xf32> to vector<3x8x32xf32>
    %72 = vector.extract_strided_slice %66 {offsets = [0, 0], sizes = [8, 8], strides = [1, 1]} : vector<8x32xf32> to vector<8x8xf32>
    %73 = vector.extract_strided_slice %66 {offsets = [0, 8], sizes = [8, 8], strides = [1, 1]} : vector<8x32xf32> to vector<8x8xf32>
    %74 = vector.extract_strided_slice %66 {offsets = [0, 16], sizes = [8, 8], strides = [1, 1]} : vector<8x32xf32> to vector<8x8xf32>
    %75 = vector.extract_strided_slice %66 {offsets = [0, 24], sizes = [8, 8], strides = [1, 1]} : vector<8x32xf32> to vector<8x8xf32>
    %76 = vector.shape_cast %72 : vector<8x8xf32> to vector<1x8x8xf32>
    %77 = vector.shape_cast %73 : vector<8x8xf32> to vector<1x8x8xf32>
    %78 = vector.shape_cast %74 : vector<8x8xf32> to vector<1x8x8xf32>
    %79 = vector.shape_cast %75 : vector<8x8xf32> to vector<1x8x8xf32>
    %80 = tpu.concatenate %76, %77, %78, %79 in 0 : vector<1x8x8xf32>, vector<1x8x8xf32>, vector<1x8x8xf32>, vector<1x8x8xf32> -> vector<4x8x8xf32>
    %81 = vector.shape_cast %80 : vector<4x8x8xf32> to vector<4x1x8x8xf32>
    %82 = vector.shape_cast %81 : vector<4x1x8x8xf32> to vector<4x1x8x8xf32>
    %83 = vector.broadcast %82 : vector<4x1x8x8xf32> to vector<4x3x8x8xf32>
    %84 = vector.shape_cast %83 : vector<4x3x8x8xf32> to vector<12x8x8xf32>
    %85 = vector.extract_strided_slice %70 {offsets = [0, 0, 0], sizes = [3, 8, 8], strides = [1, 1, 1]} : vector<3x8x32xf32> to vector<3x8x8xf32>
    %86 = vector.extract_strided_slice %70 {offsets = [0, 0, 8], sizes = [3, 8, 8], strides = [1, 1, 1]} : vector<3x8x32xf32> to vector<3x8x8xf32>
    %87 = vector.extract_strided_slice %70 {offsets = [0, 0, 16], sizes = [3, 8, 8], strides = [1, 1, 1]} : vector<3x8x32xf32> to vector<3x8x8xf32>
    %88 = vector.extract_strided_slice %70 {offsets = [0, 0, 24], sizes = [3, 8, 8], strides = [1, 1, 1]} : vector<3x8x32xf32> to vector<3x8x8xf32>
    %89 = vector.shape_cast %85 : vector<3x8x8xf32> to vector<1x3x8x8xf32>
    %90 = vector.shape_cast %86 : vector<3x8x8xf32> to vector<1x3x8x8xf32>
    %91 = vector.shape_cast %87 : vector<3x8x8xf32> to vector<1x3x8x8xf32>
    %92 = vector.shape_cast %88 : vector<3x8x8xf32> to vector<1x3x8x8xf32>
    %93 = tpu.concatenate %89, %90, %91, %92 in 0 : vector<1x3x8x8xf32>, vector<1x3x8x8xf32>, vector<1x3x8x8xf32>, vector<1x3x8x8xf32> -> vector<4x3x8x8xf32>
    %94 = vector.shape_cast %93 : vector<4x3x8x8xf32> to vector<12x8x8xf32>
    %95 = vector.extract_strided_slice %71 {offsets = [0, 0, 0], sizes = [3, 8, 8], strides = [1, 1, 1]} : vector<3x8x32xf32> to vector<3x8x8xf32>
    %96 = vector.extract_strided_slice %71 {offsets = [0, 0, 8], sizes = [3, 8, 8], strides = [1, 1, 1]} : vector<3x8x32xf32> to vector<3x8x8xf32>
    %97 = vector.extract_strided_slice %71 {offsets = [0, 0, 16], sizes = [3, 8, 8], strides = [1, 1, 1]} : vector<3x8x32xf32> to vector<3x8x8xf32>
    %98 = vector.extract_strided_slice %71 {offsets = [0, 0, 24], sizes = [3, 8, 8], strides = [1, 1, 1]} : vector<3x8x32xf32> to vector<3x8x8xf32>
    %99 = vector.shape_cast %95 : vector<3x8x8xf32> to vector<1x3x8x8xf32>
    %100 = vector.shape_cast %96 : vector<3x8x8xf32> to vector<1x3x8x8xf32>
    %101 = vector.shape_cast %97 : vector<3x8x8xf32> to vector<1x3x8x8xf32>
    %102 = vector.shape_cast %98 : vector<3x8x8xf32> to vector<1x3x8x8xf32>
    %103 = tpu.concatenate %99, %100, %101, %102 in 0 : vector<1x3x8x8xf32>, vector<1x3x8x8xf32>, vector<1x3x8x8xf32>, vector<1x3x8x8xf32> -> vector<4x3x8x8xf32>
    %104 = vector.shape_cast %103 : vector<4x3x8x8xf32> to vector<12x8x8xf32>
    "tpu.trace_start"() <{level = 10 : i32, message = "gnd,gcd->gnc"}> : () -> ()
    %cst_32 = arith.constant dense<0.000000e+00> : vector<12x8x8xf32>
    %105 = tpu.matmul %84, %94, %cst_32 {dimension_numbers = #tpu.dot_dimension_numbers<[2], [2], [1], [1], [0, 0, 0, 1, 1, 1], [0], [0]>} : vector<12x8x8xf32>, vector<12x8x8xf32>, vector<12x8x8xf32> -> vector<12x8x8xf32>
    "tpu.trace_stop"() : () -> ()
    %106 = vector.shape_cast %105 : vector<12x8x8xf32> to vector<4x3x8x8xf32>
    %107 = vector.shape_cast %29 : vector<3x8xf32> to vector<1x3x1x8xf32>
    %cst_33 = arith.constant 0.000000e+00 : f32
    %108 = vector.broadcast %cst_33 : f32 to vector<1x3x1x8xf32>
    %109 = arith.cmpf ogt, %107, %108 : vector<1x3x1x8xf32>
    %cst_34 = arith.constant -3.40282347E+38 : f32
    %110 = vector.shape_cast %109 : vector<1x3x1x8xi1> to vector<1x3x1x8xi1>
    %111 = vector.broadcast %110 : vector<1x3x1x8xi1> to vector<4x3x8x8xi1>
    %112 = vector.broadcast %cst_34 : f32 to vector<4x3x8x8xf32>
    %113 = arith.select %111, %106, %112 : vector<4x3x8x8xi1>, vector<4x3x8x8xf32>
    %cst_35 = arith.constant dense<0xFF800000> : vector<4x3x8xf32>
    %114 = vector.multi_reduction <maximumf>, %113, %cst_35 [3] : vector<4x3x8x8xf32> to vector<4x3x8xf32>
    %115 = vector.shape_cast %114 : vector<4x3x8xf32> to vector<4x3x8x1xf32>
    %116 = vector.broadcast %115 : vector<4x3x8x1xf32> to vector<4x3x8x8xf32>
    %117 = arith.subf %113, %116 : vector<4x3x8x8xf32>
    %118 = math.exp %117 : vector<4x3x8x8xf32>
    %cst_36 = arith.constant dense<0.000000e+00> : vector<4x3x8xf32>
    %119 = vector.multi_reduction <add>, %118, %cst_36 [3] : vector<4x3x8x8xf32> to vector<4x3x8xf32>
    %120 = vector.shape_cast %119 : vector<4x3x8xf32> to vector<4x3x8x1xf32>
    %121 = tpu.reciprocal %120 {approx = true} : vector<4x3x8x1xf32> -> vector<4x3x8x1xf32>
    %122 = vector.broadcast %121 : vector<4x3x8x1xf32> to vector<4x3x8x8xf32>
    %123 = arith.mulf %118, %122 : vector<4x3x8x8xf32>
    %124 = vector.shape_cast %61 : vector<3x8xf32> to vector<1x3x8x1xf32>
    %125 = vector.broadcast %124 : vector<1x3x8x1xf32> to vector<4x3x8x8xf32>
    %126 = arith.mulf %123, %125 : vector<4x3x8x8xf32>
    %127 = vector.shape_cast %126 : vector<4x3x8x8xf32> to vector<12x8x8xf32>
    "tpu.trace_start"() <{level = 10 : i32, message = "gnc,gcd->gnd"}> : () -> ()
    %cst_37 = arith.constant dense<0.000000e+00> : vector<12x8x8xf32>
    %128 = tpu.matmul %127, %104, %cst_37 {dimension_numbers = #tpu.dot_dimension_numbers<[2], [1], [1], [2], [0, 0, 0, 1, 1, 2], [0], [0]>} : vector<12x8x8xf32>, vector<12x8x8xf32>, vector<12x8x8xf32> -> vector<12x8x8xf32>
    "tpu.trace_stop"() : () -> ()
    %129 = vector.shape_cast %128 : vector<12x8x8xf32> to vector<4x3x8x8xf32>
    %cst_38 = arith.constant dense<0.000000e+00> : vector<4x8x8xf32>
    %130 = vector.multi_reduction <add>, %129, %cst_38 [1] : vector<4x3x8x8xf32> to vector<4x8x8xf32>
    %131 = vector.extract_strided_slice %130 {offsets = [0, 0, 0], sizes = [1, 8, 8], strides = [1, 1, 1]} : vector<4x8x8xf32> to vector<1x8x8xf32>
    %132 = vector.shape_cast %131 : vector<1x8x8xf32> to vector<8x8xf32>
    %133 = vector.extract_strided_slice %130 {offsets = [1, 0, 0], sizes = [1, 8, 8], strides = [1, 1, 1]} : vector<4x8x8xf32> to vector<1x8x8xf32>
    %134 = vector.shape_cast %133 : vector<1x8x8xf32> to vector<8x8xf32>
    %135 = vector.extract_strided_slice %130 {offsets = [2, 0, 0], sizes = [1, 8, 8], strides = [1, 1, 1]} : vector<4x8x8xf32> to vector<1x8x8xf32>
    %136 = vector.shape_cast %135 : vector<1x8x8xf32> to vector<8x8xf32>
    %137 = vector.extract_strided_slice %130 {offsets = [3, 0, 0], sizes = [1, 8, 8], strides = [1, 1, 1]} : vector<4x8x8xf32> to vector<1x8x8xf32>
    %138 = vector.shape_cast %137 : vector<1x8x8xf32> to vector<8x8xf32>
    %139 = tpu.concatenate %132, %134, %136, %138 in 1 : vector<8x8xf32>, vector<8x8xf32>, vector<8x8xf32>, vector<8x8xf32> -> vector<8x32xf32>
    %140 = arith.truncf %139 : vector<8x32xf32> to vector<8x32xbf16>
    %c0_39 = arith.constant 0 : index
    %c0_40 = arith.constant 0 : index
    %141 = vector.load %arg10[%c0_39, %c0_40] : memref<32x32xbf16, #tpu.memory_space<vmem>>, vector<32x32xbf16>
    %cst_41 = arith.constant dense<0.000000e+00> : vector<8x32xf32>
    %142 = tpu.matmul %140, %141, %cst_41 {dimension_numbers = #tpu.dot_dimension_numbers<[1], [0], [0], [1], [0, 0, 1, 1], [], []>} : vector<8x32xbf16>, vector<32x32xbf16>, vector<8x32xf32> -> vector<8x32xf32>
    %c0_42 = arith.constant 0 : index
    %c0_43 = arith.constant 0 : index
    %143 = vector.load %arg11[%c0_42, %c0_43] : memref<1x32xf32, #tpu.memory_space<vmem>>, vector<1x32xf32>
    %144 = vector.broadcast %143 : vector<1x32xf32> to vector<8x32xf32>
    %145 = arith.addf %142, %144 : vector<8x32xf32>
    %146 = arith.addf %145, %1 : vector<8x32xf32>
    %c0_44 = arith.constant 0 : index
    %c0_45 = arith.constant 0 : index
    %c0_46 = arith.constant 0 : index
    %147 = vector.load %arg12[%c0_44, %c0_45, %c0_46] : memref<1x8x32xf32, #tpu.memory_space<vmem>>, vector<1x8x32xf32>
    %148 = vector.shape_cast %147 : vector<1x8x32xf32> to vector<8x32xf32>
    %149 = vector.shape_cast %146 : vector<8x32xf32> to vector<1x8x32xf32>
    tpu.vector_store %arg12[%c0_44, %c0_45, %c0_46], %149 {strides = array<i32>} : memref<1x8x32xf32, #tpu.memory_space<vmem>>, vector<1x8x32xf32>,
    return
  }
  func.func @transform_0(%arg0: i32) -> (i32, i32, i32) {
    %c0_i32 = arith.constant 0 : i32
    %c0_i32_0 = arith.constant 0 : i32
    %c0_i32_1 = arith.constant 0 : i32
    return %arg0, %c0_i32, %c0_i32_0 : i32, i32, i32
  }
  func.func @transform_1(%arg0: i32) -> (i32, i32) {
    %c0_i32 = arith.constant 0 : i32
    %c0_i32_0 = arith.constant 0 : i32
    %c0_i32_1 = arith.constant 0 : i32
    return %c0_i32, %c0_i32_0 : i32, i32
  }
  func.func @transform_2(%arg0: i32) -> (i32, i32) {
    %c0_i32 = arith.constant 0 : i32
    %c0_i32_0 = arith.constant 0 : i32
    %c0_i32_1 = arith.constant 0 : i32
    return %c0_i32, %c0_i32_0 : i32, i32
  }
  func.func @transform_3(%arg0: i32) -> (i32, i32, i32) {
    %c0_i32 = arith.constant 0 : i32
    %c0_i32_0 = arith.constant 0 : i32
    %c0_i32_1 = arith.constant 0 : i32
    return %arg0, %c0_i32, %c0_i32_0 : i32, i32, i32
  }
  func.func @transform_4(%arg0: i32) -> (i32, i32, i32) {
    %c0_i32 = arith.constant 0 : i32
    %c0_i32_0 = arith.constant 0 : i32
    %c0_i32_1 = arith.constant 0 : i32
    return %arg0, %c0_i32, %c0_i32_0 : i32, i32, i32
  }
  func.func @transform_5(%arg0: i32) -> (i32, i32, i32) {
    %c0_i32 = arith.constant 0 : i32
    %c0_i32_0 = arith.constant 0 : i32
    %c0_i32_1 = arith.constant 0 : i32
    return %arg0, %c0_i32, %c0_i32_0 : i32, i32, i32
  }
  func.func @transform_6(%arg0: i32) -> (i32, i32, i32) {
    %c0_i32 = arith.constant 0 : i32
    %c0_i32_0 = arith.constant 0 : i32
    %c0_i32_1 = arith.constant 0 : i32
    return %arg0, %c0_i32, %c0_i32_0 : i32, i32, i32
  }
  func.func @transform_7(%arg0: i32) -> (i32, i32) {
    %c0_i32 = arith.constant 0 : i32
    %c0_i32_0 = arith.constant 0 : i32
    %c0_i32_1 = arith.constant 0 : i32
    return %c0_i32, %c0_i32_0 : i32, i32
  }
  func.func @transform_8(%arg0: i32) -> (i32, i32) {
    %c0_i32 = arith.constant 0 : i32
    %c0_i32_0 = arith.constant 0 : i32
    %c0_i32_1 = arith.constant 0 : i32
    return %c0_i32, %c0_i32_0 : i32, i32
  }
  func.func @transform_9(%arg0: i32) -> (i32, i32) {
    %c0_i32 = arith.constant 0 : i32
    %c0_i32_0 = arith.constant 0 : i32
    %c0_i32_1 = arith.constant 0 : i32
    return %c0_i32, %c0_i32_0 : i32, i32
  }
  func.func @transform_10(%arg0: i32) -> (i32, i32) {
    %c0_i32 = arith.constant 0 : i32
    %c0_i32_0 = arith.constant 0 : i32
    %c0_i32_1 = arith.constant 0 : i32
    return %c0_i32, %c0_i32_0 : i32, i32
  }
  func.func @transform_11(%arg0: i32) -> (i32, i32, i32) {
    %c0_i32 = arith.constant 0 : i32
    %c0_i32_0 = arith.constant 0 : i32
    %c0_i32_1 = arith.constant 0 : i32
    return %arg0, %c0_i32, %c0_i32_0 : i32, i32, i32
  }
}

</mosaic_0001>

<llo_original>
// kernel: hcam_block_forward.2
$region0: #{hcam_block_forward.2}
  #allocation0 [shape = 'u32[]', space=smem, size = 0x4, offset = 0x4, fixed_abs, tag = 'smem constant byte address 0x4 - core index']
  #allocation1 [shape = 'u32[144,128]{1,0:T(1,128)}', space=vmem, size = 0x12000, scoped, tag = 'internal scratch']
  %s0 = inlined_call_operand.vmem [shape: f32[2,8,32], index: 0, kind: input, shape index: {}]
  %s1 = inlined_call_operand.vmem [shape: f32[1,32], index: 1, kind: input, shape index: {}]
  %s2 = inlined_call_operand.vmem [shape: f32[1,32], index: 2, kind: input, shape index: {}]
  %s3 = inlined_call_operand.vmem [shape: f32[2,24,32], index: 3, kind: input, shape index: {}]
  %s4 = inlined_call_operand.vmem [shape: f32[2,3,8], index: 4, kind: input, shape index: {}]
  %s5 = inlined_call_operand.vmem [shape: f32[2,1,3], index: 5, kind: input, shape index: {}]
  %s6 = inlined_call_operand.vmem [shape: f32[24,32], index: 6, kind: input, shape index: {}]
  %s7 = inlined_call_operand.vmem [shape: f32[32,32], index: 7, kind: input, shape index: {}]
  %s8 = inlined_call_operand.vmem [shape: f32[1,32], index: 8, kind: input, shape index: {}]
  %s9 = inlined_call_operand.vmem [shape: f32[32,32], index: 9, kind: input, shape index: {}]
  %s10 = inlined_call_operand.vmem [shape: f32[1,32], index: 10, kind: input, shape index: {}]
  %s11 = inlined_call_operand.vmem [shape: f32[2,8,3], index: 11, kind: output, shape index: {0}]
  %s12 = inlined_call_operand.vmem [shape: bf16[2,24,32], index: 12, kind: output, shape index: {1}]
  %13 = xla_tuple %s11, %s12
  %s14 = sld [smem:[#allocation0]]
  $region85: #{hcam_block_forward.2} parent=0
    _
  %s16 = ssub.s32 1, %s14
  %s17 = scalar_select 0, %s16, %s14
  loop: start=0, step=1, limit=4
  $region2: #{hcam_block_forward.2} parent=0 // loop_pre_header
    _
  $region3: #{hcam_block_forward.2} parent=0 // loop_header
    %s19 = sphi 0, %s23
    %p20 = scmp.ge.s32.totalorder %s19, 4
    %s29 = sphi 0, %s31
    %s32 = sphi 0, %s29
    %s33 = sphi 0, %s32
    %s49 = sphi 0, %s33
    %s53 = sphi 0, %s53
    %s55 = sphi 0, %s53
    %s56 = sphi 0, %s55
    %s70 = sphi 0, %s56
    %s74 = sphi 0, %s74
    %s76 = sphi 0, %s74
    %s77 = sphi 0, %s76
    %s91 = sphi 0, %s77
    %s97 = sphi 0, %s99
    %s100 = sphi 0, %s97
    %s101 = sphi 0, %s100
    %s117 = sphi 0, %s101
    %s123 = sphi 0, %s125
    %s126 = sphi 0, %s123
    %s127 = sphi 0, %s126
    %s143 = sphi 0, %s127
    %s149 = sphi 0, %s151
    %s152 = sphi 0, %s149
    %s153 = sphi 0, %s152
    %s169 = sphi 0, %s153
    %s173 = sphi 0, %s173
    %s175 = sphi 0, %s173
    %s176 = sphi 0, %s175
    %s190 = sphi 0, %s176
    %s194 = sphi 0, %s194
    %s196 = sphi 0, %s194
    %s197 = sphi 0, %s196
    %s211 = sphi 0, %s197
    %s215 = sphi 0, %s215
    %s217 = sphi 0, %s215
    %s218 = sphi 0, %s217
    %s232 = sphi 0, %s218
    %s236 = sphi 0, %s236
    %s238 = sphi 0, %s236
    %s239 = sphi 0, %s238
    %s253 = sphi 0, %s239
    %s257 = sphi 0, %s257
    %s259 = sphi 0, %s257
    %s260 = sphi 0, %s259
    %s274 = sphi 0, %s260
    %s280 = sphi 0, %s282
    %s283 = sphi 0, %s280
    %s284 = sphi 0, %s283
    %s300 = sphi 0, %s284
    %s306 = sphi 0, %s308
    %s309 = sphi 0, %s306
    %s310 = sphi 0, %s309
    %s326 = sphi 0, %s310
  $region4: #{hcam_block_forward.2} parent=0 // loop_header_branch
    %22 = sbr.rel (%p20) target = $region8
  $region5: #{hcam_block_forward.2} parent=0 // loop_body
    %s24 = ssub.s32 %s19, 1
    %s25 = ssub.s32 %s19, 2
    %s26 = sadd.s32 %s19, 1
    %s27 = ssub.s32 %s19, %s26
    %p28 = scmp.eq.s32.totalorder %s27, 0
    %s30 = sadd.s32 %s29, 1
    %s31 = scalar_select %p28, %s29, %s30
    %p34 = pneg %p28
    %p35 = scmp.eq.s32.totalorder %s19, 1
    %p36 = por %p34, %p35
    %p37 = scmp.ne.s32.totalorder %s29, %s32
    %p38 = scmp.eq.s32.totalorder %s19, 0
    %p39 = por %p37, %p38
    %p40 = scmp.ne.s32.totalorder %s29, %s32
    %p41 = scmp.eq.s32.totalorder %s24, 1
    %p42 = por %p40, %p41
    %p43 = scmp.ne.s32.totalorder %s32, %s33
    %p44 = scmp.eq.s32.totalorder %s24, 0
    %p45 = por %p43, %p44
    %p46 = scmp.ne.s32.totalorder %s32, %s33
    %p47 = scmp.eq.s32.totalorder %s25, 1
    %p48 = por %p46, %p47
    %p50 = scmp.ne.s32.totalorder %s33, %s49
    %p51 = scmp.eq.s32.totalorder %s25, 0
    %p52 = por %p50, %p51
    %s54 = sadd.s32 %s53, 1
    %p57 = scmp.eq.s32.totalorder %s19, 1
    %p58 = scmp.ne.s32.totalorder %s53, %s55
    %p59 = scmp.eq.s32.totalorder %s19, 0
    %p60 = por %p58, %p59
    %p61 = scmp.ne.s32.totalorder %s53, %s55
    %p62 = scmp.eq.s32.totalorder %s24, 1
    %p63 = por %p61, %p62
    %p64 = scmp.ne.s32.totalorder %s55, %s56
    %p65 = scmp.eq.s32.totalorder %s24, 0
    %p66 = por %p64, %p65
    %p67 = scmp.ne.s32.totalorder %s55, %s56
    %p68 = scmp.eq.s32.totalorder %s25, 1
    %p69 = por %p67, %p68
    %p71 = scmp.ne.s32.totalorder %s56, %s70
    %p72 = scmp.eq.s32.totalorder %s25, 0
    %p73 = por %p71, %p72
    %s75 = sadd.s32 %s74, 1
    %p78 = scmp.eq.s32.totalorder %s19, 1
    %p79 = scmp.ne.s32.totalorder %s74, %s76
    %p80 = scmp.eq.s32.totalorder %s19, 0
    %p81 = por %p79, %p80
    %p82 = scmp.ne.s32.totalorder %s74, %s76
    %p83 = scmp.eq.s32.totalorder %s24, 1
    %p84 = por %p82, %p83
    %p85 = scmp.ne.s32.totalorder %s76, %s77
    %p86 = scmp.eq.s32.totalorder %s24, 0
    %p87 = por %p85, %p86
    %p88 = scmp.ne.s32.totalorder %s76, %s77
    %p89 = scmp.eq.s32.totalorder %s25, 1
    %p90 = por %p88, %p89
    %p92 = scmp.ne.s32.totalorder %s77, %s91
    %p93 = scmp.eq.s32.totalorder %s25, 0
    %p94 = por %p92, %p93
    %s95 = ssub.s32 %s19, %s26
    %p96 = scmp.eq.s32.totalorder %s95, 0
    %s98 = sadd.s32 %s97, 1
    %s99 = scalar_select %p96, %s97, %s98
    %p102 = pneg %p96
    %p103 = scmp.eq.s32.totalorder %s19, 1
    %p104 = por %p102, %p103
    %p105 = scmp.ne.s32.totalorder %s97, %s100
    %p106 = scmp.eq.s32.totalorder %s19, 0
    %p107 = por %p105, %p106
    %p108 = scmp.ne.s32.totalorder %s97, %s100
    %p109 = scmp.eq.s32.totalorder %s24, 1
    %p110 = por %p108, %p109
    %p111 = scmp.ne.s32.totalorder %s100, %s101
    %p112 = scmp.eq.s32.totalorder %s24, 0
    %p113 = por %p111, %p112
    %p114 = scmp.ne.s32.totalorder %s100, %s101
    %p115 = scmp.eq.s32.totalorder %s25, 1
    %p116 = por %p114, %p115
    %p118 = scmp.ne.s32.totalorder %s101, %s117
    %p119 = scmp.eq.s32.totalorder %s25, 0
    %p120 = por %p118, %p119
    %s121 = ssub.s32 %s19, %s26
    %p122 = scmp.eq.s32.totalorder %s121, 0
    %s124 = sadd.s32 %s123, 1
    %s125 = scalar_select %p122, %s123, %s124
    %p128 = pneg %p122
    %p129 = scmp.eq.s32.totalorder %s19, 1
    %p130 = por %p128, %p129
    %p131 = scmp.ne.s32.totalorder %s123, %s126
    %p132 = scmp.eq.s32.totalorder %s19, 0
    %p133 = por %p131, %p132
    %p134 = scmp.ne.s32.totalorder %s123, %s126
    %p135 = scmp.eq.s32.totalorder %s24, 1
    %p136 = por %p134, %p135
    %p137 = scmp.ne.s32.totalorder %s126, %s127
    %p138 = scmp.eq.s32.totalorder %s24, 0
    %p139 = por %p137, %p138
    %p140 = scmp.ne.s32.totalorder %s126, %s127
    %p141 = scmp.eq.s32.totalorder %s25, 1
    %p142 = por %p140, %p141
    %p144 = scmp.ne.s32.totalorder %s127, %s143
    %p145 = scmp.eq.s32.totalorder %s25, 0
    %p146 = por %p144, %p145
    %s147 = ssub.s32 %s19, %s26
    %p148 = scmp.eq.s32.totalorder %s147, 0
    %s150 = sadd.s32 %s149, 1
    %s151 = scalar_select %p148, %s149, %s150
    %p154 = pneg %p148
    %p155 = scmp.eq.s32.totalorder %s19, 1
    %p156 = por %p154, %p155
    %p157 = scmp.ne.s32.totalorder %s149, %s152
    %p158 = scmp.eq.s32.totalorder %s19, 0
    %p159 = por %p157, %p158
    %p160 = scmp.ne.s32.totalorder %s149, %s152
    %p161 = scmp.eq.s32.totalorder %s24, 1
    %p162 = por %p160, %p161
    %p163 = scmp.ne.s32.totalorder %s152, %s153
    %p164 = scmp.eq.s32.totalorder %s24, 0
    %p165 = por %p163, %p164
    %p166 = scmp.ne.s32.totalorder %s152, %s153
    %p167 = scmp.eq.s32.totalorder %s25, 1
    %p168 = por %p166, %p167
    %p170 = scmp.ne.s32.totalorder %s153, %s169
    %p171 = scmp.eq.s32.totalorder %s25, 0
    %p172 = por %p170, %p171
    %s174 = sadd.s32 %s173, 1
    %p177 = scmp.eq.s32.totalorder %s19, 1
    %p178 = scmp.ne.s32.totalorder %s173, %s175
    %p179 = scmp.eq.s32.totalorder %s19, 0
    %p180 = por %p178, %p179
    %p181 = scmp.ne.s32.totalorder %s173, %s175
    %p182 = scmp.eq.s32.totalorder %s24, 1
    %p183 = por %p181, %p182
    %p184 = scmp.ne.s32.totalorder %s175, %s176
    %p185 = scmp.eq.s32.totalorder %s24, 0
    %p186 = por %p184, %p185
    %p187 = scmp.ne.s32.totalorder %s175, %s176
    %p188 = scmp.eq.s32.totalorder %s25, 1
    %p189 = por %p187, %p188
    %p191 = scmp.ne.s32.totalorder %s176, %s190
    %p192 = scmp.eq.s32.totalorder %s25, 0
    %p193 = por %p191, %p192
    %s195 = sadd.s32 %s194, 1
    %p198 = scmp.eq.s32.totalorder %s19, 1
    %p199 = scmp.ne.s32.totalorder %s194, %s196
    %p200 = scmp.eq.s32.totalorder %s19, 0
    %p201 = por %p199, %p200
    %p202 = scmp.ne.s32.totalorder %s194, %s196
    %p203 = scmp.eq.s32.totalorder %s24, 1
    %p204 = por %p202, %p203
    %p205 = scmp.ne.s32.totalorder %s196, %s197
    %p206 = scmp.eq.s32.totalorder %s24, 0
    %p207 = por %p205, %p206
    %p208 = scmp.ne.s32.totalorder %s196, %s197
    %p209 = scmp.eq.s32.totalorder %s25, 1
    %p210 = por %p208, %p209
    %p212 = scmp.ne.s32.totalorder %s197, %s211
    %p213 = scmp.eq.s32.totalorder %s25, 0
    %p214 = por %p212, %p213
    %s216 = sadd.s32 %s215, 1
    %p219 = scmp.eq.s32.totalorder %s19, 1
    %p220 = scmp.ne.s32.totalorder %s215, %s217
    %p221 = scmp.eq.s32.totalorder %s19, 0
    %p222 = por %p220, %p221
    %p223 = scmp.ne.s32.totalorder %s215, %s217
    %p224 = scmp.eq.s32.totalorder %s24, 1
    %p225 = por %p223, %p224
    %p226 = scmp.ne.s32.totalorder %s217, %s218
    %p227 = scmp.eq.s32.totalorder %s24, 0
    %p228 = por %p226, %p227
    %p229 = scmp.ne.s32.totalorder %s217, %s218
    %p230 = scmp.eq.s32.totalorder %s25, 1
    %p231 = por %p229, %p230
    %p233 = scmp.ne.s32.totalorder %s218, %s232
    %p234 = scmp.eq.s32.totalorder %s25, 0
    %p235 = por %p233, %p234
    %s237 = sadd.s32 %s236, 1
    %p240 = scmp.eq.s32.totalorder %s19, 1
    %p241 = scmp.ne.s32.totalorder %s236, %s238
    %p242 = scmp.eq.s32.totalorder %s19, 0
    %p243 = por %p241, %p242
    %p244 = scmp.ne.s32.totalorder %s236, %s238
    %p245 = scmp.eq.s32.totalorder %s24, 1
    %p246 = por %p244, %p245
    %p247 = scmp.ne.s32.totalorder %s238, %s239
    %p248 = scmp.eq.s32.totalorder %s24, 0
    %p249 = por %p247, %p248
    %p250 = scmp.ne.s32.totalorder %s238, %s239
    %p251 = scmp.eq.s32.totalorder %s25, 1
    %p252 = por %p250, %p251
    %p254 = scmp.ne.s32.totalorder %s239, %s253
    %p255 = scmp.eq.s32.totalorder %s25, 0
    %p256 = por %p254, %p255
    %s258 = sadd.s32 %s257, 1
    %p261 = scmp.eq.s32.totalorder %s19, 1
    %p262 = scmp.ne.s32.totalorder %s257, %s259
    %p263 = scmp.eq.s32.totalorder %s19, 0
    %p264 = por %p262, %p263
    %p265 = scmp.ne.s32.totalorder %s257, %s259
    %p266 = scmp.eq.s32.totalorder %s24, 1
    %p267 = por %p265, %p266
    %p268 = scmp.ne.s32.totalorder %s259, %s260
    %p269 = scmp.eq.s32.totalorder %s24, 0
    %p270 = por %p268, %p269
    %p271 = scmp.ne.s32.totalorder %s259, %s260
    %p272 = scmp.eq.s32.totalorder %s25, 1
    %p273 = por %p271, %p272
    %p275 = scmp.ne.s32.totalorder %s260, %s274
    %p276 = scmp.eq.s32.totalorder %s25, 0
    %p277 = por %p275, %p276
    %s278 = ssub.s32 %s19, %s26
    %p279 = scmp.eq.s32.totalorder %s278, 0
    %s281 = sadd.s32 %s280, 1
    %s282 = scalar_select %p279, %s280, %s281
    %p285 = pneg %p279
    %p286 = scmp.eq.s32.totalorder %s19, 1
    %p287 = por %p285, %p286
    %p288 = scmp.ne.s32.totalorder %s280, %s283
    %p289 = scmp.eq.s32.totalorder %s19, 0
    %p290 = por %p288, %p289
    %p291 = scmp.ne.s32.totalorder %s280, %s283
    %p292 = scmp.eq.s32.totalorder %s24, 1
    %p293 = por %p291, %p292
    %p294 = scmp.ne.s32.totalorder %s283, %s284
    %p295 = scmp.eq.s32.totalorder %s24, 0
    %p296 = por %p294, %p295
    %p297 = scmp.ne.s32.totalorder %s283, %s284
    %p298 = scmp.eq.s32.totalorder %s25, 1
    %p299 = por %p297, %p298
    %p301 = scmp.ne.s32.totalorder %s284, %s300
    %p302 = scmp.eq.s32.totalorder %s25, 0
    %p303 = por %p301, %p302
    %s304 = ssub.s32 %s19, %s26
    %p305 = scmp.eq.s32.totalorder %s304, 0
    %s307 = sadd.s32 %s306, 1
    %s308 = scalar_select %p305, %s306, %s307
    %p311 = pneg %p305
    %p312 = scmp.eq.s32.totalorder %s19, 1
    %p313 = por %p311, %p312
    %p314 = scmp.ne.s32.totalorder %s306, %s309
    %p315 = scmp.eq.s32.totalorder %s19, 0
    %p316 = por %p314, %p315
    %p317 = scmp.ne.s32.totalorder %s306, %s309
    %p318 = scmp.eq.s32.totalorder %s24, 1
    %p319 = por %p317, %p318
    %p320 = scmp.ne.s32.totalorder %s309, %s310
    %p321 = scmp.eq.s32.totalorder %s24, 0
    %p322 = por %p320, %p321
    %p323 = scmp.ne.s32.totalorder %s309, %s310
    %p324 = scmp.eq.s32.totalorder %s25, 1
    %p325 = por %p323, %p324
    %p327 = scmp.ne.s32.totalorder %s310, %s326
    %p328 = scmp.eq.s32.totalorder %s25, 0
    %p329 = por %p327, %p328
    %p330 = scmp.le.s32.totalorder 1, %s19
    %p331 = scmp.lt.s32.totalorder %s19, 3
    %p332 = pnand %p330, %p331
    %p333 = pneg %p332
    // Predicated region
    $region9: #{hcam_block_forward.2} parent=5 // pred_check
      _
    $region10: #{hcam_block_forward.2} parent=5 // pred_check_branch
      %335 = sbr.rel (%p332) target = $region12
    $region11: #{hcam_block_forward.2} parent=5 // pred_region
      %s336 = ssub.s32 %s19, 1
      // Predicated region
      $region13: #{hcam_block_forward.2} parent=11 // pred_check
        %p337 = pneg %p66
      $region14: #{hcam_block_forward.2} parent=11 // pred_check_branch
        %339 = sbr.rel (%p337) target = $region16
      $region15: #{hcam_block_forward.2} parent=11 // pred_region
        _
      $region16: #{hcam_block_forward.2} parent=11 // pred_fallthru
        _
      // Predicated region
      $region17: #{hcam_block_forward.2} parent=11 // pred_check
        %p340 = pneg %p87
      $region18: #{hcam_block_forward.2} parent=11 // pred_check_branch
        %342 = sbr.rel (%p340) target = $region20
      $region19: #{hcam_block_forward.2} parent=11 // pred_region
        _
      $region20: #{hcam_block_forward.2} parent=11 // pred_fallthru
        _
      // Predicated region
      $region21: #{hcam_block_forward.2} parent=11 // pred_check
        %p343 = pneg %p186
      $region22: #{hcam_block_forward.2} parent=11 // pred_check_branch
        %345 = sbr.rel (%p343) target = $region24
      $region23: #{hcam_block_forward.2} parent=11 // pred_region
        _
      $region24: #{hcam_block_forward.2} parent=11 // pred_fallthru
        _
      // Predicated region
      $region25: #{hcam_block_forward.2} parent=11 // pred_check
        %p346 = pneg %p207
      $region26: #{hcam_block_forward.2} parent=11 // pred_check_branch
        %348 = sbr.rel (%p346) target = $region28
      $region27: #{hcam_block_forward.2} parent=11 // pred_region
        _
      $region28: #{hcam_block_forward.2} parent=11 // pred_fallthru
        _
      // Predicated region
      $region29: #{hcam_block_forward.2} parent=11 // pred_check
        %p349 = pneg %p228
      $region30: #{hcam_block_forward.2} parent=11 // pred_check_branch
        %351 = sbr.rel (%p349) target = $region32
      $region31: #{hcam_block_forward.2} parent=11 // pred_region
        _
      $region32: #{hcam_block_forward.2} parent=11 // pred_fallthru
        _
      // Predicated region
      $region33: #{hcam_block_forward.2} parent=11 // pred_check
        %p352 = pneg %p249
      $region34: #{hcam_block_forward.2} parent=11 // pred_check_branch
        %354 = sbr.rel (%p352) target = $region36
      $region35: #{hcam_block_forward.2} parent=11 // pred_region
        _
      $region36: #{hcam_block_forward.2} parent=11 // pred_fallthru
        _
      // Predicated region
      $region37: #{hcam_block_forward.2} parent=11 // pred_check
        %p355 = pneg %p270
      $region38: #{hcam_block_forward.2} parent=11 // pred_check_branch
        %357 = sbr.rel (%p355) target = $region40
      $region39: #{hcam_block_forward.2} parent=11 // pred_region
        _
      $region40: #{hcam_block_forward.2} parent=11 // pred_fallthru
        _
    $region12: #{hcam_block_forward.2} parent=5 // pred_fallthru
      _
    %p358 = scmp.lt.s32.totalorder %s19, 2
    // Predicated region
    $region41: #{hcam_block_forward.2} parent=5 // pred_check
      %p359 = pneg %p358
    $region42: #{hcam_block_forward.2} parent=5 // pred_check_branch
      %361 = sbr.rel (%p359) target = $region44
    $region43: #{hcam_block_forward.2} parent=5 // pred_region
      // Predicated region
      $region45: #{hcam_block_forward.2} parent=43 // pred_check
        %p362 = pneg %p39
      $region46: #{hcam_block_forward.2} parent=43 // pred_check_branch
        %364 = sbr.rel (%p362) target = $region48
      $region47: #{hcam_block_forward.2} parent=43 // pred_region
        %p365 = scmp.lt.s32.totalorder %s19, 1
        %s366 = scalar_select %p365, %s19, 1
        %s367 = smul.addr %s366, 8
        %s368 = scalar_lea.vmem %s0, %s367
      $region48: #{hcam_block_forward.2} parent=43 // pred_fallthru
        _
      // Predicated region
      $region49: #{hcam_block_forward.2} parent=43 // pred_check
        %p369 = pneg %p107
      $region50: #{hcam_block_forward.2} parent=43 // pred_check_branch
        %371 = sbr.rel (%p369) target = $region52
      $region51: #{hcam_block_forward.2} parent=43 // pred_region
        %p372 = scmp.lt.s32.totalorder %s19, 1
        %s373 = scalar_select %p372, %s19, 1
        %s374 = smul.addr %s373, 3
        %s375 = smul.addr %s374, 8
        %s376 = scalar_lea.vmem %s3, %s375
      $region52: #{hcam_block_forward.2} parent=43 // pred_fallthru
        _
      // Predicated region
      $region53: #{hcam_block_forward.2} parent=43 // pred_check
        %p377 = pneg %p133
      $region54: #{hcam_block_forward.2} parent=43 // pred_check_branch
        %379 = sbr.rel (%p377) target = $region56
      $region55: #{hcam_block_forward.2} parent=43 // pred_region
        %p380 = scmp.lt.s32.totalorder %s19, 1
        %s381 = scalar_select %p380, %s19, 1
        %s382 = smul.addr %s381, 4
        %s383 = scalar_lea.vmem %s4, %s382
      $region56: #{hcam_block_forward.2} parent=43 // pred_fallthru
        _
      // Predicated region
      $region57: #{hcam_block_forward.2} parent=43 // pred_check
        %p384 = pneg %p159
      $region58: #{hcam_block_forward.2} parent=43 // pred_check_branch
        %386 = sbr.rel (%p384) target = $region60
      $region59: #{hcam_block_forward.2} parent=43 // pred_region
        %p387 = scmp.lt.s32.totalorder %s19, 1
        %s388 = scalar_select %p387, %s19, 1
        %s389 = scalar_lea.vmem %s5, %s388
      $region60: #{hcam_block_forward.2} parent=43 // pred_fallthru
        _
    $region44: #{hcam_block_forward.2} parent=5 // pred_fallthru
      _
    %p390 = scmp.le.s32.totalorder 1, %s19
    %p391 = scmp.lt.s32.totalorder %s19, 3
    %p392 = pnand %p390, %p391
    %p393 = pneg %p392
    // Predicated region
    $region61: #{hcam_block_forward.2} parent=5 // pred_check
      _
    $region62: #{hcam_block_forward.2} parent=5 // pred_check_branch
      %395 = sbr.rel (%p392) target = $region64
    $region63: #{hcam_block_forward.2} parent=5 // pred_region
      %s396 = ssub.s32 %s19, 1
      %p397 = scmp.lt.s32.totalorder %s24, 1
      %s398 = scalar_select %p397, %s24, 1
      %s399 = smul.addr %s398, 8
      %s400 = scalar_lea.vmem %s0, %s399
      %p401 = pneg %p45
      %p402 = pneg %p42
      %p403 = pneg %p66
      %p404 = pneg %p63
      %p405 = pneg %p87
      %p406 = pneg %p84
      %p407 = scmp.lt.s32.totalorder %s24, 1
      %s408 = scalar_select %p407, %s24, 1
      %s409 = smul.addr %s408, 3
      %s410 = smul.addr %s409, 8
      %s411 = scalar_lea.vmem %s3, %s410
      %p412 = pneg %p113
      %p413 = pneg %p110
      %p414 = scmp.lt.s32.totalorder %s24, 1
      %s415 = scalar_select %p414, %s24, 1
      %s416 = smul.addr %s415, 4
      %s417 = scalar_lea.vmem %s4, %s416
      %p418 = pneg %p139
      %p419 = pneg %p136
      %p420 = scmp.lt.s32.totalorder %s24, 1
      %s421 = scalar_select %p420, %s24, 1
      %s422 = scalar_lea.vmem %s5, %s421
      %p423 = pneg %p165
      %p424 = pneg %p162
      %p425 = pneg %p186
      %p426 = pneg %p183
      %p427 = pneg %p207
      %p428 = pneg %p204
      %p429 = pneg %p228
      %p430 = pneg %p225
      %p431 = pneg %p249
      %p432 = pneg %p246
      %p433 = pneg %p270
      %p434 = pneg %p267
      %p435 = pneg %p296
      %p436 = pneg %p293
      %p437 = scmp.lt.s32.totalorder %s24, 1
      %s438 = scalar_select %p437, %s24, 1
      %s439 = smul.addr %s438, 8
      %s440 = scalar_lea.vmem %s11, %s439
      %p441 = pneg %p322
      %p442 = pneg %p319
      %p443 = scmp.lt.s32.totalorder %s24, 1
      %s444 = scalar_select %p443, %s24, 1
      %s445 = smul.addr %s444, 3
      %s446 = smul.addr %s445, 4
      %s447 = scalar_lea.vmem %s12, %s446
      %p448 = scmp.lt.s32.totalorder %s24, 1
      %s449 = scalar_select %p448, %s24, 1
      %s450 = smul.addr %s449, 8
      %s451 = scalar_lea.vmem %s0, %s450
      %p452 = scmp.lt.s32.totalorder %s24, 1
      %s453 = scalar_select %p452, %s24, 1
      %s454 = smul.addr %s453, 3
      %s455 = smul.addr %s454, 8
      %s456 = scalar_lea.vmem %s3, %s455
      %p457 = scmp.lt.s32.totalorder %s24, 1
      %s458 = scalar_select %p457, %s24, 1
      %s459 = smul.addr %s458, 4
      %s460 = scalar_lea.vmem %s4, %s459
      %p461 = scmp.lt.s32.totalorder %s24, 1
      %s462 = scalar_select %p461, %s24, 1
      %s463 = scalar_lea.vmem %s5, %s462
      %p464 = scmp.lt.s32.totalorder %s24, 1
      %s465 = scalar_select %p464, %s24, 1
      %s466 = smul.addr %s465, 8
      %s467 = scalar_lea.vmem %s11, %s466
      %p468 = scmp.lt.s32.totalorder %s24, 1
      %s469 = scalar_select %p468, %s24, 1
      %s470 = smul.addr %s469, 3
      %s471 = smul.addr %s470, 4
      %s472 = scalar_lea.vmem %s12, %s471
      %v473 = vld [vmem:[%s451] sm:$0xff]
      %vm474 = vcmask 261120
      %v475 = vsel %vm474, %v473, 0.0
      %476 = vadd.xlane.f32.xlu0 %v475
      %v477 = vpop.xlane.xlu0 %476
      %v478 = vrcp.pop 32.0
      %v479 = vmul.f32 %v477, %v478
      %v480 = vsub.f32 %v473, %v479
      %v481 = vmul.f32 %v480, %v480
      %v482 = vsel %vm474, %v481, 0.0
      %483 = vadd.xlane.f32.xlu0 %v482
      %v484 = vpop.xlane.xlu0 %483
      %v485 = vmul.f32 %v484, %v478
      %v486 = vadd.f32 %v485, 1e-05
      %v487 = vrsqrt.pop %v486
      %v488 = vmul.f32 %v480, %v487
      %v489 = vld [vmem:[%s1] sm:$0x1]
      %v491 = vlaneseq
      %v492 = vshrl.u32 %v491, 7
      %v493 = vsub.s32 0, %v492
      %v494 = vrot.slane %v489, %v493
      %v496 = vmul.f32 %v488, %v494
      %v497 = vld [vmem:[%s2] sm:$0x1]
      %v499 = vlaneseq
      %v500 = vshrl.u32 %v499, 7
      %v501 = vsub.s32 0, %v500
      %v502 = vrot.slane %v497, %v501
      %v504 = vadd.f32 %v496, %v502
      %v505 = vld [vmem:[%s456] sm:$0xff]
      %v506 = vld [vmem:[%s456 + $0x8] sm:$0xff]
      %v507 = vld [vmem:[%s456 + $0x10] sm:$0xff]
      %v508 = vld [vmem:[%s460] sm:$0x7]
      %v509 = vlaneseq
      %v510 = vshrl.u32 %v509, 7
      %v511 = vsub.s32 0, %v510
      %v512 = vrot.slane %v508, %v511
      %514 = vbcast.lane.b32.xlu0 %v512, 256
      %v515 = vpop.permute.xlu0 %514
      %v516 = vlaneseq
      %v517 = vshrl.u32 %v516, 7
      %v518 = vsub.s32 1, %v517
      %v519 = vrot.slane %v508, %v518
      %521 = vbcast.lane.b32.xlu0 %v519, 256
      %v522 = vpop.permute.xlu0 %521
      %v523 = vlaneseq
      %v524 = vshrl.u32 %v523, 7
      %v525 = vsub.s32 2, %v524
      %v526 = vrot.slane %v508, %v525
      %528 = vbcast.lane.b32.xlu0 %v526, 256
      %v529 = vpop.permute.xlu0 %528
      %v530 = vmul.f32 %v505, %v515
      %v531 = vmul.f32 %v506, %v522
      %v532 = vmul.f32 %v507, %v529
      %v533 = vsel %vm474, %v530, 0.0
      %v534 = vrot.slane %v533, 4
      %v535 = vadd.f32 %v533, %v534
      %v536 = vrot.slane %v535, 2
      %v537 = vadd.f32 %v535, %v536
      %v538 = vrot.slane %v537, 1
      %v539 = vadd.f32 %v537, %v538
      %v540 = vsel %vm474, %v531, 0.0
      %v541 = vrot.slane %v540, 4
      %v542 = vadd.f32 %v540, %v541
      %v543 = vrot.slane %v542, 2
      %v544 = vadd.f32 %v542, %v543
      %v545 = vrot.slane %v544, 1
      %v546 = vadd.f32 %v544, %v545
      %v547 = vsel %vm474, %v532, 0.0
      %v548 = vrot.slane %v547, 4
      %v549 = vadd.f32 %v547, %v548
      %v550 = vrot.slane %v549, 2
      %v551 = vadd.f32 %v549, %v550
      %v552 = vrot.slane %v551, 1
      %v553 = vadd.f32 %v551, %v552
      %vm554 = vcmask 59392
      %v555 = vsel %vm554, %v508, 0.0
      %556 = vadd.xlane.f32.xlu0 %v555
      %v557 = vpop.xlane.xlu0 %556
      %v558 = vadd.f32 %v557, 1e-05
      %v560 = vrot.slane %v558, 1
      %v561 = vrot.slane %v558, 2
      %v565 = vrcp.pop %v558
      %v566 = vmul.f32 %v539, %v565
      %v567 = vrcp.pop %v560
      %v568 = vmul.f32 %v546, %v567
      %v569 = vrcp.pop %v561
      %v570 = vmul.f32 %v553, %v569
      %v571 = vld [vmem:[%s7] sm:$0xff]
      %v572 = vld [vmem:[%s7 + $0x8] sm:$0xff]
      %v573 = vld [vmem:[%s7 + $0x10] sm:$0xff]
      %v574 = vld [vmem:[%s7 + $0x18] sm:$0xff]
      %v575 = vld [vmem:[%s8] sm:$0x1]
      %v577 = vlaneseq
      %v578 = vshrl.u32 %v577, 7
      %v579 = vsub.s32 0, %v578
      %v580 = vrot.slane %v575, %v579
      %v583 = vsel %vm474, %v504, 0
      %585 = vmatprep.subr.mxu0 0.0
      %586 = vmatpush1.msra.mxu0 %v571
      %587 = vmatprep.subr.mxu0 0.0
      %588 = vmatpush1.msra.mxu0 %v572
      %589 = vmatprep.subr.mxu0 0.0
      %590 = vmatpush1.msra.mxu0 %v573
      %591 = vmatprep.subr.mxu0 0.0
      %592 = vmatpush1.msra.mxu0 %v574
      %593 = vmatprep.subr.mxu0 0.0
      %594 = vmatpush1.msra.mxu0 0.0
      %595 = vmatprep.subr.mxu0 0.0
      %596 = vmatpush1.msra.mxu0 0.0
      %597 = vmatprep.subr.mxu0 0.0
      %598 = vmatpush1.msra.mxu0 0.0
      %599 = vmatprep.subr.mxu0 0.0
      %600 = vmatpush1.msra.mxu0 0.0
      %601 = vmatprep.subr.mxu0 0.0
      %602 = vmatpush1.msra.mxu0 0.0
      %603 = vmatprep.subr.mxu0 0.0
      %604 = vmatpush1.msra.mxu0 0.0
      %605 = vmatprep.subr.mxu0 0.0
      %606 = vmatpush1.msra.mxu0 0.0
      %607 = vmatprep.subr.mxu0 0.0
      %608 = vmatpush1.msra.mxu0 0.0
      %609 = vmatprep.subr.mxu0 0.0
      %610 = vmatpush1.msra.mxu0 0.0
      %611 = vmatprep.subr.mxu0 0.0
      %612 = vmatpush1.msra.mxu0 0.0
      %613 = vmatprep.subr.mxu0 0.0
      %614 = vmatpush1.msra.mxu0 0.0
      %615 = vmatprep.subr.mxu0 0.0
      %616 = vmatpush1.msra.mxu0 0.0
      %617 = vmatprep.subr.mxu0 0.0
      %618 = vmatpush1.msra.mxu0 0.0
      %619 = vmatprep.subr.mxu0 0.0
      %620 = vmatpush1.msra.mxu0 0.0
      %621 = vmatprep.subr.mxu0 0.0
      %622 = vmatpush1.msra.mxu0 0.0
      %623 = vmatprep.subr.mxu0 0.0
      %624 = vmatpush1.msra.mxu0 0.0
      %625 = vmatprep.subr.mxu0 0.0
      %626 = vmatpush1.msra.mxu0 0.0
      %627 = vmatprep.subr.mxu0 0.0
      %628 = vmatpush1.msra.mxu0 0.0
      %629 = vmatprep.subr.mxu0 0.0
      %630 = vmatpush1.msra.mxu0 0.0
      %631 = vmatprep.subr.mxu0 0.0
      %632 = vmatpush1.msra.mxu0 0.0
      %633 = vmatprep.subr.mxu0 0.0
      %634 = vmatpush1.msra.mxu0 0.0
      %635 = vmatprep.subr.mxu0 0.0
      %636 = vmatpush1.msra.mxu0 0.0
      %637 = vmatprep.subr.mxu0 0.0
      %638 = vmatpush1.msra.mxu0 0.0
      %639 = vmatprep.subr.mxu0 0.0
      %640 = vmatpush1.msra.mxu0 0.0
      %641 = vmatprep.subr.mxu0 0.0
      %642 = vmatpush1.msra.mxu0 0.0
      %643 = vmatprep.subr.mxu0 0.0
      %644 = vmatpush1.msra.mxu0 0.0
      %645 = vmatprep.subr.mxu0 0.0
      %646 = vmatpush1.msra.mxu0 0.0
      %647 = vmatprep.subr.mxu0 0.0
      %648 = vmatpush1.msra.mxu0 0.0
      %649 = vmatprep.mubr.f32.mxu0 0.0
      %650 = vmatmul.mubr.f32.gmra.mrb[0].mxu0 %v583
      %v651 = vpop.f32.mrb[0].mxu0
      %v652 = vadd.f32 %v580, %v651
      %v653 = vpop.f32.mrb[0].mxu0
      %654 = vdwg.mxu0
      %v655 = vld [vmem:[%s9] sm:$0xff]
      %v656 = vld [vmem:[%s9 + $0x8] sm:$0xff]
      %v657 = vld [vmem:[%s9 + $0x10] sm:$0xff]
      %v658 = vld [vmem:[%s9 + $0x18] sm:$0xff]
      %v659 = vld [vmem:[%s10] sm:$0x1]
      %v661 = vlaneseq
      %v662 = vshrl.u32 %v661, 7
      %v663 = vsub.s32 0, %v662
      %v664 = vrot.slane %v659, %v663
      %v669 = vrot.slane %v568, 7
      %vm670 = vcmask 1041409
      %v671 = vsel %vm670, %v669, %v566
      %v672 = vrot.slane %v570, 6
      %vm673 = vcmask 1042434
      %v674 = vsel %vm673, %v672, %v671
      %v675 = vsel %vm474, %v674, 0
      %677 = vmatprep.subr.mxu0 0.0
      %678 = vmatpush1.msra.mxu0 %v655
      %679 = vmatprep.subr.mxu0 0.0
      %680 = vmatpush1.msra.mxu0 %v656
      %681 = vmatprep.subr.mxu0 0.0
      %682 = vmatpush1.msra.mxu0 %v657
      %683 = vmatprep.subr.mxu0 0.0
      %684 = vmatpush1.msra.mxu0 %v658
      %685 = vmatprep.subr.mxu0 0.0
      %686 = vmatpush1.msra.mxu0 0.0
      %687 = vmatprep.subr.mxu0 0.0
      %688 = vmatpush1.msra.mxu0 0.0
      %689 = vmatprep.subr.mxu0 0.0
      %690 = vmatpush1.msra.mxu0 0.0
      %691 = vmatprep.subr.mxu0 0.0
      %692 = vmatpush1.msra.mxu0 0.0
      %693 = vmatprep.subr.mxu0 0.0
      %694 = vmatpush1.msra.mxu0 0.0
      %695 = vmatprep.subr.mxu0 0.0
      %696 = vmatpush1.msra.mxu0 0.0
      %697 = vmatprep.subr.mxu0 0.0
      %698 = vmatpush1.msra.mxu0 0.0
      %699 = vmatprep.subr.mxu0 0.0
      %700 = vmatpush1.msra.mxu0 0.0
      %701 = vmatprep.subr.mxu0 0.0
      %702 = vmatpush1.msra.mxu0 0.0
      %703 = vmatprep.subr.mxu0 0.0
      %704 = vmatpush1.msra.mxu0 0.0
      %705 = vmatprep.subr.mxu0 0.0
      %706 = vmatpush1.msra.mxu0 0.0
      %707 = vmatprep.subr.mxu0 0.0
      %708 = vmatpush1.msra.mxu0 0.0
      %709 = vmatprep.subr.mxu0 0.0
      %710 = vmatpush1.msra.mxu0 0.0
      %711 = vmatprep.subr.mxu0 0.0
      %712 = vmatpush1.msra.mxu0 0.0
      %713 = vmatprep.subr.mxu0 0.0
      %714 = vmatpush1.msra.mxu0 0.0
      %715 = vmatprep.subr.mxu0 0.0
      %716 = vmatpush1.msra.mxu0 0.0
      %717 = vmatprep.subr.mxu0 0.0
      %718 = vmatpush1.msra.mxu0 0.0
      %719 = vmatprep.subr.mxu0 0.0
      %720 = vmatpush1.msra.mxu0 0.0
      %721 = vmatprep.subr.mxu0 0.0
      %722 = vmatpush1.msra.mxu0 0.0
      %723 = vmatprep.subr.mxu0 0.0
      %724 = vmatpush1.msra.mxu0 0.0
      %725 = vmatprep.subr.mxu0 0.0
      %726 = vmatpush1.msra.mxu0 0.0
      %727 = vmatprep.subr.mxu0 0.0
      %728 = vmatpush1.msra.mxu0 0.0
      %729 = vmatprep.subr.mxu0 0.0
      %730 = vmatpush1.msra.mxu0 0.0
      %731 = vmatprep.subr.mxu0 0.0
      %732 = vmatpush1.msra.mxu0 0.0
      %733 = vmatprep.subr.mxu0 0.0
      %734 = vmatpush1.msra.mxu0 0.0
      %735 = vmatprep.subr.mxu0 0.0
      %736 = vmatpush1.msra.mxu0 0.0
      %737 = vmatprep.subr.mxu0 0.0
      %738 = vmatpush1.msra.mxu0 0.0
      %739 = vmatprep.subr.mxu0 0.0
      %740 = vmatpush1.msra.mxu0 0.0
      %741 = vmatprep.mubr.f32.mxu0 0.0
      %742 = vmatmul.mubr.f32.gmra.mrb[0].mxu0 %v675
      %v743 = vpop.f32.mrb[0].mxu0
      %v744 = vadd.f32 %v664, %v743
      %v745 = vpop.f32.mrb[0].mxu0
      %746 = vdwg.mxu0
      %v748 = vsel %vm474, %v652, 0
      %v751 = vsel %vm474, %v744, 0
      %753 = vmatprep.subr.mxu0 0.0
      %754 = vmatpush1.xpose.msra.mxu0 %v751
      %755 = vmatprep.subr.mxu0 0.0
      %756 = vmatpush1.xpose.msra.mxu0 0.0
      %757 = vmatprep.subr.mxu0 0.0
      %758 = vmatpush1.xpose.msra.mxu0 0.0
      %759 = vmatprep.subr.mxu0 0.0
      %760 = vmatpush1.xpose.msra.mxu0 0.0
      %761 = vmatprep.subr.mxu0 0.0
      %762 = vmatpush1.xpose.msra.mxu0 0.0
      %763 = vmatprep.subr.mxu0 0.0
      %764 = vmatpush1.xpose.msra.mxu0 0.0
      %765 = vmatprep.subr.mxu0 0.0
      %766 = vmatpush1.xpose.msra.mxu0 0.0
      %767 = vmatprep.subr.mxu0 0.0
      %768 = vmatpush1.xpose.msra.mxu0 0.0
      %769 = vmatprep.subr.mxu0 0.0
      %770 = vmatpush1.xpose.msra.mxu0 0.0
      %771 = vmatprep.subr.mxu0 0.0
      %772 = vmatpush1.xpose.msra.mxu0 0.0
      %773 = vmatprep.subr.mxu0 0.0
      %774 = vmatpush1.xpose.msra.mxu0 0.0
      %775 = vmatprep.subr.mxu0 0.0
      %776 = vmatpush1.xpose.msra.mxu0 0.0
      %777 = vmatprep.subr.mxu0 0.0
      %778 = vmatpush1.xpose.msra.mxu0 0.0
      %779 = vmatprep.subr.mxu0 0.0
      %780 = vmatpush1.xpose.msra.mxu0 0.0
      %781 = vmatprep.subr.mxu0 0.0
      %782 = vmatpush1.xpose.msra.mxu0 0.0
      %783 = vmatprep.subr.mxu0 0.0
      %784 = vmatpush1.xpose.msra.mxu0 0.0
      %785 = vmatprep.subr.mxu0 0.0
      %786 = vmatpush1.xpose.msra.mxu0 0.0
      %787 = vmatprep.subr.mxu0 0.0
      %788 = vmatpush1.xpose.msra.mxu0 0.0
      %789 = vmatprep.subr.mxu0 0.0
      %790 = vmatpush1.xpose.msra.mxu0 0.0
      %791 = vmatprep.subr.mxu0 0.0
      %792 = vmatpush1.xpose.msra.mxu0 0.0
      %793 = vmatprep.subr.mxu0 0.0
      %794 = vmatpush1.xpose.msra.mxu0 0.0
      %795 = vmatprep.subr.mxu0 0.0
      %796 = vmatpush1.xpose.msra.mxu0 0.0
      %797 = vmatprep.subr.mxu0 0.0
      %798 = vmatpush1.xpose.msra.mxu0 0.0
      %799 = vmatprep.subr.mxu0 0.0
      %800 = vmatpush1.xpose.msra.mxu0 0.0
      %801 = vmatprep.subr.mxu0 0.0
      %802 = vmatpush1.xpose.msra.mxu0 0.0
      %803 = vmatprep.subr.mxu0 0.0
      %804 = vmatpush1.xpose.msra.mxu0 0.0
      %805 = vmatprep.subr.mxu0 0.0
      %806 = vmatpush1.xpose.msra.mxu0 0.0
      %807 = vmatprep.subr.mxu0 0.0
      %808 = vmatpush1.xpose.msra.mxu0 0.0
      %809 = vmatprep.subr.mxu0 0.0
      %810 = vmatpush1.xpose.msra.mxu0 0.0
      %811 = vmatprep.subr.mxu0 0.0
      %812 = vmatpush1.xpose.msra.mxu0 0.0
      %813 = vmatprep.subr.mxu0 0.0
      %814 = vmatpush1.xpose.msra.mxu0 0.0
      %815 = vmatprep.subr.mxu0 0.0
      %816 = vmatpush1.xpose.msra.mxu0 0.0
      %817 = vmatprep.mubr.f32.mxu0 0.0
      %818 = vmatmul.mubr.f32.gmra.mrb[0].mxu0 %v748
      %v819 = vpop.f32.mrb[0].mxu0
      %v820 = vadd.f32 0.0, %v819
      %v821 = vpop.f32.mrb[0].mxu0
      %822 = vdwg.mxu0
      %v823 = vmul.f32 %v820, 0.17677669
      %v824 = vld [vmem:[%s463] sm:$0x1]
      %vm825 = vcmp.gt.f32.partialorder %v824, 0.0
      %v826 = vsel %vm825, 1, 0
      %v827 = vlaneseq
      %v828 = vshrl.u32 %v827, 7
      %v829 = vsub.s32 0, %v828
      %v830 = vrot.slane %v826, %v829
      %vm831 = vcmp.eq.s32.totalorder %v830, 1
      %v832 = vsel %vm831, %v823, -3.4028235e+38
      %vm833 = vcmask 23552
      %834 = vst.msk [vmem:[%s467] sm:$0xff] %vm833, %v832
      %v835 = vld [vmem:[%s6] sm:$0xff]
      %v836 = vld [vmem:[%s6 + $0x8] sm:$0xff]
      %v837 = vld [vmem:[%s6 + $0x10] sm:$0xff]
      %v838 = vadd.f32 %v505, %v835
      %v839 = vadd.f32 %v506, %v836
      %v840 = vadd.f32 %v507, %v837
      %v841 = vpack.c.bf16 %v839, %v838
      %v842 = vpack.c.bf16 %v840, %v840
      %v845 = vunpack.c.l.b16 %v841
      %v846 = vunpack.c.h.b16 %v841
      %v847 = vunpack.c.l.b16 %v842
      %v848 = vpack.c.b16 %v845, %v845
      %v849 = vpack.c.b16 %v846, %v846
      %v850 = vpack.c.b16 %v847, %v847
      %vm854 = vcmask 257024
      %855 = vst.msk [vmem:[%s472] sm:$0xf] %vm854, %v848
      %856 = vst.msk [vmem:[%s472 + $0x4] sm:$0xf] %vm854, %v849
      %857 = vst.msk [vmem:[%s472 + $0x8] sm:$0xf] %vm854, %v850
      %p858 = scmp.lt.s32.totalorder %s24, 1
      %s859 = scalar_select %p858, %s24, 1
      %s860 = smul.addr %s859, 8
      %s861 = scalar_lea.vmem %s11, %s860
      %p862 = scmp.lt.s32.totalorder %s24, 1
      %s863 = scalar_select %p862, %s24, 1
      %s864 = smul.addr %s863, 3
      %s865 = smul.addr %s864, 4
      %s866 = scalar_lea.vmem %s12, %s865
      // Predicated region
      $region65: #{hcam_block_forward.2} parent=63 // pred_check
        %p867 = pneg %p293
      $region66: #{hcam_block_forward.2} parent=63 // pred_check_branch
        %869 = sbr.rel (%p867) target = $region68
      $region67: #{hcam_block_forward.2} parent=63 // pred_region
        _
      $region68: #{hcam_block_forward.2} parent=63 // pred_fallthru
        _
      // Predicated region
      $region69: #{hcam_block_forward.2} parent=63 // pred_check
        %p870 = pneg %p319
      $region70: #{hcam_block_forward.2} parent=63 // pred_check_branch
        %872 = sbr.rel (%p870) target = $region72
      $region71: #{hcam_block_forward.2} parent=63 // pred_region
        _
      $region72: #{hcam_block_forward.2} parent=63 // pred_fallthru
        _
    $region64: #{hcam_block_forward.2} parent=5 // pred_fallthru
      _
    %p873 = scmp.le.s32.totalorder 2, %s19
    // Predicated region
    $region73: #{hcam_block_forward.2} parent=5 // pred_check
      %p874 = pneg %p873
    $region74: #{hcam_block_forward.2} parent=5 // pred_check_branch
      %876 = sbr.rel (%p874) target = $region76
    $region75: #{hcam_block_forward.2} parent=5 // pred_region
      %s877 = ssub.s32 %s19, 2
      // Predicated region
      $region77: #{hcam_block_forward.2} parent=75 // pred_check
        %p878 = pneg %p299
      $region78: #{hcam_block_forward.2} parent=75 // pred_check_branch
        %880 = sbr.rel (%p878) target = $region80
      $region79: #{hcam_block_forward.2} parent=75 // pred_region
        %p881 = scmp.lt.s32.totalorder %s25, 1
        %s882 = scalar_select %p881, %s25, 1
        %s883 = smul.addr %s882, 8
        %s884 = scalar_lea.vmem %s11, %s883
      $region80: #{hcam_block_forward.2} parent=75 // pred_fallthru
        _
      // Predicated region
      $region81: #{hcam_block_forward.2} parent=75 // pred_check
        %p885 = pneg %p325
      $region82: #{hcam_block_forward.2} parent=75 // pred_check_branch
        %887 = sbr.rel (%p885) target = $region84
      $region83: #{hcam_block_forward.2} parent=75 // pred_region
        %p888 = scmp.lt.s32.totalorder %s25, 1
        %s889 = scalar_select %p888, %s25, 1
        %s890 = smul.addr %s889, 3
        %s891 = smul.addr %s890, 4
        %s892 = scalar_lea.vmem %s12, %s891
      $region84: #{hcam_block_forward.2} parent=75 // pred_fallthru
        _
    $region76: #{hcam_block_forward.2} parent=5 // pred_fallthru
      _
  $region6: #{hcam_block_forward.2} parent=0 // loop_footer
    %s23 = sadd.s32 1, %s19
  $region7: #{hcam_block_forward.2} parent=0 // loop_footer_branch
    %18 = sbr.rel target = $region3
  $region8: #{hcam_block_forward.2} parent=0 // loop_exit
    _

// kernel: hcam_block_forward.3
$region0: #{hcam_block_forward.3}
  #allocation0 [shape = 'u32[]', space=smem, size = 0x4, offset = 0x4, fixed_abs, tag = 'smem constant byte address 0x4 - core index']
  #allocation1 [shape = 'u32[144,128]{1,0:T(1,128)}', space=vmem, size = 0x12000, scoped, tag = 'internal scratch']
  %s0 = inlined_call_operand.vmem [shape: f32[2,8,32], index: 0, kind: input, shape index: {}]
  %s1 = inlined_call_operand.vmem [shape: f32[1,32], index: 1, kind: input, shape index: {}]
  %s2 = inlined_call_operand.vmem [shape: f32[1,32], index: 2, kind: input, shape index: {}]
  %s3 = inlined_call_operand.vmem [shape: bf16[2,24,32], index: 3, kind: input, shape index: {}]
  %s4 = inlined_call_operand.vmem [shape: f32[2,3,8], index: 4, kind: input, shape index: {}]
  %s5 = inlined_call_operand.vmem [shape: f32[2,2,8], index: 5, kind: input, shape index: {}]
  %s6 = inlined_call_operand.vmem [shape: s32[2,2,8], index: 6, kind: input, shape index: {}]
  %s7 = inlined_call_operand.vmem [shape: bf16[32,32], index: 7, kind: input, shape index: {}]
  %s8 = inlined_call_operand.vmem [shape: bf16[32,64], index: 8, kind: input, shape index: {}]
  %s9 = inlined_call_operand.vmem [shape: bf16[32,32], index: 9, kind: input, shape index: {}]
  %s10 = inlined_call_operand.vmem [shape: f32[1,32], index: 10, kind: input, shape index: {}]
  %s11 = inlined_call_operand.hbm [shape: f32[2,8,32], index: 11, kind: output, shape index: {}]
  %s12 = sld [smem:[#allocation0]]
  $region77: #{hcam_block_forward.3} parent=0
    _
  %s14 = ssub.s32 1, %s12
  %s15 = scalar_select 0, %s14, %s12
  $region1: #{hcam_block_forward.3} parent=0
    #allocation2 [shape = 'u8[8192]{0}', space=vmem, size = 0x2000, scoped, tag = 'output window, operand 0']
    #allocation3 [shape = 's32[2]{0}', space=sflag, size = 0x8, scoped, tag = 'scoped memory for hcam_block_forward.3']
    %16 = vsyncpa [#allocation3], 0
    %s17 = scalar_lea.sflag [#allocation3], 1
    %18 = vsyncpa %s17, 0
    loop: start=0, step=1, limit=4
    $region2: #{hcam_block_forward.3} parent=1 // loop_pre_header
      _
    $region3: #{hcam_block_forward.3} parent=1 // loop_header
      %s20 = sphi 0, %s24
      %p21 = scmp.ge.s32.totalorder %s20, 4
      %s30 = sphi 0, %s32
      %s33 = sphi 0, %s30
      %s34 = sphi 0, %s33
      %s50 = sphi 0, %s34
      %s54 = sphi 0, %s54
      %s56 = sphi 0, %s54
      %s57 = sphi 0, %s56
      %s71 = sphi 0, %s57
      %s75 = sphi 0, %s75
      %s77 = sphi 0, %s75
      %s78 = sphi 0, %s77
      %s92 = sphi 0, %s78
      %s98 = sphi 0, %s100
      %s101 = sphi 0, %s98
      %s102 = sphi 0, %s101
      %s118 = sphi 0, %s102
      %s124 = sphi 0, %s126
      %s127 = sphi 0, %s124
      %s128 = sphi 0, %s127
      %s144 = sphi 0, %s128
      %s150 = sphi 0, %s152
      %s153 = sphi 0, %s150
      %s154 = sphi 0, %s153
      %s170 = sphi 0, %s154
      %s176 = sphi 0, %s178
      %s179 = sphi 0, %s176
      %s180 = sphi 0, %s179
      %s196 = sphi 0, %s180
      %s200 = sphi 0, %s200
      %s202 = sphi 0, %s200
      %s203 = sphi 0, %s202
      %s217 = sphi 0, %s203
      %s221 = sphi 0, %s221
      %s223 = sphi 0, %s221
      %s224 = sphi 0, %s223
      %s238 = sphi 0, %s224
      %s242 = sphi 0, %s242
      %s244 = sphi 0, %s242
      %s245 = sphi 0, %s244
      %s259 = sphi 0, %s245
      %s263 = sphi 0, %s263
      %s265 = sphi 0, %s263
      %s266 = sphi 0, %s265
      %s280 = sphi 0, %s266
      %s286 = sphi 0, %s288
      %s289 = sphi 0, %s286
      %s290 = sphi 0, %s289
      %s306 = sphi 0, %s290
    $region4: #{hcam_block_forward.3} parent=1 // loop_header_branch
      %23 = sbr.rel (%p21) target = $region8
    $region5: #{hcam_block_forward.3} parent=1 // loop_body
      %s25 = ssub.s32 %s20, 1
      %s26 = ssub.s32 %s20, 2
      %s27 = sadd.s32 %s20, 1
      %s28 = ssub.s32 %s20, %s27
      %p29 = scmp.eq.s32.totalorder %s28, 0
      %s31 = sadd.s32 %s30, 1
      %s32 = scalar_select %p29, %s30, %s31
      %p35 = pneg %p29
      %p36 = scmp.eq.s32.totalorder %s20, 1
      %p37 = por %p35, %p36
      %p38 = scmp.ne.s32.totalorder %s30, %s33
      %p39 = scmp.eq.s32.totalorder %s20, 0
      %p40 = por %p38, %p39
      %p41 = scmp.ne.s32.totalorder %s30, %s33
      %p42 = scmp.eq.s32.totalorder %s25, 1
      %p43 = por %p41, %p42
      %p44 = scmp.ne.s32.totalorder %s33, %s34
      %p45 = scmp.eq.s32.totalorder %s25, 0
      %p46 = por %p44, %p45
      %p47 = scmp.ne.s32.totalorder %s33, %s34
      %p48 = scmp.eq.s32.totalorder %s26, 1
      %p49 = por %p47, %p48
      %p51 = scmp.ne.s32.totalorder %s34, %s50
      %p52 = scmp.eq.s32.totalorder %s26, 0
      %p53 = por %p51, %p52
      %s55 = sadd.s32 %s54, 1
      %p58 = scmp.eq.s32.totalorder %s20, 1
      %p59 = scmp.ne.s32.totalorder %s54, %s56
      %p60 = scmp.eq.s32.totalorder %s20, 0
      %p61 = por %p59, %p60
      %p62 = scmp.ne.s32.totalorder %s54, %s56
      %p63 = scmp.eq.s32.totalorder %s25, 1
      %p64 = por %p62, %p63
      %p65 = scmp.ne.s32.totalorder %s56, %s57
      %p66 = scmp.eq.s32.totalorder %s25, 0
      %p67 = por %p65, %p66
      %p68 = scmp.ne.s32.totalorder %s56, %s57
      %p69 = scmp.eq.s32.totalorder %s26, 1
      %p70 = por %p68, %p69
      %p72 = scmp.ne.s32.totalorder %s57, %s71
      %p73 = scmp.eq.s32.totalorder %s26, 0
      %p74 = por %p72, %p73
      %s76 = sadd.s32 %s75, 1
      %p79 = scmp.eq.s32.totalorder %s20, 1
      %p80 = scmp.ne.s32.totalorder %s75, %s77
      %p81 = scmp.eq.s32.totalorder %s20, 0
      %p82 = por %p80, %p81
      %p83 = scmp.ne.s32.totalorder %s75, %s77
      %p84 = scmp.eq.s32.totalorder %s25, 1
      %p85 = por %p83, %p84
      %p86 = scmp.ne.s32.totalorder %s77, %s78
      %p87 = scmp.eq.s32.totalorder %s25, 0
      %p88 = por %p86, %p87
      %p89 = scmp.ne.s32.totalorder %s77, %s78
      %p90 = scmp.eq.s32.totalorder %s26, 1
      %p91 = por %p89, %p90
      %p93 = scmp.ne.s32.totalorder %s78, %s92
      %p94 = scmp.eq.s32.totalorder %s26, 0
      %p95 = por %p93, %p94
      %s96 = ssub.s32 %s20, %s27
      %p97 = scmp.eq.s32.totalorder %s96, 0
      %s99 = sadd.s32 %s98, 1
      %s100 = scalar_select %p97, %s98, %s99
      %p103 = pneg %p97
      %p104 = scmp.eq.s32.totalorder %s20, 1
      %p105 = por %p103, %p104
      %p106 = scmp.ne.s32.totalorder %s98, %s101
      %p107 = scmp.eq.s32.totalorder %s20, 0
      %p108 = por %p106, %p107
      %p109 = scmp.ne.s32.totalorder %s98, %s101
      %p110 = scmp.eq.s32.totalorder %s25, 1
      %p111 = por %p109, %p110
      %p112 = scmp.ne.s32.totalorder %s101, %s102
      %p113 = scmp.eq.s32.totalorder %s25, 0
      %p114 = por %p112, %p113
      %p115 = scmp.ne.s32.totalorder %s101, %s102
      %p116 = scmp.eq.s32.totalorder %s26, 1
      %p117 = por %p115, %p116
      %p119 = scmp.ne.s32.totalorder %s102, %s118
      %p120 = scmp.eq.s32.totalorder %s26, 0
      %p121 = por %p119, %p120
      %s122 = ssub.s32 %s20, %s27
      %p123 = scmp.eq.s32.totalorder %s122, 0
      %s125 = sadd.s32 %s124, 1
      %s126 = scalar_select %p123, %s124, %s125
      %p129 = pneg %p123
      %p130 = scmp.eq.s32.totalorder %s20, 1
      %p131 = por %p129, %p130
      %p132 = scmp.ne.s32.totalorder %s124, %s127
      %p133 = scmp.eq.s32.totalorder %s20, 0
      %p134 = por %p132, %p133
      %p135 = scmp.ne.s32.totalorder %s124, %s127
      %p136 = scmp.eq.s32.totalorder %s25, 1
      %p137 = por %p135, %p136
      %p138 = scmp.ne.s32.totalorder %s127, %s128
      %p139 = scmp.eq.s32.totalorder %s25, 0
      %p140 = por %p138, %p139
      %p141 = scmp.ne.s32.totalorder %s127, %s128
      %p142 = scmp.eq.s32.totalorder %s26, 1
      %p143 = por %p141, %p142
      %p145 = scmp.ne.s32.totalorder %s128, %s144
      %p146 = scmp.eq.s32.totalorder %s26, 0
      %p147 = por %p145, %p146
      %s148 = ssub.s32 %s20, %s27
      %p149 = scmp.eq.s32.totalorder %s148, 0
      %s151 = sadd.s32 %s150, 1
      %s152 = scalar_select %p149, %s150, %s151
      %p155 = pneg %p149
      %p156 = scmp.eq.s32.totalorder %s20, 1
      %p157 = por %p155, %p156
      %p158 = scmp.ne.s32.totalorder %s150, %s153
      %p159 = scmp.eq.s32.totalorder %s20, 0
      %p160 = por %p158, %p159
      %p161 = scmp.ne.s32.totalorder %s150, %s153
      %p162 = scmp.eq.s32.totalorder %s25, 1
      %p163 = por %p161, %p162
      %p164 = scmp.ne.s32.totalorder %s153, %s154
      %p165 = scmp.eq.s32.totalorder %s25, 0
      %p166 = por %p164, %p165
      %p167 = scmp.ne.s32.totalorder %s153, %s154
      %p168 = scmp.eq.s32.totalorder %s26, 1
      %p169 = por %p167, %p168
      %p171 = scmp.ne.s32.totalorder %s154, %s170
      %p172 = scmp.eq.s32.totalorder %s26, 0
      %p173 = por %p171, %p172
      %s174 = ssub.s32 %s20, %s27
      %p175 = scmp.eq.s32.totalorder %s174, 0
      %s177 = sadd.s32 %s176, 1
      %s178 = scalar_select %p175, %s176, %s177
      %p181 = pneg %p175
      %p182 = scmp.eq.s32.totalorder %s20, 1
      %p183 = por %p181, %p182
      %p184 = scmp.ne.s32.totalorder %s176, %s179
      %p185 = scmp.eq.s32.totalorder %s20, 0
      %p186 = por %p184, %p185
      %p187 = scmp.ne.s32.totalorder %s176, %s179
      %p188 = scmp.eq.s32.totalorder %s25, 1
      %p189 = por %p187, %p188
      %p190 = scmp.ne.s32.totalorder %s179, %s180
      %p191 = scmp.eq.s32.totalorder %s25, 0
      %p192 = por %p190, %p191
      %p193 = scmp.ne.s32.totalorder %s179, %s180
      %p194 = scmp.eq.s32.totalorder %s26, 1
      %p195 = por %p193, %p194
      %p197 = scmp.ne.s32.totalorder %s180, %s196
      %p198 = scmp.eq.s32.totalorder %s26, 0
      %p199 = por %p197, %p198
      %s201 = sadd.s32 %s200, 1
      %p204 = scmp.eq.s32.totalorder %s20, 1
      %p205 = scmp.ne.s32.totalorder %s200, %s202
      %p206 = scmp.eq.s32.totalorder %s20, 0
      %p207 = por %p205, %p206
      %p208 = scmp.ne.s32.totalorder %s200, %s202
      %p209 = scmp.eq.s32.totalorder %s25, 1
      %p210 = por %p208, %p209
      %p211 = scmp.ne.s32.totalorder %s202, %s203
      %p212 = scmp.eq.s32.totalorder %s25, 0
      %p213 = por %p211, %p212
      %p214 = scmp.ne.s32.totalorder %s202, %s203
      %p215 = scmp.eq.s32.totalorder %s26, 1
      %p216 = por %p214, %p215
      %p218 = scmp.ne.s32.totalorder %s203, %s217
      %p219 = scmp.eq.s32.totalorder %s26, 0
      %p220 = por %p218, %p219
      %s222 = sadd.s32 %s221, 1
      %p225 = scmp.eq.s32.totalorder %s20, 1
      %p226 = scmp.ne.s32.totalorder %s221, %s223
      %p227 = scmp.eq.s32.totalorder %s20, 0
      %p228 = por %p226, %p227
      %p229 = scmp.ne.s32.totalorder %s221, %s223
      %p230 = scmp.eq.s32.totalorder %s25, 1
      %p231 = por %p229, %p230
      %p232 = scmp.ne.s32.totalorder %s223, %s224
      %p233 = scmp.eq.s32.totalorder %s25, 0
      %p234 = por %p232, %p233
      %p235 = scmp.ne.s32.totalorder %s223, %s224
      %p236 = scmp.eq.s32.totalorder %s26, 1
      %p237 = por %p235, %p236
      %p239 = scmp.ne.s32.totalorder %s224, %s238
      %p240 = scmp.eq.s32.totalorder %s26, 0
      %p241 = por %p239, %p240
      %s243 = sadd.s32 %s242, 1
      %p246 = scmp.eq.s32.totalorder %s20, 1
      %p247 = scmp.ne.s32.totalorder %s242, %s244
      %p248 = scmp.eq.s32.totalorder %s20, 0
      %p249 = por %p247, %p248
      %p250 = scmp.ne.s32.totalorder %s242, %s244
      %p251 = scmp.eq.s32.totalorder %s25, 1
      %p252 = por %p250, %p251
      %p253 = scmp.ne.s32.totalorder %s244, %s245
      %p254 = scmp.eq.s32.totalorder %s25, 0
      %p255 = por %p253, %p254
      %p256 = scmp.ne.s32.totalorder %s244, %s245
      %p257 = scmp.eq.s32.totalorder %s26, 1
      %p258 = por %p256, %p257
      %p260 = scmp.ne.s32.totalorder %s245, %s259
      %p261 = scmp.eq.s32.totalorder %s26, 0
      %p262 = por %p260, %p261
      %s264 = sadd.s32 %s263, 1
      %p267 = scmp.eq.s32.totalorder %s20, 1
      %p268 = scmp.ne.s32.totalorder %s263, %s265
      %p269 = scmp.eq.s32.totalorder %s20, 0
      %p270 = por %p268, %p269
      %p271 = scmp.ne.s32.totalorder %s263, %s265
      %p272 = scmp.eq.s32.totalorder %s25, 1
      %p273 = por %p271, %p272
      %p274 = scmp.ne.s32.totalorder %s265, %s266
      %p275 = scmp.eq.s32.totalorder %s25, 0
      %p276 = por %p274, %p275
      %p277 = scmp.ne.s32.totalorder %s265, %s266
      %p278 = scmp.eq.s32.totalorder %s26, 1
      %p279 = por %p277, %p278
      %p281 = scmp.ne.s32.totalorder %s266, %s280
      %p282 = scmp.eq.s32.totalorder %s26, 0
      %p283 = por %p281, %p282
      %s284 = ssub.s32 %s20, %s27
      %p285 = scmp.eq.s32.totalorder %s284, 0
      %s287 = sadd.s32 %s286, 1
      %s288 = scalar_select %p285, %s286, %s287
      %p291 = pneg %p285
      %p292 = scmp.eq.s32.totalorder %s20, 1
      %p293 = por %p291, %p292
      %p294 = scmp.ne.s32.totalorder %s286, %s289
      %p295 = scmp.eq.s32.totalorder %s20, 0
      %p296 = por %p294, %p295
      %p297 = scmp.ne.s32.totalorder %s286, %s289
      %p298 = scmp.eq.s32.totalorder %s25, 1
      %p299 = por %p297, %p298
      %p300 = scmp.ne.s32.totalorder %s289, %s290
      %p301 = scmp.eq.s32.totalorder %s25, 0
      %p302 = por %p300, %p301
      %p303 = scmp.ne.s32.totalorder %s289, %s290
      %p304 = scmp.eq.s32.totalorder %s26, 1
      %p305 = por %p303, %p304
      %p307 = scmp.ne.s32.totalorder %s290, %s306
      %p308 = scmp.eq.s32.totalorder %s26, 0
      %p309 = por %p307, %p308
      %p310 = scmp.le.s32.totalorder 1, %s20
      %p311 = scmp.lt.s32.totalorder %s20, 3
      %p312 = pnand %p310, %p311
      %p313 = pneg %p312
      // Predicated region
      $region9: #{hcam_block_forward.3} parent=5 // pred_check
        _
      $region10: #{hcam_block_forward.3} parent=5 // pred_check_branch
        %315 = sbr.rel (%p312) target = $region12
      $region11: #{hcam_block_forward.3} parent=5 // pred_region
        %s316 = ssub.s32 %s20, 1
        // Predicated region
        $region13: #{hcam_block_forward.3} parent=11 // pred_check
          %p317 = pneg %p67
        $region14: #{hcam_block_forward.3} parent=11 // pred_check_branch
          %319 = sbr.rel (%p317) target = $region16
        $region15: #{hcam_block_forward.3} parent=11 // pred_region
          _
        $region16: #{hcam_block_forward.3} parent=11 // pred_fallthru
          _
        // Predicated region
        $region17: #{hcam_block_forward.3} parent=11 // pred_check
          %p320 = pneg %p88
        $region18: #{hcam_block_forward.3} parent=11 // pred_check_branch
          %322 = sbr.rel (%p320) target = $region20
        $region19: #{hcam_block_forward.3} parent=11 // pred_region
          _
        $region20: #{hcam_block_forward.3} parent=11 // pred_fallthru
          _
        // Predicated region
        $region21: #{hcam_block_forward.3} parent=11 // pred_check
          %p323 = pneg %p213
        $region22: #{hcam_block_forward.3} parent=11 // pred_check_branch
          %325 = sbr.rel (%p323) target = $region24
        $region23: #{hcam_block_forward.3} parent=11 // pred_region
          _
        $region24: #{hcam_block_forward.3} parent=11 // pred_fallthru
          _
        // Predicated region
        $region25: #{hcam_block_forward.3} parent=11 // pred_check
          %p326 = pneg %p234
        $region26: #{hcam_block_forward.3} parent=11 // pred_check_branch
          %328 = sbr.rel (%p326) target = $region28
        $region27: #{hcam_block_forward.3} parent=11 // pred_region
          _
        $region28: #{hcam_block_forward.3} parent=11 // pred_fallthru
          _
        // Predicated region
        $region29: #{hcam_block_forward.3} parent=11 // pred_check
          %p329 = pneg %p255
        $region30: #{hcam_block_forward.3} parent=11 // pred_check_branch
          %331 = sbr.rel (%p329) target = $region32
        $region31: #{hcam_block_forward.3} parent=11 // pred_region
          _
        $region32: #{hcam_block_forward.3} parent=11 // pred_fallthru
          _
        // Predicated region
        $region33: #{hcam_block_forward.3} parent=11 // pred_check
          %p332 = pneg %p276
        $region34: #{hcam_block_forward.3} parent=11 // pred_check_branch
          %334 = sbr.rel (%p332) target = $region36
        $region35: #{hcam_block_forward.3} parent=11 // pred_region
          _
        $region36: #{hcam_block_forward.3} parent=11 // pred_fallthru
          _
      $region12: #{hcam_block_forward.3} parent=5 // pred_fallthru
        _
      %p335 = scmp.lt.s32.totalorder %s20, 2
      // Predicated region
      $region37: #{hcam_block_forward.3} parent=5 // pred_check
        %p336 = pneg %p335
      $region38: #{hcam_block_forward.3} parent=5 // pred_check_branch
        %338 = sbr.rel (%p336) target = $region40
      $region39: #{hcam_block_forward.3} parent=5 // pred_region
        // Predicated region
        $region41: #{hcam_block_forward.3} parent=39 // pred_check
          %p339 = pneg %p40
        $region42: #{hcam_block_forward.3} parent=39 // pred_check_branch
          %341 = sbr.rel (%p339) target = $region44
        $region43: #{hcam_block_forward.3} parent=39 // pred_region
          %p342 = scmp.lt.s32.totalorder %s20, 1
          %s343 = scalar_select %p342, %s20, 1
          %s344 = smul.addr %s343, 8
          %s345 = scalar_lea.vmem %s0, %s344
        $region44: #{hcam_block_forward.3} parent=39 // pred_fallthru
          _
        // Predicated region
        $region45: #{hcam_block_forward.3} parent=39 // pred_check
          %p346 = pneg %p108
        $region46: #{hcam_block_forward.3} parent=39 // pred_check_branch
          %348 = sbr.rel (%p346) target = $region48
        $region47: #{hcam_block_forward.3} parent=39 // pred_region
          %p349 = scmp.lt.s32.totalorder %s20, 1
          %s350 = scalar_select %p349, %s20, 1
          %s351 = smul.addr %s350, 3
          %s352 = smul.addr %s351, 4
          %s353 = scalar_lea.vmem %s3, %s352
        $region48: #{hcam_block_forward.3} parent=39 // pred_fallthru
          _
        // Predicated region
        $region49: #{hcam_block_forward.3} parent=39 // pred_check
          %p354 = pneg %p134
        $region50: #{hcam_block_forward.3} parent=39 // pred_check_branch
          %356 = sbr.rel (%p354) target = $region52
        $region51: #{hcam_block_forward.3} parent=39 // pred_region
          %p357 = scmp.lt.s32.totalorder %s20, 1
          %s358 = scalar_select %p357, %s20, 1
          %s359 = smul.addr %s358, 4
          %s360 = scalar_lea.vmem %s4, %s359
        $region52: #{hcam_block_forward.3} parent=39 // pred_fallthru
          _
        // Predicated region
        $region53: #{hcam_block_forward.3} parent=39 // pred_check
          %p361 = pneg %p160
        $region54: #{hcam_block_forward.3} parent=39 // pred_check_branch
          %363 = sbr.rel (%p361) target = $region56
        $region55: #{hcam_block_forward.3} parent=39 // pred_region
          %p364 = scmp.lt.s32.totalorder %s20, 1
          %s365 = scalar_select %p364, %s20, 1
          %s366 = smul.addr %s365, 2
          %s367 = scalar_lea.vmem %s5, %s366
        $region56: #{hcam_block_forward.3} parent=39 // pred_fallthru
          _
        // Predicated region
        $region57: #{hcam_block_forward.3} parent=39 // pred_check
          %p368 = pneg %p186
        $region58: #{hcam_block_forward.3} parent=39 // pred_check_branch
          %370 = sbr.rel (%p368) target = $region60
        $region59: #{hcam_block_forward.3} parent=39 // pred_region
          %p371 = scmp.lt.s32.totalorder %s20, 1
          %s372 = scalar_select %p371, %s20, 1
          %s373 = smul.addr %s372, 2
          %s374 = scalar_lea.vmem %s6, %s373
        $region60: #{hcam_block_forward.3} parent=39 // pred_fallthru
          _
      $region40: #{hcam_block_forward.3} parent=5 // pred_fallthru
        _
      %p375 = scmp.le.s32.totalorder 1, %s20
      %p376 = scmp.lt.s32.totalorder %s20, 3
      %p377 = pnand %p375, %p376
      %p378 = pneg %p377
      // Predicated region
      $region61: #{hcam_block_forward.3} parent=5 // pred_check
        _
      $region62: #{hcam_block_forward.3} parent=5 // pred_check_branch
        %380 = sbr.rel (%p377) target = $region64
      $region63: #{hcam_block_forward.3} parent=5 // pred_region
        %s381 = ssub.s32 %s20, 1
        %p382 = scmp.lt.s32.totalorder %s25, 1
        %s383 = scalar_select %p382, %s25, 1
        %s384 = smul.addr %s383, 8
        %s385 = scalar_lea.vmem %s0, %s384
        %p386 = pneg %p46
        %p387 = pneg %p43
        %p388 = pneg %p67
        %p389 = pneg %p64
        %p390 = pneg %p88
        %p391 = pneg %p85
        %p392 = scmp.lt.s32.totalorder %s25, 1
        %s393 = scalar_select %p392, %s25, 1
        %s394 = smul.addr %s393, 3
        %s395 = smul.addr %s394, 4
        %s396 = scalar_lea.vmem %s3, %s395
        %p397 = pneg %p114
        %p398 = pneg %p111
        %p399 = scmp.lt.s32.totalorder %s25, 1
        %s400 = scalar_select %p399, %s25, 1
        %s401 = smul.addr %s400, 4
        %s402 = scalar_lea.vmem %s4, %s401
        %p403 = pneg %p140
        %p404 = pneg %p137
        %p405 = scmp.lt.s32.totalorder %s25, 1
        %s406 = scalar_select %p405, %s25, 1
        %s407 = smul.addr %s406, 2
        %s408 = scalar_lea.vmem %s5, %s407
        %p409 = pneg %p166
        %p410 = pneg %p163
        %p411 = scmp.lt.s32.totalorder %s25, 1
        %s412 = scalar_select %p411, %s25, 1
        %s413 = smul.addr %s412, 2
        %s414 = scalar_lea.vmem %s6, %s413
        %p415 = pneg %p192
        %p416 = pneg %p189
        %p417 = pneg %p213
        %p418 = pneg %p210
        %p419 = pneg %p234
        %p420 = pneg %p231
        %p421 = pneg %p255
        %p422 = pneg %p252
        %p423 = pneg %p276
        %p424 = pneg %p273
        %p425 = pneg %p302
        %p426 = pneg %p299
        %s427 = sand.u32 %s289, 1
        %s428 = scalar_lea.sflag [#allocation3], %s427
        %s429 = sand.u32 %s289, 1
        %s430 = smul.addr %s429, 8
        %s431 = scalar_lea.vmem [#allocation2], %s430
        %p432 = scmp.lt.s32.totalorder %s25, 1
        %s433 = scalar_select %p432, %s25, 1
        %s434 = smul.addr %s433, 8
        %s435 = scalar_lea.vmem %s0, %s434
        %p436 = scmp.lt.s32.totalorder %s25, 1
        %s437 = scalar_select %p436, %s25, 1
        %s438 = smul.addr %s437, 3
        %s439 = smul.addr %s438, 4
        %s440 = scalar_lea.vmem %s3, %s439
        %p441 = scmp.lt.s32.totalorder %s25, 1
        %s442 = scalar_select %p441, %s25, 1
        %s443 = smul.addr %s442, 4
        %s444 = scalar_lea.vmem %s4, %s443
        %p445 = scmp.lt.s32.totalorder %s25, 1
        %s446 = scalar_select %p445, %s25, 1
        %s447 = smul.addr %s446, 2
        %s448 = scalar_lea.vmem %s5, %s447
        %p449 = scmp.lt.s32.totalorder %s25, 1
        %s450 = scalar_select %p449, %s25, 1
        %s451 = smul.addr %s450, 2
        %s452 = scalar_lea.vmem %s6, %s451
        %v454 = vld [vmem:[%s435] sm:$0xff]
        %vm455 = vcmask 261120
        %v456 = vsel %vm455, %v454, 0.0
        %457 = vadd.xlane.f32.xlu0 %v456
        %v458 = vpop.xlane.xlu0 %457
        %v459 = vrcp.pop 32.0
        %v460 = vmul.f32 %v458, %v459
        %v461 = vsub.f32 %v454, %v460
        %v462 = vmul.f32 %v461, %v461
        %v463 = vsel %vm455, %v462, 0.0
        %464 = vadd.xlane.f32.xlu0 %v463
        %v465 = vpop.xlane.xlu0 %464
        %v466 = vmul.f32 %v465, %v459
        %v467 = vadd.f32 %v466, 1e-05
        %v468 = vrsqrt.pop %v467
        %v469 = vmul.f32 %v461, %v468
        %v470 = vld [vmem:[%s1] sm:$0x1]
        %v472 = vlaneseq
        %v473 = vshrl.u32 %v472, 7
        %v474 = vsub.s32 0, %v473
        %v475 = vrot.slane %v470, %v474
        %v477 = vmul.f32 %v469, %v475
        %v478 = vld [vmem:[%s2] sm:$0x1]
        %v480 = vlaneseq
        %v481 = vshrl.u32 %v480, 7
        %v482 = vsub.s32 0, %v481
        %v483 = vrot.slane %v478, %v482
        %v485 = vadd.f32 %v477, %v483
        %v486 = vld [vmem:[%s440] sm:$0xf]
        %v487 = vld [vmem:[%s440 + $0x4] sm:$0xf]
        %v488 = vld [vmem:[%s440 + $0x8] sm:$0xf]
        %v489 = vld [vmem:[%s444] sm:$0x7]
        %v490 = vld [vmem:[%s448] sm:$0x3]
        %v491 = vld [vmem:[%s452] sm:$0x3]
        %v492 = vlaneseq
        %v493 = vshrl.u32 %v492, 7
        %v494 = vlaneseq
        %v495 = vshrl.u32 %v494, 7
        %v496 = vsub.s32 0, %v495
        %v497 = vrot.slane %v491, %v496
        %vm498 = vcmp.eq.s32.totalorder %v493, %v497
        %v499 = vlaneseq
        %v500 = vshrl.u32 %v499, 7
        %v501 = vsub.s32 0, %v500
        %v502 = vrot.slane %v490, %v501
        %v503 = vsel %vm498, %v502, 0.0
        %v504 = vadd.f32 %v503, 0.0
        %v505 = vlaneseq
        %v506 = vshrl.u32 %v505, 7
        %v507 = vsub.s32 1, %v506
        %v508 = vrot.slane %v491, %v507
        %vm509 = vcmp.eq.s32.totalorder %v493, %v508
        %v510 = vlaneseq
        %v511 = vshrl.u32 %v510, 7
        %v512 = vsub.s32 1, %v511
        %v513 = vrot.slane %v490, %v512
        %v514 = vsel %vm509, %v513, 0.0
        %v515 = vadd.f32 %v504, %v514
        %v516 = vpack.c.bf16 %v485, %v485
        %v517 = vld [vmem:[%s7] sm:$0xf]
        %v518 = vld [vmem:[%s7 + $0x4] sm:$0xf]
        %v519 = vld [vmem:[%s7 + $0x8] sm:$0xf]
        %v520 = vld [vmem:[%s7 + $0xc] sm:$0xf]
        %v525 = vunpack.c.l.b16 %v517
        %v526 = vunpack.c.l.b16 %v518
        %v527 = vunpack.c.l.b16 %v519
        %v528 = vunpack.c.l.b16 %v520
        %v529 = vpack.c.b16 %v526, %v525
        %v530 = vpack.c.b16 %v528, %v527
        %v534 = vsel %vm455, %v516, 0
        %536 = vmatprep.subr.bf16.mxu0 0
        %537 = vmatpush1.bf16.msra.mxu0 %v529
        %538 = vmatprep.subr.bf16.mxu0 0
        %539 = vmatpush1.bf16.msra.mxu0 %v530
        %540 = vmatprep.subr.bf16.mxu0 0
        %541 = vmatpush1.bf16.msra.mxu0 0
        %542 = vmatprep.subr.bf16.mxu0 0
        %543 = vmatpush1.bf16.msra.mxu0 0
        %544 = vmatprep.subr.bf16.mxu0 0
        %545 = vmatpush1.bf16.msra.mxu0 0
        %546 = vmatprep.subr.bf16.mxu0 0
        %547 = vmatpush1.bf16.msra.mxu0 0
        %548 = vmatprep.subr.bf16.mxu0 0
        %549 = vmatpush1.bf16.msra.mxu0 0
        %550 = vmatprep.subr.bf16.mxu0 0
        %551 = vmatpush1.bf16.msra.mxu0 0
        %552 = vmatprep.subr.bf16.mxu0 0
        %553 = vmatpush1.bf16.msra.mxu0 0
        %554 = vmatprep.subr.bf16.mxu0 0
        %555 = vmatpush1.bf16.msra.mxu0 0
        %556 = vmatprep.subr.bf16.mxu0 0
        %557 = vmatpush1.bf16.msra.mxu0 0
        %558 = vmatprep.subr.bf16.mxu0 0
        %559 = vmatpush1.bf16.msra.mxu0 0
        %560 = vmatprep.subr.bf16.mxu0 0
        %561 = vmatpush1.bf16.msra.mxu0 0
        %562 = vmatprep.subr.bf16.mxu0 0
        %563 = vmatpush1.bf16.msra.mxu0 0
        %564 = vmatprep.subr.bf16.mxu0 0
        %565 = vmatpush1.bf16.msra.mxu0 0
        %566 = vmatprep.subr.bf16.mxu0 0
        %567 = vmatpush1.bf16.msra.mxu0 0
        %568 = vmatprep.mubr.bf16.mxu0 0
        %569 = vmatmul.mubr.bf16.gmra.mrb[0].mxu0 %v534
        %v570 = vpop.f32.mrb[0].mxu0
        %v571 = vadd.f32 0.0, %v570
        %v572 = vpop.f32.mrb[0].mxu0
        %v573 = vpop.f32.mrb[0].mxu0
        %v574 = vpop.f32.mrb[0].mxu0
        %575 = vdwg.mxu0
        %v576 = vmul.f32 %v571, 0.35355338
        %v577 = vld [vmem:[%s8] sm:$0xf]
        %v578 = vld [vmem:[%s8 + $0x4] sm:$0xf]
        %v579 = vld [vmem:[%s8 + $0x8] sm:$0xf]
        %v580 = vld [vmem:[%s8 + $0xc] sm:$0xf]
        %v584 = vunpack.c.l.b16 %v486
        %v585 = vunpack.c.l.b16 %v487
        %v586 = vunpack.c.l.b16 %v488
        %v587 = vpack.c.b16 %v585, %v584
        %v588 = vpack.c.b16 %v586, %v586
        %v593 = vunpack.c.l.b16 %v577
        %v594 = vunpack.c.l.b16 %v578
        %v595 = vunpack.c.l.b16 %v579
        %v596 = vunpack.c.l.b16 %v580
        %v597 = vpack.c.b16 %v594, %v593
        %v598 = vpack.c.b16 %v596, %v595
        %v602 = vsel %vm455, %v587, 0
        %v605 = vsel %vm455, %v588, 0
        %607 = vmatprep.subr.bf16.mxu0 0
        %608 = vmatpush1.bf16.msra.mxu0 %v597
        %609 = vmatprep.subr.bf16.mxu0 0
        %610 = vmatpush1.bf16.msra.mxu0 %v598
        %611 = vmatprep.subr.bf16.mxu0 0
        %612 = vmatpush1.bf16.msra.mxu0 0
        %613 = vmatprep.subr.bf16.mxu0 0
        %614 = vmatpush1.bf16.msra.mxu0 0
        %615 = vmatprep.subr.bf16.mxu0 0
        %616 = vmatpush1.bf16.msra.mxu0 0
        %617 = vmatprep.subr.bf16.mxu0 0
        %618 = vmatpush1.bf16.msra.mxu0 0
        %619 = vmatprep.subr.bf16.mxu0 0
        %620 = vmatpush1.bf16.msra.mxu0 0
        %621 = vmatprep.subr.bf16.mxu0 0
        %622 = vmatpush1.bf16.msra.mxu0 0
        %623 = vmatprep.subr.bf16.mxu0 0
        %624 = vmatpush1.bf16.msra.mxu0 0
        %625 = vmatprep.subr.bf16.mxu0 0
        %626 = vmatpush1.bf16.msra.mxu0 0
        %627 = vmatprep.subr.bf16.mxu0 0
        %628 = vmatpush1.bf16.msra.mxu0 0
        %629 = vmatprep.subr.bf16.mxu0 0
        %630 = vmatpush1.bf16.msra.mxu0 0
        %631 = vmatprep.subr.bf16.mxu0 0
        %632 = vmatpush1.bf16.msra.mxu0 0
        %633 = vmatprep.subr.bf16.mxu0 0
        %634 = vmatpush1.bf16.msra.mxu0 0
        %635 = vmatprep.subr.bf16.mxu0 0
        %636 = vmatpush1.bf16.msra.mxu0 0
        %637 = vmatprep.subr.bf16.mxu0 0
        %638 = vmatpush1.bf16.msra.mxu0 0
        %639 = vmatprep.mubr.bf16.mxu0 0
        %640 = vmatmul.mubr.bf16.gmra.mrb[0].mxu0 %v602
        %v641 = vpop.f32.mrb[0].mxu0
        %v642 = vadd.f32 0.0, %v641
        %v643 = vpop.f32.mrb[0].mxu0
        %v644 = vpop.f32.mrb[0].mxu0
        %v645 = vadd.f32 0.0, %v644
        %v646 = vpop.f32.mrb[0].mxu0
        %647 = vmatprep.mubr.bf16.mxu0 0
        %648 = vmatmul.mubr.bf16.gmra.mrb[0].mxu0 %v605
        %v649 = vpop.f32.mrb[0].mxu0
        %v650 = vadd.f32 0.0, %v649
        %v651 = vpop.f32.mrb[0].mxu0
        %v652 = vpop.f32.mrb[0].mxu0
        %v653 = vpop.f32.mrb[0].mxu0
        %654 = vdwg.mxu0
        %656 = vrot.lane.b32.xlu0 %v576, 120
        %v657 = vpop.permute.xlu0 %656
        %658 = vrot.lane.b32.xlu0 %v576, 112
        %v659 = vpop.permute.xlu0 %658
        %660 = vrot.lane.b32.xlu0 %v576, 104
        %v661 = vpop.permute.xlu0 %660
        %665 = vrot.lane.b32.xlu0 %v642, 120
        %v666 = vpop.permute.xlu0 %665
        %667 = vrot.lane.b32.xlu0 %v645, 120
        %v668 = vpop.permute.xlu0 %667
        %669 = vrot.lane.b32.xlu0 %v650, 120
        %v670 = vpop.permute.xlu0 %669
        %671 = vrot.lane.b32.xlu0 %v642, 112
        %v672 = vpop.permute.xlu0 %671
        %673 = vrot.lane.b32.xlu0 %v645, 112
        %v674 = vpop.permute.xlu0 %673
        %675 = vrot.lane.b32.xlu0 %v650, 112
        %v676 = vpop.permute.xlu0 %675
        %677 = vrot.lane.b32.xlu0 %v642, 104
        %v678 = vpop.permute.xlu0 %677
        %679 = vrot.lane.b32.xlu0 %v645, 104
        %v680 = vpop.permute.xlu0 %679
        %681 = vrot.lane.b32.xlu0 %v650, 104
        %v682 = vpop.permute.xlu0 %681
        %vm683 = vcmask 64512
        %v684 = vsel %vm683, %v576, 0
        %v686 = vsel %vm683, %v642, 0
        %688 = vmatprep.subr.mxu0 0.0
        %689 = vmatpush1.xpose.msra.mxu0 %v686
        %690 = vmatprep.subr.mxu0 0.0
        %691 = vmatpush1.xpose.msra.mxu0 0.0
        %692 = vmatprep.subr.mxu0 0.0
        %693 = vmatpush1.xpose.msra.mxu0 0.0
        %694 = vmatprep.subr.mxu0 0.0
        %695 = vmatpush1.xpose.msra.mxu0 0.0
        %696 = vmatprep.subr.mxu0 0.0
        %697 = vmatpush1.xpose.msra.mxu0 0.0
        %698 = vmatprep.subr.mxu0 0.0
        %699 = vmatpush1.xpose.msra.mxu0 0.0
        %700 = vmatprep.subr.mxu0 0.0
        %701 = vmatpush1.xpose.msra.mxu0 0.0
        %702 = vmatprep.subr.mxu0 0.0
        %703 = vmatpush1.xpose.msra.mxu0 0.0
        %704 = vmatprep.subr.mxu0 0.0
        %705 = vmatpush1.xpose.msra.mxu0 0.0
        %706 = vmatprep.subr.mxu0 0.0
        %707 = vmatpush1.xpose.msra.mxu0 0.0
        %708 = vmatprep.subr.mxu0 0.0
        %709 = vmatpush1.xpose.msra.mxu0 0.0
        %710 = vmatprep.subr.mxu0 0.0
        %711 = vmatpush1.xpose.msra.mxu0 0.0
        %712 = vmatprep.subr.mxu0 0.0
        %713 = vmatpush1.xpose.msra.mxu0 0.0
        %714 = vmatprep.subr.mxu0 0.0
        %715 = vmatpush1.xpose.msra.mxu0 0.0
        %716 = vmatprep.subr.mxu0 0.0
        %717 = vmatpush1.xpose.msra.mxu0 0.0
        %718 = vmatprep.subr.mxu0 0.0
        %719 = vmatpush1.xpose.msra.mxu0 0.0
        %720 = vmatprep.subr.mxu0 0.0
        %721 = vmatpush1.xpose.msra.mxu0 0.0
        %722 = vmatprep.subr.mxu0 0.0
        %723 = vmatpush1.xpose.msra.mxu0 0.0
        %724 = vmatprep.subr.mxu0 0.0
        %725 = vmatpush1.xpose.msra.mxu0 0.0
        %726 = vmatprep.subr.mxu0 0.0
        %727 = vmatpush1.xpose.msra.mxu0 0.0
        %728 = vmatprep.subr.mxu0 0.0
        %729 = vmatpush1.xpose.msra.mxu0 0.0
        %730 = vmatprep.subr.mxu0 0.0
        %731 = vmatpush1.xpose.msra.mxu0 0.0
        %732 = vmatprep.subr.mxu0 0.0
        %733 = vmatpush1.xpose.msra.mxu0 0.0
        %734 = vmatprep.subr.mxu0 0.0
        %735 = vmatpush1.xpose.msra.mxu0 0.0
        %736 = vmatprep.subr.mxu0 0.0
        %737 = vmatpush1.xpose.msra.mxu0 0.0
        %738 = vmatprep.subr.mxu0 0.0
        %739 = vmatpush1.xpose.msra.mxu0 0.0
        %740 = vmatprep.subr.mxu0 0.0
        %741 = vmatpush1.xpose.msra.mxu0 0.0
        %742 = vmatprep.subr.mxu0 0.0
        %743 = vmatpush1.xpose.msra.mxu0 0.0
        %744 = vmatprep.subr.mxu0 0.0
        %745 = vmatpush1.xpose.msra.mxu0 0.0
        %746 = vmatprep.subr.mxu0 0.0
        %747 = vmatpush1.xpose.msra.mxu0 0.0
        %748 = vmatprep.subr.mxu0 0.0
        %749 = vmatpush1.xpose.msra.mxu0 0.0
        %750 = vmatprep.subr.mxu0 0.0
        %751 = vmatpush1.xpose.msra.mxu0 0.0
        %752 = vmatprep.mubr.f32.mxu0 0.0
        %753 = vmatmul.mubr.f32.gmra.mrb[0].mxu0 %v684
        %v754 = vpop.f32.mrb[0].mxu0
        %v755 = vadd.f32 0.0, %v754
        %v756 = vpop.f32.mrb[0].mxu0
        %757 = vdwg.mxu0
        %v758 = vsel %vm683, %v645, 0
        %760 = vmatprep.subr.mxu0 0.0
        %761 = vmatpush1.xpose.msra.mxu0 %v758
        %762 = vmatprep.subr.mxu0 0.0
        %763 = vmatpush1.xpose.msra.mxu0 0.0
        %764 = vmatprep.subr.mxu0 0.0
        %765 = vmatpush1.xpose.msra.mxu0 0.0
        %766 = vmatprep.subr.mxu0 0.0
        %767 = vmatpush1.xpose.msra.mxu0 0.0
        %768 = vmatprep.subr.mxu0 0.0
        %769 = vmatpush1.xpose.msra.mxu0 0.0
        %770 = vmatprep.subr.mxu0 0.0
        %771 = vmatpush1.xpose.msra.mxu0 0.0
        %772 = vmatprep.subr.mxu0 0.0
        %773 = vmatpush1.xpose.msra.mxu0 0.0
        %774 = vmatprep.subr.mxu0 0.0
        %775 = vmatpush1.xpose.msra.mxu0 0.0
        %776 = vmatprep.subr.mxu0 0.0
        %777 = vmatpush1.xpose.msra.mxu0 0.0
        %778 = vmatprep.subr.mxu0 0.0
        %779 = vmatpush1.xpose.msra.mxu0 0.0
        %780 = vmatprep.subr.mxu0 0.0
        %781 = vmatpush1.xpose.msra.mxu0 0.0
        %782 = vmatprep.subr.mxu0 0.0
        %783 = vmatpush1.xpose.msra.mxu0 0.0
        %784 = vmatprep.subr.mxu0 0.0
        %785 = vmatpush1.xpose.msra.mxu0 0.0
        %786 = vmatprep.subr.mxu0 0.0
        %787 = vmatpush1.xpose.msra.mxu0 0.0
        %788 = vmatprep.subr.mxu0 0.0
        %789 = vmatpush1.xpose.msra.mxu0 0.0
        %790 = vmatprep.subr.mxu0 0.0
        %791 = vmatpush1.xpose.msra.mxu0 0.0
        %792 = vmatprep.subr.mxu0 0.0
        %793 = vmatpush1.xpose.msra.mxu0 0.0
        %794 = vmatprep.subr.mxu0 0.0
        %795 = vmatpush1.xpose.msra.mxu0 0.0
        %796 = vmatprep.subr.mxu0 0.0
        %797 = vmatpush1.xpose.msra.mxu0 0.0
        %798 = vmatprep.subr.mxu0 0.0
        %799 = vmatpush1.xpose.msra.mxu0 0.0
        %800 = vmatprep.subr.mxu0 0.0
        %801 = vmatpush1.xpose.msra.mxu0 0.0
        %802 = vmatprep.subr.mxu0 0.0
        %803 = vmatpush1.xpose.msra.mxu0 0.0
        %804 = vmatprep.subr.mxu0 0.0
        %805 = vmatpush1.xpose.msra.mxu0 0.0
        %806 = vmatprep.subr.mxu0 0.0
        %807 = vmatpush1.xpose.msra.mxu0 0.0
        %808 = vmatprep.subr.mxu0 0.0
        %809 = vmatpush1.xpose.msra.mxu0 0.0
        %810 = vmatprep.subr.mxu0 0.0
        %811 = vmatpush1.xpose.msra.mxu0 0.0
        %812 = vmatprep.subr.mxu0 0.0
        %813 = vmatpush1.xpose.msra.mxu0 0.0
        %814 = vmatprep.subr.mxu0 0.0
        %815 = vmatpush1.xpose.msra.mxu0 0.0
        %816 = vmatprep.subr.mxu0 0.0
        %817 = vmatpush1.xpose.msra.mxu0 0.0
        %818 = vmatprep.subr.mxu0 0.0
        %819 = vmatpush1.xpose.msra.mxu0 0.0
        %820 = vmatprep.subr.mxu0 0.0
        %821 = vmatpush1.xpose.msra.mxu0 0.0
        %822 = vmatprep.subr.mxu0 0.0
        %823 = vmatpush1.xpose.msra.mxu0 0.0
        %824 = vmatprep.mubr.f32.mxu0 0.0
        %825 = vmatmul.mubr.f32.gmra.mrb[0].mxu0 %v684
        %v826 = vpop.f32.mrb[0].mxu0
        %v827 = vadd.f32 0.0, %v826
        %v828 = vpop.f32.mrb[0].mxu0
        %829 = vdwg.mxu0
        %v830 = vsel %vm683, %v650, 0
        %832 = vmatprep.subr.mxu0 0.0
        %833 = vmatpush1.xpose.msra.mxu0 %v830
        %834 = vmatprep.subr.mxu0 0.0
        %835 = vmatpush1.xpose.msra.mxu0 0.0
        %836 = vmatprep.subr.mxu0 0.0
        %837 = vmatpush1.xpose.msra.mxu0 0.0
        %838 = vmatprep.subr.mxu0 0.0
        %839 = vmatpush1.xpose.msra.mxu0 0.0
        %840 = vmatprep.subr.mxu0 0.0
        %841 = vmatpush1.xpose.msra.mxu0 0.0
        %842 = vmatprep.subr.mxu0 0.0
        %843 = vmatpush1.xpose.msra.mxu0 0.0
        %844 = vmatprep.subr.mxu0 0.0
        %845 = vmatpush1.xpose.msra.mxu0 0.0
        %846 = vmatprep.subr.mxu0 0.0
        %847 = vmatpush1.xpose.msra.mxu0 0.0
        %848 = vmatprep.subr.mxu0 0.0
        %849 = vmatpush1.xpose.msra.mxu0 0.0
        %850 = vmatprep.subr.mxu0 0.0
        %851 = vmatpush1.xpose.msra.mxu0 0.0
        %852 = vmatprep.subr.mxu0 0.0
        %853 = vmatpush1.xpose.msra.mxu0 0.0
        %854 = vmatprep.subr.mxu0 0.0
        %855 = vmatpush1.xpose.msra.mxu0 0.0
        %856 = vmatprep.subr.mxu0 0.0
        %857 = vmatpush1.xpose.msra.mxu0 0.0
        %858 = vmatprep.subr.mxu0 0.0
        %859 = vmatpush1.xpose.msra.mxu0 0.0
        %860 = vmatprep.subr.mxu0 0.0
        %861 = vmatpush1.xpose.msra.mxu0 0.0
        %862 = vmatprep.subr.mxu0 0.0
        %863 = vmatpush1.xpose.msra.mxu0 0.0
        %864 = vmatprep.subr.mxu0 0.0
        %865 = vmatpush1.xpose.msra.mxu0 0.0
        %866 = vmatprep.subr.mxu0 0.0
        %867 = vmatpush1.xpose.msra.mxu0 0.0
        %868 = vmatprep.subr.mxu0 0.0
        %869 = vmatpush1.xpose.msra.mxu0 0.0
        %870 = vmatprep.subr.mxu0 0.0
        %871 = vmatpush1.xpose.msra.mxu0 0.0
        %872 = vmatprep.subr.mxu0 0.0
        %873 = vmatpush1.xpose.msra.mxu0 0.0
        %874 = vmatprep.subr.mxu0 0.0
        %875 = vmatpush1.xpose.msra.mxu0 0.0
        %876 = vmatprep.subr.mxu0 0.0
        %877 = vmatpush1.xpose.msra.mxu0 0.0
        %878 = vmatprep.subr.mxu0 0.0
        %879 = vmatpush1.xpose.msra.mxu0 0.0
        %880 = vmatprep.subr.mxu0 0.0
        %881 = vmatpush1.xpose.msra.mxu0 0.0
        %882 = vmatprep.subr.mxu0 0.0
        %883 = vmatpush1.xpose.msra.mxu0 0.0
        %884 = vmatprep.subr.mxu0 0.0
        %885 = vmatpush1.xpose.msra.mxu0 0.0
        %886 = vmatprep.subr.mxu0 0.0
        %887 = vmatpush1.xpose.msra.mxu0 0.0
        %888 = vmatprep.subr.mxu0 0.0
        %889 = vmatpush1.xpose.msra.mxu0 0.0
        %890 = vmatprep.subr.mxu0 0.0
        %891 = vmatpush1.xpose.msra.mxu0 0.0
        %892 = vmatprep.subr.mxu0 0.0
        %893 = vmatpush1.xpose.msra.mxu0 0.0
        %894 = vmatprep.subr.mxu0 0.0
        %895 = vmatpush1.xpose.msra.mxu0 0.0
        %896 = vmatprep.mubr.f32.mxu0 0.0
        %897 = vmatmul.mubr.f32.gmra.mrb[0].mxu0 %v684
        %v898 = vpop.f32.mrb[0].mxu0
        %v899 = vadd.f32 0.0, %v898
        %v900 = vpop.f32.mrb[0].mxu0
        %901 = vdwg.mxu0
        %v902 = vsel %vm683, %v657, 0
        %v904 = vsel %vm683, %v666, 0
        %906 = vmatprep.subr.mxu0 0.0
        %907 = vmatpush1.xpose.msra.mxu0 %v904
        %908 = vmatprep.subr.mxu0 0.0
        %909 = vmatpush1.xpose.msra.mxu0 0.0
        %910 = vmatprep.subr.mxu0 0.0
        %911 = vmatpush1.xpose.msra.mxu0 0.0
        %912 = vmatprep.subr.mxu0 0.0
        %913 = vmatpush1.xpose.msra.mxu0 0.0
        %914 = vmatprep.subr.mxu0 0.0
        %915 = vmatpush1.xpose.msra.mxu0 0.0
        %916 = vmatprep.subr.mxu0 0.0
        %917 = vmatpush1.xpose.msra.mxu0 0.0
        %918 = vmatprep.subr.mxu0 0.0
        %919 = vmatpush1.xpose.msra.mxu0 0.0
        %920 = vmatprep.subr.mxu0 0.0
        %921 = vmatpush1.xpose.msra.mxu0 0.0
        %922 = vmatprep.subr.mxu0 0.0
        %923 = vmatpush1.xpose.msra.mxu0 0.0
        %924 = vmatprep.subr.mxu0 0.0
        %925 = vmatpush1.xpose.msra.mxu0 0.0
        %926 = vmatprep.subr.mxu0 0.0
        %927 = vmatpush1.xpose.msra.mxu0 0.0
        %928 = vmatprep.subr.mxu0 0.0
        %929 = vmatpush1.xpose.msra.mxu0 0.0
        %930 = vmatprep.subr.mxu0 0.0
        %931 = vmatpush1.xpose.msra.mxu0 0.0
        %932 = vmatprep.subr.mxu0 0.0
        %933 = vmatpush1.xpose.msra.mxu0 0.0
        %934 = vmatprep.subr.mxu0 0.0
        %935 = vmatpush1.xpose.msra.mxu0 0.0
        %936 = vmatprep.subr.mxu0 0.0
        %937 = vmatpush1.xpose.msra.mxu0 0.0
        %938 = vmatprep.subr.mxu0 0.0
        %939 = vmatpush1.xpose.msra.mxu0 0.0
        %940 = vmatprep.subr.mxu0 0.0
        %941 = vmatpush1.xpose.msra.mxu0 0.0
        %942 = vmatprep.subr.mxu0 0.0
        %943 = vmatpush1.xpose.msra.mxu0 0.0
        %944 = vmatprep.subr.mxu0 0.0
        %945 = vmatpush1.xpose.msra.mxu0 0.0
        %946 = vmatprep.subr.mxu0 0.0
        %947 = vmatpush1.xpose.msra.mxu0 0.0
        %948 = vmatprep.subr.mxu0 0.0
        %949 = vmatpush1.xpose.msra.mxu0 0.0
        %950 = vmatprep.subr.mxu0 0.0
        %951 = vmatpush1.xpose.msra.mxu0 0.0
        %952 = vmatprep.subr.mxu0 0.0
        %953 = vmatpush1.xpose.msra.mxu0 0.0
        %954 = vmatprep.subr.mxu0 0.0
        %955 = vmatpush1.xpose.msra.mxu0 0.0
        %956 = vmatprep.subr.mxu0 0.0
        %957 = vmatpush1.xpose.msra.mxu0 0.0
        %958 = vmatprep.subr.mxu0 0.0
        %959 = vmatpush1.xpose.msra.mxu0 0.0
        %960 = vmatprep.subr.mxu0 0.0
        %961 = vmatpush1.xpose.msra.mxu0 0.0
        %962 = vmatprep.subr.mxu0 0.0
        %963 = vmatpush1.xpose.msra.mxu0 0.0
        %964 = vmatprep.subr.mxu0 0.0
        %965 = vmatpush1.xpose.msra.mxu0 0.0
        %966 = vmatprep.subr.mxu0 0.0
        %967 = vmatpush1.xpose.msra.mxu0 0.0
        %968 = vmatprep.subr.mxu0 0.0
        %969 = vmatpush1.xpose.msra.mxu0 0.0
        %970 = vmatprep.mubr.f32.mxu0 0.0
        %971 = vmatmul.mubr.f32.gmra.mrb[0].mxu0 %v902
        %v972 = vpop.f32.mrb[0].mxu0
        %v973 = vadd.f32 0.0, %v972
        %v974 = vpop.f32.mrb[0].mxu0
        %975 = vdwg.mxu0
        %v976 = vsel %vm683, %v668, 0
        %978 = vmatprep.subr.mxu0 0.0
        %979 = vmatpush1.xpose.msra.mxu0 %v976
        %980 = vmatprep.subr.mxu0 0.0
        %981 = vmatpush1.xpose.msra.mxu0 0.0
        %982 = vmatprep.subr.mxu0 0.0
        %983 = vmatpush1.xpose.msra.mxu0 0.0
        %984 = vmatprep.subr.mxu0 0.0
        %985 = vmatpush1.xpose.msra.mxu0 0.0
        %986 = vmatprep.subr.mxu0 0.0
        %987 = vmatpush1.xpose.msra.mxu0 0.0
        %988 = vmatprep.subr.mxu0 0.0
        %989 = vmatpush1.xpose.msra.mxu0 0.0
        %990 = vmatprep.subr.mxu0 0.0
        %991 = vmatpush1.xpose.msra.mxu0 0.0
        %992 = vmatprep.subr.mxu0 0.0
        %993 = vmatpush1.xpose.msra.mxu0 0.0
        %994 = vmatprep.subr.mxu0 0.0
        %995 = vmatpush1.xpose.msra.mxu0 0.0
        %996 = vmatprep.subr.mxu0 0.0
        %997 = vmatpush1.xpose.msra.mxu0 0.0
        %998 = vmatprep.subr.mxu0 0.0
        %999 = vmatpush1.xpose.msra.mxu0 0.0
        %1000 = vmatprep.subr.mxu0 0.0
        %1001 = vmatpush1.xpose.msra.mxu0 0.0
        %1002 = vmatprep.subr.mxu0 0.0
        %1003 = vmatpush1.xpose.msra.mxu0 0.0
        %1004 = vmatprep.subr.mxu0 0.0
        %1005 = vmatpush1.xpose.msra.mxu0 0.0
        %1006 = vmatprep.subr.mxu0 0.0
        %1007 = vmatpush1.xpose.msra.mxu0 0.0
        %1008 = vmatprep.subr.mxu0 0.0
        %1009 = vmatpush1.xpose.msra.mxu0 0.0
        %1010 = vmatprep.subr.mxu0 0.0
        %1011 = vmatpush1.xpose.msra.mxu0 0.0
        %1012 = vmatprep.subr.mxu0 0.0
        %1013 = vmatpush1.xpose.msra.mxu0 0.0
        %1014 = vmatprep.subr.mxu0 0.0
        %1015 = vmatpush1.xpose.msra.mxu0 0.0
        %1016 = vmatprep.subr.mxu0 0.0
        %1017 = vmatpush1.xpose.msra.mxu0 0.0
        %1018 = vmatprep.subr.mxu0 0.0
        %1019 = vmatpush1.xpose.msra.mxu0 0.0
        %1020 = vmatprep.subr.mxu0 0.0
        %1021 = vmatpush1.xpose.msra.mxu0 0.0
        %1022 = vmatprep.subr.mxu0 0.0
        %1023 = vmatpush1.xpose.msra.mxu0 0.0
        %1024 = vmatprep.subr.mxu0 0.0
        %1025 = vmatpush1.xpose.msra.mxu0 0.0
        %1026 = vmatprep.subr.mxu0 0.0
        %1027 = vmatpush1.xpose.msra.mxu0 0.0
        %1028 = vmatprep.subr.mxu0 0.0
        %1029 = vmatpush1.xpose.msra.mxu0 0.0
        %1030 = vmatprep.subr.mxu0 0.0
        %1031 = vmatpush1.xpose.msra.mxu0 0.0
        %1032 = vmatprep.subr.mxu0 0.0
        %1033 = vmatpush1.xpose.msra.mxu0 0.0
        %1034 = vmatprep.subr.mxu0 0.0
        %1035 = vmatpush1.xpose.msra.mxu0 0.0
        %1036 = vmatprep.subr.mxu0 0.0
        %1037 = vmatpush1.xpose.msra.mxu0 0.0
        %1038 = vmatprep.subr.mxu0 0.0
        %1039 = vmatpush1.xpose.msra.mxu0 0.0
        %1040 = vmatprep.subr.mxu0 0.0
        %1041 = vmatpush1.xpose.msra.mxu0 0.0
        %1042 = vmatprep.mubr.f32.mxu0 0.0
        %1043 = vmatmul.mubr.f32.gmra.mrb[0].mxu0 %v902
        %v1044 = vpop.f32.mrb[0].mxu0
        %v1045 = vadd.f32 0.0, %v1044
        %v1046 = vpop.f32.mrb[0].mxu0
        %1047 = vdwg.mxu0
        %v1048 = vsel %vm683, %v670, 0
        %1050 = vmatprep.subr.mxu0 0.0
        %1051 = vmatpush1.xpose.msra.mxu0 %v1048
        %1052 = vmatprep.subr.mxu0 0.0
        %1053 = vmatpush1.xpose.msra.mxu0 0.0
        %1054 = vmatprep.subr.mxu0 0.0
        %1055 = vmatpush1.xpose.msra.mxu0 0.0
        %1056 = vmatprep.subr.mxu0 0.0
        %1057 = vmatpush1.xpose.msra.mxu0 0.0
        %1058 = vmatprep.subr.mxu0 0.0
        %1059 = vmatpush1.xpose.msra.mxu0 0.0
        %1060 = vmatprep.subr.mxu0 0.0
        %1061 = vmatpush1.xpose.msra.mxu0 0.0
        %1062 = vmatprep.subr.mxu0 0.0
        %1063 = vmatpush1.xpose.msra.mxu0 0.0
        %1064 = vmatprep.subr.mxu0 0.0
        %1065 = vmatpush1.xpose.msra.mxu0 0.0
        %1066 = vmatprep.subr.mxu0 0.0
        %1067 = vmatpush1.xpose.msra.mxu0 0.0
        %1068 = vmatprep.subr.mxu0 0.0
        %1069 = vmatpush1.xpose.msra.mxu0 0.0
        %1070 = vmatprep.subr.mxu0 0.0
        %1071 = vmatpush1.xpose.msra.mxu0 0.0
        %1072 = vmatprep.subr.mxu0 0.0
        %1073 = vmatpush1.xpose.msra.mxu0 0.0
        %1074 = vmatprep.subr.mxu0 0.0
        %1075 = vmatpush1.xpose.msra.mxu0 0.0
        %1076 = vmatprep.subr.mxu0 0.0
        %1077 = vmatpush1.xpose.msra.mxu0 0.0
        %1078 = vmatprep.subr.mxu0 0.0
        %1079 = vmatpush1.xpose.msra.mxu0 0.0
        %1080 = vmatprep.subr.mxu0 0.0
        %1081 = vmatpush1.xpose.msra.mxu0 0.0
        %1082 = vmatprep.subr.mxu0 0.0
        %1083 = vmatpush1.xpose.msra.mxu0 0.0
        %1084 = vmatprep.subr.mxu0 0.0
        %1085 = vmatpush1.xpose.msra.mxu0 0.0
        %1086 = vmatprep.subr.mxu0 0.0
        %1087 = vmatpush1.xpose.msra.mxu0 0.0
        %1088 = vmatprep.subr.mxu0 0.0
        %1089 = vmatpush1.xpose.msra.mxu0 0.0
        %1090 = vmatprep.subr.mxu0 0.0
        %1091 = vmatpush1.xpose.msra.mxu0 0.0
        %1092 = vmatprep.subr.mxu0 0.0
        %1093 = vmatpush1.xpose.msra.mxu0 0.0
        %1094 = vmatprep.subr.mxu0 0.0
        %1095 = vmatpush1.xpose.msra.mxu0 0.0
        %1096 = vmatprep.subr.mxu0 0.0
        %1097 = vmatpush1.xpose.msra.mxu0 0.0
        %1098 = vmatprep.subr.mxu0 0.0
        %1099 = vmatpush1.xpose.msra.mxu0 0.0
        %1100 = vmatprep.subr.mxu0 0.0
        %1101 = vmatpush1.xpose.msra.mxu0 0.0
        %1102 = vmatprep.subr.mxu0 0.0
        %1103 = vmatpush1.xpose.msra.mxu0 0.0
        %1104 = vmatprep.subr.mxu0 0.0
        %1105 = vmatpush1.xpose.msra.mxu0 0.0
        %1106 = vmatprep.subr.mxu0 0.0
        %1107 = vmatpush1.xpose.msra.mxu0 0.0
        %1108 = vmatprep.subr.mxu0 0.0
        %1109 = vmatpush1.xpose.msra.mxu0 0.0
        %1110 = vmatprep.subr.mxu0 0.0
        %1111 = vmatpush1.xpose.msra.mxu0 0.0
        %1112 = vmatprep.subr.mxu0 0.0
        %1113 = vmatpush1.xpose.msra.mxu0 0.0
        %1114 = vmatprep.mubr.f32.mxu0 0.0
        %1115 = vmatmul.mubr.f32.gmra.mrb[0].mxu0 %v902
        %v1116 = vpop.f32.mrb[0].mxu0
        %v1117 = vadd.f32 0.0, %v1116
        %v1118 = vpop.f32.mrb[0].mxu0
        %1119 = vdwg.mxu0
        %v1120 = vsel %vm683, %v659, 0
        %v1122 = vsel %vm683, %v672, 0
        %1124 = vmatprep.subr.mxu0 0.0
        %1125 = vmatpush1.xpose.msra.mxu0 %v1122
        %1126 = vmatprep.subr.mxu0 0.0
        %1127 = vmatpush1.xpose.msra.mxu0 0.0
        %1128 = vmatprep.subr.mxu0 0.0
        %1129 = vmatpush1.xpose.msra.mxu0 0.0
        %1130 = vmatprep.subr.mxu0 0.0
        %1131 = vmatpush1.xpose.msra.mxu0 0.0
        %1132 = vmatprep.subr.mxu0 0.0
        %1133 = vmatpush1.xpose.msra.mxu0 0.0
        %1134 = vmatprep.subr.mxu0 0.0
        %1135 = vmatpush1.xpose.msra.mxu0 0.0
        %1136 = vmatprep.subr.mxu0 0.0
        %1137 = vmatpush1.xpose.msra.mxu0 0.0
        %1138 = vmatprep.subr.mxu0 0.0
        %1139 = vmatpush1.xpose.msra.mxu0 0.0
        %1140 = vmatprep.subr.mxu0 0.0
        %1141 = vmatpush1.xpose.msra.mxu0 0.0
        %1142 = vmatprep.subr.mxu0 0.0
        %1143 = vmatpush1.xpose.msra.mxu0 0.0
        %1144 = vmatprep.subr.mxu0 0.0
        %1145 = vmatpush1.xpose.msra.mxu0 0.0
        %1146 = vmatprep.subr.mxu0 0.0
        %1147 = vmatpush1.xpose.msra.mxu0 0.0
        %1148 = vmatprep.subr.mxu0 0.0
        %1149 = vmatpush1.xpose.msra.mxu0 0.0
        %1150 = vmatprep.subr.mxu0 0.0
        %1151 = vmatpush1.xpose.msra.mxu0 0.0
        %1152 = vmatprep.subr.mxu0 0.0
        %1153 = vmatpush1.xpose.msra.mxu0 0.0
        %1154 = vmatprep.subr.mxu0 0.0
        %1155 = vmatpush1.xpose.msra.mxu0 0.0
        %1156 = vmatprep.subr.mxu0 0.0
        %1157 = vmatpush1.xpose.msra.mxu0 0.0
        %1158 = vmatprep.subr.mxu0 0.0
        %1159 = vmatpush1.xpose.msra.mxu0 0.0
        %1160 = vmatprep.subr.mxu0 0.0
        %1161 = vmatpush1.xpose.msra.mxu0 0.0
        %1162 = vmatprep.subr.mxu0 0.0
        %1163 = vmatpush1.xpose.msra.mxu0 0.0
        %1164 = vmatprep.subr.mxu0 0.0
        %1165 = vmatpush1.xpose.msra.mxu0 0.0
        %1166 = vmatprep.subr.mxu0 0.0
        %1167 = vmatpush1.xpose.msra.mxu0 0.0
        %1168 = vmatprep.subr.mxu0 0.0
        %1169 = vmatpush1.xpose.msra.mxu0 0.0
        %1170 = vmatprep.subr.mxu0 0.0
        %1171 = vmatpush1.xpose.msra.mxu0 0.0
        %1172 = vmatprep.subr.mxu0 0.0
        %1173 = vmatpush1.xpose.msra.mxu0 0.0
        %1174 = vmatprep.subr.mxu0 0.0
        %1175 = vmatpush1.xpose.msra.mxu0 0.0
        %1176 = vmatprep.subr.mxu0 0.0
        %1177 = vmatpush1.xpose.msra.mxu0 0.0
        %1178 = vmatprep.subr.mxu0 0.0
        %1179 = vmatpush1.xpose.msra.mxu0 0.0
        %1180 = vmatprep.subr.mxu0 0.0
        %1181 = vmatpush1.xpose.msra.mxu0 0.0
        %1182 = vmatprep.subr.mxu0 0.0
        %1183 = vmatpush1.xpose.msra.mxu0 0.0
        %1184 = vmatprep.subr.mxu0 0.0
        %1185 = vmatpush1.xpose.msra.mxu0 0.0
        %1186 = vmatprep.subr.mxu0 0.0
        %1187 = vmatpush1.xpose.msra.mxu0 0.0
        %1188 = vmatprep.mubr.f32.mxu0 0.0
        %1189 = vmatmul.mubr.f32.gmra.mrb[0].mxu0 %v1120
        %v1190 = vpop.f32.mrb[0].mxu0
        %v1191 = vadd.f32 0.0, %v1190
        %v1192 = vpop.f32.mrb[0].mxu0
        %1193 = vdwg.mxu0
        %v1194 = vsel %vm683, %v674, 0
        %1196 = vmatprep.subr.mxu0 0.0
        %1197 = vmatpush1.xpose.msra.mxu0 %v1194
        %1198 = vmatprep.subr.mxu0 0.0
        %1199 = vmatpush1.xpose.msra.mxu0 0.0
        %1200 = vmatprep.subr.mxu0 0.0
        %1201 = vmatpush1.xpose.msra.mxu0 0.0
        %1202 = vmatprep.subr.mxu0 0.0
        %1203 = vmatpush1.xpose.msra.mxu0 0.0
        %1204 = vmatprep.subr.mxu0 0.0
        %1205 = vmatpush1.xpose.msra.mxu0 0.0
        %1206 = vmatprep.subr.mxu0 0.0
        %1207 = vmatpush1.xpose.msra.mxu0 0.0
        %1208 = vmatprep.subr.mxu0 0.0
        %1209 = vmatpush1.xpose.msra.mxu0 0.0
        %1210 = vmatprep.subr.mxu0 0.0
        %1211 = vmatpush1.xpose.msra.mxu0 0.0
        %1212 = vmatprep.subr.mxu0 0.0
        %1213 = vmatpush1.xpose.msra.mxu0 0.0
        %1214 = vmatprep.subr.mxu0 0.0
        %1215 = vmatpush1.xpose.msra.mxu0 0.0
        %1216 = vmatprep.subr.mxu0 0.0
        %1217 = vmatpush1.xpose.msra.mxu0 0.0
        %1218 = vmatprep.subr.mxu0 0.0
        %1219 = vmatpush1.xpose.msra.mxu0 0.0
        %1220 = vmatprep.subr.mxu0 0.0
        %1221 = vmatpush1.xpose.msra.mxu0 0.0
        %1222 = vmatprep.subr.mxu0 0.0
        %1223 = vmatpush1.xpose.msra.mxu0 0.0
        %1224 = vmatprep.subr.mxu0 0.0
        %1225 = vmatpush1.xpose.msra.mxu0 0.0
        %1226 = vmatprep.subr.mxu0 0.0
        %1227 = vmatpush1.xpose.msra.mxu0 0.0
        %1228 = vmatprep.subr.mxu0 0.0
        %1229 = vmatpush1.xpose.msra.mxu0 0.0
        %1230 = vmatprep.subr.mxu0 0.0
        %1231 = vmatpush1.xpose.msra.mxu0 0.0
        %1232 = vmatprep.subr.mxu0 0.0
        %1233 = vmatpush1.xpose.msra.mxu0 0.0
        %1234 = vmatprep.subr.mxu0 0.0
        %1235 = vmatpush1.xpose.msra.mxu0 0.0
        %1236 = vmatprep.subr.mxu0 0.0
        %1237 = vmatpush1.xpose.msra.mxu0 0.0
        %1238 = vmatprep.subr.mxu0 0.0
        %1239 = vmatpush1.xpose.msra.mxu0 0.0
        %1240 = vmatprep.subr.mxu0 0.0
        %1241 = vmatpush1.xpose.msra.mxu0 0.0
        %1242 = vmatprep.subr.mxu0 0.0
        %1243 = vmatpush1.xpose.msra.mxu0 0.0
        %1244 = vmatprep.subr.mxu0 0.0
        %1245 = vmatpush1.xpose.msra.mxu0 0.0
        %1246 = vmatprep.subr.mxu0 0.0
        %1247 = vmatpush1.xpose.msra.mxu0 0.0
        %1248 = vmatprep.subr.mxu0 0.0
        %1249 = vmatpush1.xpose.msra.mxu0 0.0
        %1250 = vmatprep.subr.mxu0 0.0
        %1251 = vmatpush1.xpose.msra.mxu0 0.0
        %1252 = vmatprep.subr.mxu0 0.0
        %1253 = vmatpush1.xpose.msra.mxu0 0.0
        %1254 = vmatprep.subr.mxu0 0.0
        %1255 = vmatpush1.xpose.msra.mxu0 0.0
        %1256 = vmatprep.subr.mxu0 0.0
        %1257 = vmatpush1.xpose.msra.mxu0 0.0
        %1258 = vmatprep.subr.mxu0 0.0
        %1259 = vmatpush1.xpose.msra.mxu0 0.0
        %1260 = vmatprep.mubr.f32.mxu0 0.0
        %1261 = vmatmul.mubr.f32.gmra.mrb[0].mxu0 %v1120
        %v1262 = vpop.f32.mrb[0].mxu0
        %v1263 = vadd.f32 0.0, %v1262
        %v1264 = vpop.f32.mrb[0].mxu0
        %1265 = vdwg.mxu0
        %v1266 = vsel %vm683, %v676, 0
        %1268 = vmatprep.subr.mxu0 0.0
        %1269 = vmatpush1.xpose.msra.mxu0 %v1266
        %1270 = vmatprep.subr.mxu0 0.0
        %1271 = vmatpush1.xpose.msra.mxu0 0.0
        %1272 = vmatprep.subr.mxu0 0.0
        %1273 = vmatpush1.xpose.msra.mxu0 0.0
        %1274 = vmatprep.subr.mxu0 0.0
        %1275 = vmatpush1.xpose.msra.mxu0 0.0
        %1276 = vmatprep.subr.mxu0 0.0
        %1277 = vmatpush1.xpose.msra.mxu0 0.0
        %1278 = vmatprep.subr.mxu0 0.0
        %1279 = vmatpush1.xpose.msra.mxu0 0.0
        %1280 = vmatprep.subr.mxu0 0.0
        %1281 = vmatpush1.xpose.msra.mxu0 0.0
        %1282 = vmatprep.subr.mxu0 0.0
        %1283 = vmatpush1.xpose.msra.mxu0 0.0
        %1284 = vmatprep.subr.mxu0 0.0
        %1285 = vmatpush1.xpose.msra.mxu0 0.0
        %1286 = vmatprep.subr.mxu0 0.0
        %1287 = vmatpush1.xpose.msra.mxu0 0.0
        %1288 = vmatprep.subr.mxu0 0.0
        %1289 = vmatpush1.xpose.msra.mxu0 0.0
        %1290 = vmatprep.subr.mxu0 0.0
        %1291 = vmatpush1.xpose.msra.mxu0 0.0
        %1292 = vmatprep.subr.mxu0 0.0
        %1293 = vmatpush1.xpose.msra.mxu0 0.0
        %1294 = vmatprep.subr.mxu0 0.0
        %1295 = vmatpush1.xpose.msra.mxu0 0.0
        %1296 = vmatprep.subr.mxu0 0.0
        %1297 = vmatpush1.xpose.msra.mxu0 0.0
        %1298 = vmatprep.subr.mxu0 0.0
        %1299 = vmatpush1.xpose.msra.mxu0 0.0
        %1300 = vmatprep.subr.mxu0 0.0
        %1301 = vmatpush1.xpose.msra.mxu0 0.0
        %1302 = vmatprep.subr.mxu0 0.0
        %1303 = vmatpush1.xpose.msra.mxu0 0.0
        %1304 = vmatprep.subr.mxu0 0.0
        %1305 = vmatpush1.xpose.msra.mxu0 0.0
        %1306 = vmatprep.subr.mxu0 0.0
        %1307 = vmatpush1.xpose.msra.mxu0 0.0
        %1308 = vmatprep.subr.mxu0 0.0
        %1309 = vmatpush1.xpose.msra.mxu0 0.0
        %1310 = vmatprep.subr.mxu0 0.0
        %1311 = vmatpush1.xpose.msra.mxu0 0.0
        %1312 = vmatprep.subr.mxu0 0.0
        %1313 = vmatpush1.xpose.msra.mxu0 0.0
        %1314 = vmatprep.subr.mxu0 0.0
        %1315 = vmatpush1.xpose.msra.mxu0 0.0
        %1316 = vmatprep.subr.mxu0 0.0
        %1317 = vmatpush1.xpose.msra.mxu0 0.0
        %1318 = vmatprep.subr.mxu0 0.0
        %1319 = vmatpush1.xpose.msra.mxu0 0.0
        %1320 = vmatprep.subr.mxu0 0.0
        %1321 = vmatpush1.xpose.msra.mxu0 0.0
        %1322 = vmatprep.subr.mxu0 0.0
        %1323 = vmatpush1.xpose.msra.mxu0 0.0
        %1324 = vmatprep.subr.mxu0 0.0
        %1325 = vmatpush1.xpose.msra.mxu0 0.0
        %1326 = vmatprep.subr.mxu0 0.0
        %1327 = vmatpush1.xpose.msra.mxu0 0.0
        %1328 = vmatprep.subr.mxu0 0.0
        %1329 = vmatpush1.xpose.msra.mxu0 0.0
        %1330 = vmatprep.subr.mxu0 0.0
        %1331 = vmatpush1.xpose.msra.mxu0 0.0
        %1332 = vmatprep.mubr.f32.mxu0 0.0
        %1333 = vmatmul.mubr.f32.gmra.mrb[0].mxu0 %v1120
        %v1334 = vpop.f32.mrb[0].mxu0
        %v1335 = vadd.f32 0.0, %v1334
        %v1336 = vpop.f32.mrb[0].mxu0
        %1337 = vdwg.mxu0
        %v1338 = vsel %vm683, %v661, 0
        %v1340 = vsel %vm683, %v678, 0
        %1342 = vmatprep.subr.mxu0 0.0
        %1343 = vmatpush1.xpose.msra.mxu0 %v1340
        %1344 = vmatprep.subr.mxu0 0.0
        %1345 = vmatpush1.xpose.msra.mxu0 0.0
        %1346 = vmatprep.subr.mxu0 0.0
        %1347 = vmatpush1.xpose.msra.mxu0 0.0
        %1348 = vmatprep.subr.mxu0 0.0
        %1349 = vmatpush1.xpose.msra.mxu0 0.0
        %1350 = vmatprep.subr.mxu0 0.0
        %1351 = vmatpush1.xpose.msra.mxu0 0.0
        %1352 = vmatprep.subr.mxu0 0.0
        %1353 = vmatpush1.xpose.msra.mxu0 0.0
        %1354 = vmatprep.subr.mxu0 0.0
        %1355 = vmatpush1.xpose.msra.mxu0 0.0
        %1356 = vmatprep.subr.mxu0 0.0
        %1357 = vmatpush1.xpose.msra.mxu0 0.0
        %1358 = vmatprep.subr.mxu0 0.0
        %1359 = vmatpush1.xpose.msra.mxu0 0.0
        %1360 = vmatprep.subr.mxu0 0.0
        %1361 = vmatpush1.xpose.msra.mxu0 0.0
        %1362 = vmatprep.subr.mxu0 0.0
        %1363 = vmatpush1.xpose.msra.mxu0 0.0
        %1364 = vmatprep.subr.mxu0 0.0
        %1365 = vmatpush1.xpose.msra.mxu0 0.0
        %1366 = vmatprep.subr.mxu0 0.0
        %1367 = vmatpush1.xpose.msra.mxu0 0.0
        %1368 = vmatprep.subr.mxu0 0.0
        %1369 = vmatpush1.xpose.msra.mxu0 0.0
        %1370 = vmatprep.subr.mxu0 0.0
        %1371 = vmatpush1.xpose.msra.mxu0 0.0
        %1372 = vmatprep.subr.mxu0 0.0
        %1373 = vmatpush1.xpose.msra.mxu0 0.0
        %1374 = vmatprep.subr.mxu0 0.0
        %1375 = vmatpush1.xpose.msra.mxu0 0.0
        %1376 = vmatprep.subr.mxu0 0.0
        %1377 = vmatpush1.xpose.msra.mxu0 0.0
        %1378 = vmatprep.subr.mxu0 0.0
        %1379 = vmatpush1.xpose.msra.mxu0 0.0
        %1380 = vmatprep.subr.mxu0 0.0
        %1381 = vmatpush1.xpose.msra.mxu0 0.0
        %1382 = vmatprep.subr.mxu0 0.0
        %1383 = vmatpush1.xpose.msra.mxu0 0.0
        %1384 = vmatprep.subr.mxu0 0.0
        %1385 = vmatpush1.xpose.msra.mxu0 0.0
        %1386 = vmatprep.subr.mxu0 0.0
        %1387 = vmatpush1.xpose.msra.mxu0 0.0
        %1388 = vmatprep.subr.mxu0 0.0
        %1389 = vmatpush1.xpose.msra.mxu0 0.0
        %1390 = vmatprep.subr.mxu0 0.0
        %1391 = vmatpush1.xpose.msra.mxu0 0.0
        %1392 = vmatprep.subr.mxu0 0.0
        %1393 = vmatpush1.xpose.msra.mxu0 0.0
        %1394 = vmatprep.subr.mxu0 0.0
        %1395 = vmatpush1.xpose.msra.mxu0 0.0
        %1396 = vmatprep.subr.mxu0 0.0
        %1397 = vmatpush1.xpose.msra.mxu0 0.0
        %1398 = vmatprep.subr.mxu0 0.0
        %1399 = vmatpush1.xpose.msra.mxu0 0.0
        %1400 = vmatprep.subr.mxu0 0.0
        %1401 = vmatpush1.xpose.msra.mxu0 0.0
        %1402 = vmatprep.subr.mxu0 0.0
        %1403 = vmatpush1.xpose.msra.mxu0 0.0
        %1404 = vmatprep.subr.mxu0 0.0
        %1405 = vmatpush1.xpose.msra.mxu0 0.0
        %1406 = vmatprep.mubr.f32.mxu0 0.0
        %1407 = vmatmul.mubr.f32.gmra.mrb[0].mxu0 %v1338
        %v1408 = vpop.f32.mrb[0].mxu0
        %v1409 = vadd.f32 0.0, %v1408
        %v1410 = vpop.f32.mrb[0].mxu0
        %1411 = vdwg.mxu0
        %v1412 = vsel %vm683, %v680, 0
        %1414 = vmatprep.subr.mxu0 0.0
        %1415 = vmatpush1.xpose.msra.mxu0 %v1412
        %1416 = vmatprep.subr.mxu0 0.0
        %1417 = vmatpush1.xpose.msra.mxu0 0.0
        %1418 = vmatprep.subr.mxu0 0.0
        %1419 = vmatpush1.xpose.msra.mxu0 0.0
        %1420 = vmatprep.subr.mxu0 0.0
        %1421 = vmatpush1.xpose.msra.mxu0 0.0
        %1422 = vmatprep.subr.mxu0 0.0
        %1423 = vmatpush1.xpose.msra.mxu0 0.0
        %1424 = vmatprep.subr.mxu0 0.0
        %1425 = vmatpush1.xpose.msra.mxu0 0.0
        %1426 = vmatprep.subr.mxu0 0.0
        %1427 = vmatpush1.xpose.msra.mxu0 0.0
        %1428 = vmatprep.subr.mxu0 0.0
        %1429 = vmatpush1.xpose.msra.mxu0 0.0
        %1430 = vmatprep.subr.mxu0 0.0
        %1431 = vmatpush1.xpose.msra.mxu0 0.0
        %1432 = vmatprep.subr.mxu0 0.0
        %1433 = vmatpush1.xpose.msra.mxu0 0.0
        %1434 = vmatprep.subr.mxu0 0.0
        %1435 = vmatpush1.xpose.msra.mxu0 0.0
        %1436 = vmatprep.subr.mxu0 0.0
        %1437 = vmatpush1.xpose.msra.mxu0 0.0
        %1438 = vmatprep.subr.mxu0 0.0
        %1439 = vmatpush1.xpose.msra.mxu0 0.0
        %1440 = vmatprep.subr.mxu0 0.0
        %1441 = vmatpush1.xpose.msra.mxu0 0.0
        %1442 = vmatprep.subr.mxu0 0.0
        %1443 = vmatpush1.xpose.msra.mxu0 0.0
        %1444 = vmatprep.subr.mxu0 0.0
        %1445 = vmatpush1.xpose.msra.mxu0 0.0
        %1446 = vmatprep.subr.mxu0 0.0
        %1447 = vmatpush1.xpose.msra.mxu0 0.0
        %1448 = vmatprep.subr.mxu0 0.0
        %1449 = vmatpush1.xpose.msra.mxu0 0.0
        %1450 = vmatprep.subr.mxu0 0.0
        %1451 = vmatpush1.xpose.msra.mxu0 0.0
        %1452 = vmatprep.subr.mxu0 0.0
        %1453 = vmatpush1.xpose.msra.mxu0 0.0
        %1454 = vmatprep.subr.mxu0 0.0
        %1455 = vmatpush1.xpose.msra.mxu0 0.0
        %1456 = vmatprep.subr.mxu0 0.0
        %1457 = vmatpush1.xpose.msra.mxu0 0.0
        %1458 = vmatprep.subr.mxu0 0.0
        %1459 = vmatpush1.xpose.msra.mxu0 0.0
        %1460 = vmatprep.subr.mxu0 0.0
        %1461 = vmatpush1.xpose.msra.mxu0 0.0
        %1462 = vmatprep.subr.mxu0 0.0
        %1463 = vmatpush1.xpose.msra.mxu0 0.0
        %1464 = vmatprep.subr.mxu0 0.0
        %1465 = vmatpush1.xpose.msra.mxu0 0.0
        %1466 = vmatprep.subr.mxu0 0.0
        %1467 = vmatpush1.xpose.msra.mxu0 0.0
        %1468 = vmatprep.subr.mxu0 0.0
        %1469 = vmatpush1.xpose.msra.mxu0 0.0
        %1470 = vmatprep.subr.mxu0 0.0
        %1471 = vmatpush1.xpose.msra.mxu0 0.0
        %1472 = vmatprep.subr.mxu0 0.0
        %1473 = vmatpush1.xpose.msra.mxu0 0.0
        %1474 = vmatprep.subr.mxu0 0.0
        %1475 = vmatpush1.xpose.msra.mxu0 0.0
        %1476 = vmatprep.subr.mxu0 0.0
        %1477 = vmatpush1.xpose.msra.mxu0 0.0
        %1478 = vmatprep.mubr.f32.mxu0 0.0
        %1479 = vmatmul.mubr.f32.gmra.mrb[0].mxu0 %v1338
        %v1480 = vpop.f32.mrb[0].mxu0
        %v1481 = vadd.f32 0.0, %v1480
        %v1482 = vpop.f32.mrb[0].mxu0
        %1483 = vdwg.mxu0
        %v1484 = vsel %vm683, %v682, 0
        %1486 = vmatprep.subr.mxu0 0.0
        %1487 = vmatpush1.xpose.msra.mxu0 %v1484
        %1488 = vmatprep.subr.mxu0 0.0
        %1489 = vmatpush1.xpose.msra.mxu0 0.0
        %1490 = vmatprep.subr.mxu0 0.0
        %1491 = vmatpush1.xpose.msra.mxu0 0.0
        %1492 = vmatprep.subr.mxu0 0.0
        %1493 = vmatpush1.xpose.msra.mxu0 0.0
        %1494 = vmatprep.subr.mxu0 0.0
        %1495 = vmatpush1.xpose.msra.mxu0 0.0
        %1496 = vmatprep.subr.mxu0 0.0
        %1497 = vmatpush1.xpose.msra.mxu0 0.0
        %1498 = vmatprep.subr.mxu0 0.0
        %1499 = vmatpush1.xpose.msra.mxu0 0.0
        %1500 = vmatprep.subr.mxu0 0.0
        %1501 = vmatpush1.xpose.msra.mxu0 0.0
        %1502 = vmatprep.subr.mxu0 0.0
        %1503 = vmatpush1.xpose.msra.mxu0 0.0
        %1504 = vmatprep.subr.mxu0 0.0
        %1505 = vmatpush1.xpose.msra.mxu0 0.0
        %1506 = vmatprep.subr.mxu0 0.0
        %1507 = vmatpush1.xpose.msra.mxu0 0.0
        %1508 = vmatprep.subr.mxu0 0.0
        %1509 = vmatpush1.xpose.msra.mxu0 0.0
        %1510 = vmatprep.subr.mxu0 0.0
        %1511 = vmatpush1.xpose.msra.mxu0 0.0
        %1512 = vmatprep.subr.mxu0 0.0
        %1513 = vmatpush1.xpose.msra.mxu0 0.0
        %1514 = vmatprep.subr.mxu0 0.0
        %1515 = vmatpush1.xpose.msra.mxu0 0.0
        %1516 = vmatprep.subr.mxu0 0.0
        %1517 = vmatpush1.xpose.msra.mxu0 0.0
        %1518 = vmatprep.subr.mxu0 0.0
        %1519 = vmatpush1.xpose.msra.mxu0 0.0
        %1520 = vmatprep.subr.mxu0 0.0
        %1521 = vmatpush1.xpose.msra.mxu0 0.0
        %1522 = vmatprep.subr.mxu0 0.0
        %1523 = vmatpush1.xpose.msra.mxu0 0.0
        %1524 = vmatprep.subr.mxu0 0.0
        %1525 = vmatpush1.xpose.msra.mxu0 0.0
        %1526 = vmatprep.subr.mxu0 0.0
        %1527 = vmatpush1.xpose.msra.mxu0 0.0
        %1528 = vmatprep.subr.mxu0 0.0
        %1529 = vmatpush1.xpose.msra.mxu0 0.0
        %1530 = vmatprep.subr.mxu0 0.0
        %1531 = vmatpush1.xpose.msra.mxu0 0.0
        %1532 = vmatprep.subr.mxu0 0.0
        %1533 = vmatpush1.xpose.msra.mxu0 0.0
        %1534 = vmatprep.subr.mxu0 0.0
        %1535 = vmatpush1.xpose.msra.mxu0 0.0
        %1536 = vmatprep.subr.mxu0 0.0
        %1537 = vmatpush1.xpose.msra.mxu0 0.0
        %1538 = vmatprep.subr.mxu0 0.0
        %1539 = vmatpush1.xpose.msra.mxu0 0.0
        %1540 = vmatprep.subr.mxu0 0.0
        %1541 = vmatpush1.xpose.msra.mxu0 0.0
        %1542 = vmatprep.subr.mxu0 0.0
        %1543 = vmatpush1.xpose.msra.mxu0 0.0
        %1544 = vmatprep.subr.mxu0 0.0
        %1545 = vmatpush1.xpose.msra.mxu0 0.0
        %1546 = vmatprep.subr.mxu0 0.0
        %1547 = vmatpush1.xpose.msra.mxu0 0.0
        %1548 = vmatprep.subr.mxu0 0.0
        %1549 = vmatpush1.xpose.msra.mxu0 0.0
        %1550 = vmatprep.mubr.f32.mxu0 0.0
        %1551 = vmatmul.mubr.f32.gmra.mrb[0].mxu0 %v1338
        %v1552 = vpop.f32.mrb[0].mxu0
        %v1553 = vadd.f32 0.0, %v1552
        %v1554 = vpop.f32.mrb[0].mxu0
        %1555 = vdwg.mxu0
        %v1558 = vunpack.c.l.s4 1966171168
        %v1559 = vunpack.c.0.s8 %v1558
        %v1560 = vlaneseq
        %v1561 = vshrl.u32 %v1560, 7
        %v1562 = vsub.s32 %v1559, %v1561
        %v1563 = vrot.slane %v489, %v1562
        %v1564 = vcombine.high %v1563, %v1563
        %v1566 = vunpack.c.l.s4 1966171168
        %v1567 = vunpack.c.0.s8 %v1566
        %v1568 = vlaneseq
        %v1569 = vshrl.u32 %v1568, 7
        %v1570 = vsub.s32 %v1567, %v1569
        %v1571 = vrot.slane %v1563, %v1570
        %v1573 = vunpack.c.l.s4 1966171168
        %v1574 = vunpack.c.0.s8 %v1573
        %v1575 = vlaneseq
        %v1576 = vshrl.u32 %v1575, 7
        %v1577 = vsub.s32 %v1574, %v1576
        %v1578 = vrot.slane %v1564, %v1577
        %v1579 = vcombine.high %v1571, %v1571
        %vm1583 = vcmp.gt.f32.partialorder %v1571, 0.0
        %vm1584 = vcmp.gt.f32.partialorder %v1578, 0.0
        %vm1585 = vcmp.gt.f32.partialorder %v1579, 0.0
        %v1586 = vsel %vm1583, 1, 0
        %v1587 = vsel %vm1584, 1, 0
        %v1588 = vsel %vm1585, 1, 0
        %v1589 = vlaneseq
        %v1590 = vshrl.u32 %v1589, 7
        %v1591 = vsub.s32 0, %v1590
        %v1592 = vrot.slane %v1586, %v1591
        %v1593 = vlaneseq
        %v1594 = vshrl.u32 %v1593, 7
        %v1595 = vsub.s32 0, %v1594
        %v1596 = vrot.slane %v1587, %v1595
        %v1597 = vlaneseq
        %v1598 = vshrl.u32 %v1597, 7
        %v1599 = vsub.s32 0, %v1598
        %v1600 = vrot.slane %v1588, %v1599
        %vm1601 = vcmp.eq.s32.totalorder %v1592, 1
        %vm1602 = vcmp.eq.s32.totalorder %v1596, 1
        %vm1603 = vcmp.eq.s32.totalorder %v1600, 1
        %v1604 = vsel %vm1601, %v755, -3.4028235e+38
        %v1605 = vsel %vm1602, %v827, -3.4028235e+38
        %v1606 = vsel %vm1603, %v899, -3.4028235e+38
        %v1607 = vsel %vm1601, %v973, -3.4028235e+38
        %v1608 = vsel %vm1602, %v1045, -3.4028235e+38
        %v1609 = vsel %vm1603, %v1117, -3.4028235e+38
        %v1610 = vsel %vm1601, %v1191, -3.4028235e+38
        %v1611 = vsel %vm1602, %v1263, -3.4028235e+38
        %v1612 = vsel %vm1603, %v1335, -3.4028235e+38
        %v1613 = vsel %vm1601, %v1409, -3.4028235e+38
        %v1614 = vsel %vm1602, %v1481, -3.4028235e+38
        %v1615 = vsel %vm1603, %v1553, -3.4028235e+38
        %v1616 = vsel %vm683, %v1604, -inf
        %1617 = vmax.xlane.f32.xlu0 %v1616
        %v1618 = vpop.xlane.xlu0 %1617
        %v1619 = vsel %vm683, %v1605, -inf
        %1620 = vmax.xlane.f32.xlu0 %v1619
        %v1621 = vpop.xlane.xlu0 %1620
        %v1622 = vsel %vm683, %v1606, -inf
        %1623 = vmax.xlane.f32.xlu0 %v1622
        %v1624 = vpop.xlane.xlu0 %1623
        %v1625 = vsel %vm683, %v1607, -inf
        %1626 = vmax.xlane.f32.xlu0 %v1625
        %v1627 = vpop.xlane.xlu0 %1626
        %v1628 = vsel %vm683, %v1608, -inf
        %1629 = vmax.xlane.f32.xlu0 %v1628
        %v1630 = vpop.xlane.xlu0 %1629
        %v1631 = vsel %vm683, %v1609, -inf
        %1632 = vmax.xlane.f32.xlu0 %v1631
        %v1633 = vpop.xlane.xlu0 %1632
        %v1634 = vsel %vm683, %v1610, -inf
        %1635 = vmax.xlane.f32.xlu0 %v1634
        %v1636 = vpop.xlane.xlu0 %1635
        %v1637 = vsel %vm683, %v1611, -inf
        %1638 = vmax.xlane.f32.xlu0 %v1637
        %v1639 = vpop.xlane.xlu0 %1638
        %v1640 = vsel %vm683, %v1612, -inf
        %1641 = vmax.xlane.f32.xlu0 %v1640
        %v1642 = vpop.xlane.xlu0 %1641
        %v1643 = vsel %vm683, %v1613, -inf
        %1644 = vmax.xlane.f32.xlu0 %v1643
        %v1645 = vpop.xlane.xlu0 %1644
        %v1646 = vsel %vm683, %v1614, -inf
        %1647 = vmax.xlane.f32.xlu0 %v1646
        %v1648 = vpop.xlane.xlu0 %1647
        %v1649 = vsel %vm683, %v1615, -inf
        %1650 = vmax.xlane.f32.xlu0 %v1649
        %v1651 = vpop.xlane.xlu0 %1650
        %v1652 = vsub.f32 %v1604, %v1618
        %v1653 = vsub.f32 %v1605, %v1621
        %v1654 = vsub.f32 %v1606, %v1624
        %v1655 = vsub.f32 %v1607, %v1627
        %v1656 = vsub.f32 %v1608, %v1630
        %v1657 = vsub.f32 %v1609, %v1633
        %v1658 = vsub.f32 %v1610, %v1636
        %v1659 = vsub.f32 %v1611, %v1639
        %v1660 = vsub.f32 %v1612, %v1642
        %v1661 = vsub.f32 %v1613, %v1645
        %v1662 = vsub.f32 %v1614, %v1648
        %v1663 = vsub.f32 %v1615, %v1651
        %v1664 = vmul.f32 %v1652, 1.442695
        %v1665 = vpow.pop %v1664
        %v1666 = vmul.f32 %v1653, 1.442695
        %v1667 = vpow.pop %v1666
        %v1668 = vmul.f32 %v1654, 1.442695
        %v1669 = vpow.pop %v1668
        %v1670 = vmul.f32 %v1655, 1.442695
        %v1671 = vpow.pop %v1670
        %v1672 = vmul.f32 %v1656, 1.442695
        %v1673 = vpow.pop %v1672
        %v1674 = vmul.f32 %v1657, 1.442695
        %v1675 = vpow.pop %v1674
        %v1676 = vmul.f32 %v1658, 1.442695
        %v1677 = vpow.pop %v1676
        %v1678 = vmul.f32 %v1659, 1.442695
        %v1679 = vpow.pop %v1678
        %v1680 = vmul.f32 %v1660, 1.442695
        %v1681 = vpow.pop %v1680
        %v1682 = vmul.f32 %v1661, 1.442695
        %v1683 = vpow.pop %v1682
        %v1684 = vmul.f32 %v1662, 1.442695
        %v1685 = vpow.pop %v1684
        %v1686 = vmul.f32 %v1663, 1.442695
        %v1687 = vpow.pop %v1686
        %v1688 = vsel %vm683, %v1665, 0.0
        %1689 = vadd.xlane.f32.xlu0 %v1688
        %v1690 = vpop.xlane.xlu0 %1689
        %v1691 = vsel %vm683, %v1667, 0.0
        %1692 = vadd.xlane.f32.xlu0 %v1691
        %v1693 = vpop.xlane.xlu0 %1692
        %v1694 = vsel %vm683, %v1669, 0.0
        %1695 = vadd.xlane.f32.xlu0 %v1694
        %v1696 = vpop.xlane.xlu0 %1695
        %v1697 = vsel %vm683, %v1671, 0.0
        %1698 = vadd.xlane.f32.xlu0 %v1697
        %v1699 = vpop.xlane.xlu0 %1698
        %v1700 = vsel %vm683, %v1673, 0.0
        %1701 = vadd.xlane.f32.xlu0 %v1700
        %v1702 = vpop.xlane.xlu0 %1701
        %v1703 = vsel %vm683, %v1675, 0.0
        %1704 = vadd.xlane.f32.xlu0 %v1703
        %v1705 = vpop.xlane.xlu0 %1704
        %v1706 = vsel %vm683, %v1677, 0.0
        %1707 = vadd.xlane.f32.xlu0 %v1706
        %v1708 = vpop.xlane.xlu0 %1707
        %v1709 = vsel %vm683, %v1679, 0.0
        %1710 = vadd.xlane.f32.xlu0 %v1709
        %v1711 = vpop.xlane.xlu0 %1710
        %v1712 = vsel %vm683, %v1681, 0.0
        %1713 = vadd.xlane.f32.xlu0 %v1712
        %v1714 = vpop.xlane.xlu0 %1713
        %v1715 = vsel %vm683, %v1683, 0.0
        %1716 = vadd.xlane.f32.xlu0 %v1715
        %v1717 = vpop.xlane.xlu0 %1716
        %v1718 = vsel %vm683, %v1685, 0.0
        %1719 = vadd.xlane.f32.xlu0 %v1718
        %v1720 = vpop.xlane.xlu0 %1719
        %v1721 = vsel %vm683, %v1687, 0.0
        %1722 = vadd.xlane.f32.xlu0 %v1721
        %v1723 = vpop.xlane.xlu0 %1722
        %v1724 = vrcp.pop %v1690
        %v1725 = vrcp.pop %v1693
        %v1726 = vrcp.pop %v1696
        %v1727 = vrcp.pop %v1699
        %v1728 = vrcp.pop %v1702
        %v1729 = vrcp.pop %v1705
        %v1730 = vrcp.pop %v1708
        %v1731 = vrcp.pop %v1711
        %v1732 = vrcp.pop %v1714
        %v1733 = vrcp.pop %v1717
        %v1734 = vrcp.pop %v1720
        %v1735 = vrcp.pop %v1723
        %v1736 = vmul.f32 %v1665, %v1724
        %v1737 = vmul.f32 %v1667, %v1725
        %v1738 = vmul.f32 %v1669, %v1726
        %v1739 = vmul.f32 %v1671, %v1727
        %v1740 = vmul.f32 %v1673, %v1728
        %v1741 = vmul.f32 %v1675, %v1729
        %v1742 = vmul.f32 %v1677, %v1730
        %v1743 = vmul.f32 %v1679, %v1731
        %v1744 = vmul.f32 %v1681, %v1732
        %v1745 = vmul.f32 %v1683, %v1733
        %v1746 = vmul.f32 %v1685, %v1734
        %v1747 = vmul.f32 %v1687, %v1735
        %v1748 = vlaneseq
        %v1749 = vshrl.u32 %v1748, 7
        %v1750 = vsub.s32 0, %v1749
        %v1751 = vrot.slane %v515, %v1750
        %1753 = vbcast.lane.b32.xlu0 %v1751, 256
        %v1754 = vpop.permute.xlu0 %1753
        %v1755 = vlaneseq
        %v1756 = vshrl.u32 %v1755, 7
        %v1757 = vsub.s32 1, %v1756
        %v1758 = vrot.slane %v515, %v1757
        %1760 = vbcast.lane.b32.xlu0 %v1758, 256
        %v1761 = vpop.permute.xlu0 %1760
        %v1762 = vlaneseq
        %v1763 = vshrl.u32 %v1762, 7
        %v1764 = vsub.s32 2, %v1763
        %v1765 = vrot.slane %v515, %v1764
        %1767 = vbcast.lane.b32.xlu0 %v1765, 256
        %v1768 = vpop.permute.xlu0 %1767
        %v1769 = vmul.f32 %v1736, %v1754
        %v1770 = vmul.f32 %v1737, %v1761
        %v1771 = vmul.f32 %v1738, %v1768
        %v1772 = vmul.f32 %v1739, %v1754
        %v1773 = vmul.f32 %v1740, %v1761
        %v1774 = vmul.f32 %v1741, %v1768
        %v1775 = vmul.f32 %v1742, %v1754
        %v1776 = vmul.f32 %v1743, %v1761
        %v1777 = vmul.f32 %v1744, %v1768
        %v1778 = vmul.f32 %v1745, %v1754
        %v1779 = vmul.f32 %v1746, %v1761
        %v1780 = vmul.f32 %v1747, %v1768
        %1781 = vrot.lane.b32.xlu0 %v642, 96
        %v1782 = vpop.permute.xlu0 %1781
        %v1785 = vsel %vm683, %v1769, 0
        %1787 = vmatprep.subr.mxu0 0.0
        %1788 = vmatpush1.msra.mxu0 %v1782
        %1789 = vmatprep.subr.mxu0 0.0
        %1790 = vmatpush1.msra.mxu0 0.0
        %1791 = vmatprep.subr.mxu0 0.0
        %1792 = vmatpush1.msra.mxu0 0.0
        %1793 = vmatprep.subr.mxu0 0.0
        %1794 = vmatpush1.msra.mxu0 0.0
        %1795 = vmatprep.subr.mxu0 0.0
        %1796 = vmatpush1.msra.mxu0 0.0
        %1797 = vmatprep.subr.mxu0 0.0
        %1798 = vmatpush1.msra.mxu0 0.0
        %1799 = vmatprep.subr.mxu0 0.0
        %1800 = vmatpush1.msra.mxu0 0.0
        %1801 = vmatprep.subr.mxu0 0.0
        %1802 = vmatpush1.msra.mxu0 0.0
        %1803 = vmatprep.subr.mxu0 0.0
        %1804 = vmatpush1.msra.mxu0 0.0
        %1805 = vmatprep.subr.mxu0 0.0
        %1806 = vmatpush1.msra.mxu0 0.0
        %1807 = vmatprep.subr.mxu0 0.0
        %1808 = vmatpush1.msra.mxu0 0.0
        %1809 = vmatprep.subr.mxu0 0.0
        %1810 = vmatpush1.msra.mxu0 0.0
        %1811 = vmatprep.subr.mxu0 0.0
        %1812 = vmatpush1.msra.mxu0 0.0
        %1813 = vmatprep.subr.mxu0 0.0
        %1814 = vmatpush1.msra.mxu0 0.0
        %1815 = vmatprep.subr.mxu0 0.0
        %1816 = vmatpush1.msra.mxu0 0.0
        %1817 = vmatprep.subr.mxu0 0.0
        %1818 = vmatpush1.msra.mxu0 0.0
        %1819 = vmatprep.subr.mxu0 0.0
        %1820 = vmatpush1.msra.mxu0 0.0
        %1821 = vmatprep.subr.mxu0 0.0
        %1822 = vmatpush1.msra.mxu0 0.0
        %1823 = vmatprep.subr.mxu0 0.0
        %1824 = vmatpush1.msra.mxu0 0.0
        %1825 = vmatprep.subr.mxu0 0.0
        %1826 = vmatpush1.msra.mxu0 0.0
        %1827 = vmatprep.subr.mxu0 0.0
        %1828 = vmatpush1.msra.mxu0 0.0
        %1829 = vmatprep.subr.mxu0 0.0
        %1830 = vmatpush1.msra.mxu0 0.0
        %1831 = vmatprep.subr.mxu0 0.0
        %1832 = vmatpush1.msra.mxu0 0.0
        %1833 = vmatprep.subr.mxu0 0.0
        %1834 = vmatpush1.msra.mxu0 0.0
        %1835 = vmatprep.subr.mxu0 0.0
        %1836 = vmatpush1.msra.mxu0 0.0
        %1837 = vmatprep.subr.mxu0 0.0
        %1838 = vmatpush1.msra.mxu0 0.0
        %1839 = vmatprep.subr.mxu0 0.0
        %1840 = vmatpush1.msra.mxu0 0.0
        %1841 = vmatprep.subr.mxu0 0.0
        %1842 = vmatpush1.msra.mxu0 0.0
        %1843 = vmatprep.subr.mxu0 0.0
        %1844 = vmatpush1.msra.mxu0 0.0
        %1845 = vmatprep.subr.mxu0 0.0
        %1846 = vmatpush1.msra.mxu0 0.0
        %1847 = vmatprep.subr.mxu0 0.0
        %1848 = vmatpush1.msra.mxu0 0.0
        %1849 = vmatprep.subr.mxu0 0.0
        %1850 = vmatpush1.msra.mxu0 0.0
        %1851 = vmatprep.mubr.f32.mxu0 0.0
        %1852 = vmatmul.mubr.f32.gmra.mrb[0].mxu0 %v1785
        %v1853 = vpop.f32.mrb[0].mxu0
        %v1854 = vadd.f32 0.0, %v1853
        %v1855 = vpop.f32.mrb[0].mxu0
        %1856 = vdwg.mxu0
        %1857 = vrot.lane.b32.xlu0 %v645, 96
        %v1858 = vpop.permute.xlu0 %1857
        %v1861 = vsel %vm683, %v1770, 0
        %1863 = vmatprep.subr.mxu0 0.0
        %1864 = vmatpush1.msra.mxu0 %v1858
        %1865 = vmatprep.subr.mxu0 0.0
        %1866 = vmatpush1.msra.mxu0 0.0
        %1867 = vmatprep.subr.mxu0 0.0
        %1868 = vmatpush1.msra.mxu0 0.0
        %1869 = vmatprep.subr.mxu0 0.0
        %1870 = vmatpush1.msra.mxu0 0.0
        %1871 = vmatprep.subr.mxu0 0.0
        %1872 = vmatpush1.msra.mxu0 0.0
        %1873 = vmatprep.subr.mxu0 0.0
        %1874 = vmatpush1.msra.mxu0 0.0
        %1875 = vmatprep.subr.mxu0 0.0
        %1876 = vmatpush1.msra.mxu0 0.0
        %1877 = vmatprep.subr.mxu0 0.0
        %1878 = vmatpush1.msra.mxu0 0.0
        %1879 = vmatprep.subr.mxu0 0.0
        %1880 = vmatpush1.msra.mxu0 0.0
        %1881 = vmatprep.subr.mxu0 0.0
        %1882 = vmatpush1.msra.mxu0 0.0
        %1883 = vmatprep.subr.mxu0 0.0
        %1884 = vmatpush1.msra.mxu0 0.0
        %1885 = vmatprep.subr.mxu0 0.0
        %1886 = vmatpush1.msra.mxu0 0.0
        %1887 = vmatprep.subr.mxu0 0.0
        %1888 = vmatpush1.msra.mxu0 0.0
        %1889 = vmatprep.subr.mxu0 0.0
        %1890 = vmatpush1.msra.mxu0 0.0
        %1891 = vmatprep.subr.mxu0 0.0
        %1892 = vmatpush1.msra.mxu0 0.0
        %1893 = vmatprep.subr.mxu0 0.0
        %1894 = vmatpush1.msra.mxu0 0.0
        %1895 = vmatprep.subr.mxu0 0.0
        %1896 = vmatpush1.msra.mxu0 0.0
        %1897 = vmatprep.subr.mxu0 0.0
        %1898 = vmatpush1.msra.mxu0 0.0
        %1899 = vmatprep.subr.mxu0 0.0
        %1900 = vmatpush1.msra.mxu0 0.0
        %1901 = vmatprep.subr.mxu0 0.0
        %1902 = vmatpush1.msra.mxu0 0.0
        %1903 = vmatprep.subr.mxu0 0.0
        %1904 = vmatpush1.msra.mxu0 0.0
        %1905 = vmatprep.subr.mxu0 0.0
        %1906 = vmatpush1.msra.mxu0 0.0
        %1907 = vmatprep.subr.mxu0 0.0
        %1908 = vmatpush1.msra.mxu0 0.0
        %1909 = vmatprep.subr.mxu0 0.0
        %1910 = vmatpush1.msra.mxu0 0.0
        %1911 = vmatprep.subr.mxu0 0.0
        %1912 = vmatpush1.msra.mxu0 0.0
        %1913 = vmatprep.subr.mxu0 0.0
        %1914 = vmatpush1.msra.mxu0 0.0
        %1915 = vmatprep.subr.mxu0 0.0
        %1916 = vmatpush1.msra.mxu0 0.0
        %1917 = vmatprep.subr.mxu0 0.0
        %1918 = vmatpush1.msra.mxu0 0.0
        %1919 = vmatprep.subr.mxu0 0.0
        %1920 = vmatpush1.msra.mxu0 0.0
        %1921 = vmatprep.subr.mxu0 0.0
        %1922 = vmatpush1.msra.mxu0 0.0
        %1923 = vmatprep.subr.mxu0 0.0
        %1924 = vmatpush1.msra.mxu0 0.0
        %1925 = vmatprep.subr.mxu0 0.0
        %1926 = vmatpush1.msra.mxu0 0.0
        %1927 = vmatprep.mubr.f32.mxu0 0.0
        %1928 = vmatmul.mubr.f32.gmra.mrb[0].mxu0 %v1861
        %v1929 = vpop.f32.mrb[0].mxu0
        %v1930 = vadd.f32 0.0, %v1929
        %v1931 = vpop.f32.mrb[0].mxu0
        %1932 = vdwg.mxu0
        %1933 = vrot.lane.b32.xlu0 %v650, 96
        %v1934 = vpop.permute.xlu0 %1933
        %v1937 = vsel %vm683, %v1771, 0
        %1939 = vmatprep.subr.mxu0 0.0
        %1940 = vmatpush1.msra.mxu0 %v1934
        %1941 = vmatprep.subr.mxu0 0.0
        %1942 = vmatpush1.msra.mxu0 0.0
        %1943 = vmatprep.subr.mxu0 0.0
        %1944 = vmatpush1.msra.mxu0 0.0
        %1945 = vmatprep.subr.mxu0 0.0
        %1946 = vmatpush1.msra.mxu0 0.0
        %1947 = vmatprep.subr.mxu0 0.0
        %1948 = vmatpush1.msra.mxu0 0.0
        %1949 = vmatprep.subr.mxu0 0.0
        %1950 = vmatpush1.msra.mxu0 0.0
        %1951 = vmatprep.subr.mxu0 0.0
        %1952 = vmatpush1.msra.mxu0 0.0
        %1953 = vmatprep.subr.mxu0 0.0
        %1954 = vmatpush1.msra.mxu0 0.0
        %1955 = vmatprep.subr.mxu0 0.0
        %1956 = vmatpush1.msra.mxu0 0.0
        %1957 = vmatprep.subr.mxu0 0.0
        %1958 = vmatpush1.msra.mxu0 0.0
        %1959 = vmatprep.subr.mxu0 0.0
        %1960 = vmatpush1.msra.mxu0 0.0
        %1961 = vmatprep.subr.mxu0 0.0
        %1962 = vmatpush1.msra.mxu0 0.0
        %1963 = vmatprep.subr.mxu0 0.0
        %1964 = vmatpush1.msra.mxu0 0.0
        %1965 = vmatprep.subr.mxu0 0.0
        %1966 = vmatpush1.msra.mxu0 0.0
        %1967 = vmatprep.subr.mxu0 0.0
        %1968 = vmatpush1.msra.mxu0 0.0
        %1969 = vmatprep.subr.mxu0 0.0
        %1970 = vmatpush1.msra.mxu0 0.0
        %1971 = vmatprep.subr.mxu0 0.0
        %1972 = vmatpush1.msra.mxu0 0.0
        %1973 = vmatprep.subr.mxu0 0.0
        %1974 = vmatpush1.msra.mxu0 0.0
        %1975 = vmatprep.subr.mxu0 0.0
        %1976 = vmatpush1.msra.mxu0 0.0
        %1977 = vmatprep.subr.mxu0 0.0
        %1978 = vmatpush1.msra.mxu0 0.0
        %1979 = vmatprep.subr.mxu0 0.0
        %1980 = vmatpush1.msra.mxu0 0.0
        %1981 = vmatprep.subr.mxu0 0.0
        %1982 = vmatpush1.msra.mxu0 0.0
        %1983 = vmatprep.subr.mxu0 0.0
        %1984 = vmatpush1.msra.mxu0 0.0
        %1985 = vmatprep.subr.mxu0 0.0
        %1986 = vmatpush1.msra.mxu0 0.0
        %1987 = vmatprep.subr.mxu0 0.0
        %1988 = vmatpush1.msra.mxu0 0.0
        %1989 = vmatprep.subr.mxu0 0.0
        %1990 = vmatpush1.msra.mxu0 0.0
        %1991 = vmatprep.subr.mxu0 0.0
        %1992 = vmatpush1.msra.mxu0 0.0
        %1993 = vmatprep.subr.mxu0 0.0
        %1994 = vmatpush1.msra.mxu0 0.0
        %1995 = vmatprep.subr.mxu0 0.0
        %1996 = vmatpush1.msra.mxu0 0.0
        %1997 = vmatprep.subr.mxu0 0.0
        %1998 = vmatpush1.msra.mxu0 0.0
        %1999 = vmatprep.subr.mxu0 0.0
        %2000 = vmatpush1.msra.mxu0 0.0
        %2001 = vmatprep.subr.mxu0 0.0
        %2002 = vmatpush1.msra.mxu0 0.0
        %2003 = vmatprep.mubr.f32.mxu0 0.0
        %2004 = vmatmul.mubr.f32.gmra.mrb[0].mxu0 %v1937
        %v2005 = vpop.f32.mrb[0].mxu0
        %v2006 = vadd.f32 0.0, %v2005
        %v2007 = vpop.f32.mrb[0].mxu0
        %2008 = vdwg.mxu0
        %2009 = vrot.lane.b32.xlu0 %v666, 96
        %v2010 = vpop.permute.xlu0 %2009
        %v2013 = vsel %vm683, %v1772, 0
        %2015 = vmatprep.subr.mxu0 0.0
        %2016 = vmatpush1.msra.mxu0 %v2010
        %2017 = vmatprep.subr.mxu0 0.0
        %2018 = vmatpush1.msra.mxu0 0.0
        %2019 = vmatprep.subr.mxu0 0.0
        %2020 = vmatpush1.msra.mxu0 0.0
        %2021 = vmatprep.subr.mxu0 0.0
        %2022 = vmatpush1.msra.mxu0 0.0
        %2023 = vmatprep.subr.mxu0 0.0
        %2024 = vmatpush1.msra.mxu0 0.0
        %2025 = vmatprep.subr.mxu0 0.0
        %2026 = vmatpush1.msra.mxu0 0.0
        %2027 = vmatprep.subr.mxu0 0.0
        %2028 = vmatpush1.msra.mxu0 0.0
        %2029 = vmatprep.subr.mxu0 0.0
        %2030 = vmatpush1.msra.mxu0 0.0
        %2031 = vmatprep.subr.mxu0 0.0
        %2032 = vmatpush1.msra.mxu0 0.0
        %2033 = vmatprep.subr.mxu0 0.0
        %2034 = vmatpush1.msra.mxu0 0.0
        %2035 = vmatprep.subr.mxu0 0.0
        %2036 = vmatpush1.msra.mxu0 0.0
        %2037 = vmatprep.subr.mxu0 0.0
        %2038 = vmatpush1.msra.mxu0 0.0
        %2039 = vmatprep.subr.mxu0 0.0
        %2040 = vmatpush1.msra.mxu0 0.0
        %2041 = vmatprep.subr.mxu0 0.0
        %2042 = vmatpush1.msra.mxu0 0.0
        %2043 = vmatprep.subr.mxu0 0.0
        %2044 = vmatpush1.msra.mxu0 0.0
        %2045 = vmatprep.subr.mxu0 0.0
        %2046 = vmatpush1.msra.mxu0 0.0
        %2047 = vmatprep.subr.mxu0 0.0
        %2048 = vmatpush1.msra.mxu0 0.0
        %2049 = vmatprep.subr.mxu0 0.0
        %2050 = vmatpush1.msra.mxu0 0.0
        %2051 = vmatprep.subr.mxu0 0.0
        %2052 = vmatpush1.msra.mxu0 0.0
        %2053 = vmatprep.subr.mxu0 0.0
        %2054 = vmatpush1.msra.mxu0 0.0
        %2055 = vmatprep.subr.mxu0 0.0
        %2056 = vmatpush1.msra.mxu0 0.0
        %2057 = vmatprep.subr.mxu0 0.0
        %2058 = vmatpush1.msra.mxu0 0.0
        %2059 = vmatprep.subr.mxu0 0.0
        %2060 = vmatpush1.msra.mxu0 0.0
        %2061 = vmatprep.subr.mxu0 0.0
        %2062 = vmatpush1.msra.mxu0 0.0
        %2063 = vmatprep.subr.mxu0 0.0
        %2064 = vmatpush1.msra.mxu0 0.0
        %2065 = vmatprep.subr.mxu0 0.0
        %2066 = vmatpush1.msra.mxu0 0.0
        %2067 = vmatprep.subr.mxu0 0.0
        %2068 = vmatpush1.msra.mxu0 0.0
        %2069 = vmatprep.subr.mxu0 0.0
        %2070 = vmatpush1.msra.mxu0 0.0
        %2071 = vmatprep.subr.mxu0 0.0
        %2072 = vmatpush1.msra.mxu0 0.0
        %2073 = vmatprep.subr.mxu0 0.0
        %2074 = vmatpush1.msra.mxu0 0.0
        %2075 = vmatprep.subr.mxu0 0.0
        %2076 = vmatpush1.msra.mxu0 0.0
        %2077 = vmatprep.subr.mxu0 0.0
        %2078 = vmatpush1.msra.mxu0 0.0
        %2079 = vmatprep.mubr.f32.mxu0 0.0
        %2080 = vmatmul.mubr.f32.gmra.mrb[0].mxu0 %v2013
        %v2081 = vpop.f32.mrb[0].mxu0
        %v2082 = vadd.f32 0.0, %v2081
        %v2083 = vpop.f32.mrb[0].mxu0
        %2084 = vdwg.mxu0
        %2085 = vrot.lane.b32.xlu0 %v668, 96
        %v2086 = vpop.permute.xlu0 %2085
        %v2089 = vsel %vm683, %v1773, 0
        %2091 = vmatprep.subr.mxu0 0.0
        %2092 = vmatpush1.msra.mxu0 %v2086
        %2093 = vmatprep.subr.mxu0 0.0
        %2094 = vmatpush1.msra.mxu0 0.0
        %2095 = vmatprep.subr.mxu0 0.0
        %2096 = vmatpush1.msra.mxu0 0.0
        %2097 = vmatprep.subr.mxu0 0.0
        %2098 = vmatpush1.msra.mxu0 0.0
        %2099 = vmatprep.subr.mxu0 0.0
        %2100 = vmatpush1.msra.mxu0 0.0
        %2101 = vmatprep.subr.mxu0 0.0
        %2102 = vmatpush1.msra.mxu0 0.0
        %2103 = vmatprep.subr.mxu0 0.0
        %2104 = vmatpush1.msra.mxu0 0.0
        %2105 = vmatprep.subr.mxu0 0.0
        %2106 = vmatpush1.msra.mxu0 0.0
        %2107 = vmatprep.subr.mxu0 0.0
        %2108 = vmatpush1.msra.mxu0 0.0
        %2109 = vmatprep.subr.mxu0 0.0
        %2110 = vmatpush1.msra.mxu0 0.0
        %2111 = vmatprep.subr.mxu0 0.0
        %2112 = vmatpush1.msra.mxu0 0.0
        %2113 = vmatprep.subr.mxu0 0.0
        %2114 = vmatpush1.msra.mxu0 0.0
        %2115 = vmatprep.subr.mxu0 0.0
        %2116 = vmatpush1.msra.mxu0 0.0
        %2117 = vmatprep.subr.mxu0 0.0
        %2118 = vmatpush1.msra.mxu0 0.0
        %2119 = vmatprep.subr.mxu0 0.0
        %2120 = vmatpush1.msra.mxu0 0.0
        %2121 = vmatprep.subr.mxu0 0.0
        %2122 = vmatpush1.msra.mxu0 0.0
        %2123 = vmatprep.subr.mxu0 0.0
        %2124 = vmatpush1.msra.mxu0 0.0
        %2125 = vmatprep.subr.mxu0 0.0
        %2126 = vmatpush1.msra.mxu0 0.0
        %2127 = vmatprep.subr.mxu0 0.0
        %2128 = vmatpush1.msra.mxu0 0.0
        %2129 = vmatprep.subr.mxu0 0.0
        %2130 = vmatpush1.msra.mxu0 0.0
        %2131 = vmatprep.subr.mxu0 0.0
        %2132 = vmatpush1.msra.mxu0 0.0
        %2133 = vmatprep.subr.mxu0 0.0
        %2134 = vmatpush1.msra.mxu0 0.0
        %2135 = vmatprep.subr.mxu0 0.0
        %2136 = vmatpush1.msra.mxu0 0.0
        %2137 = vmatprep.subr.mxu0 0.0
        %2138 = vmatpush1.msra.mxu0 0.0
        %2139 = vmatprep.subr.mxu0 0.0
        %2140 = vmatpush1.msra.mxu0 0.0
        %2141 = vmatprep.subr.mxu0 0.0
        %2142 = vmatpush1.msra.mxu0 0.0
        %2143 = vmatprep.subr.mxu0 0.0
        %2144 = vmatpush1.msra.mxu0 0.0
        %2145 = vmatprep.subr.mxu0 0.0
        %2146 = vmatpush1.msra.mxu0 0.0
        %2147 = vmatprep.subr.mxu0 0.0
        %2148 = vmatpush1.msra.mxu0 0.0
        %2149 = vmatprep.subr.mxu0 0.0
        %2150 = vmatpush1.msra.mxu0 0.0
        %2151 = vmatprep.subr.mxu0 0.0
        %2152 = vmatpush1.msra.mxu0 0.0
        %2153 = vmatprep.subr.mxu0 0.0
        %2154 = vmatpush1.msra.mxu0 0.0
        %2155 = vmatprep.mubr.f32.mxu0 0.0
        %2156 = vmatmul.mubr.f32.gmra.mrb[0].mxu0 %v2089
        %v2157 = vpop.f32.mrb[0].mxu0
        %v2158 = vadd.f32 0.0, %v2157
        %v2159 = vpop.f32.mrb[0].mxu0
        %2160 = vdwg.mxu0
        %2161 = vrot.lane.b32.xlu0 %v670, 96
        %v2162 = vpop.permute.xlu0 %2161
        %v2165 = vsel %vm683, %v1774, 0
        %2167 = vmatprep.subr.mxu0 0.0
        %2168 = vmatpush1.msra.mxu0 %v2162
        %2169 = vmatprep.subr.mxu0 0.0
        %2170 = vmatpush1.msra.mxu0 0.0
        %2171 = vmatprep.subr.mxu0 0.0
        %2172 = vmatpush1.msra.mxu0 0.0
        %2173 = vmatprep.subr.mxu0 0.0
        %2174 = vmatpush1.msra.mxu0 0.0
        %2175 = vmatprep.subr.mxu0 0.0
        %2176 = vmatpush1.msra.mxu0 0.0
        %2177 = vmatprep.subr.mxu0 0.0
        %2178 = vmatpush1.msra.mxu0 0.0
        %2179 = vmatprep.subr.mxu0 0.0
        %2180 = vmatpush1.msra.mxu0 0.0
        %2181 = vmatprep.subr.mxu0 0.0
        %2182 = vmatpush1.msra.mxu0 0.0
        %2183 = vmatprep.subr.mxu0 0.0
        %2184 = vmatpush1.msra.mxu0 0.0
        %2185 = vmatprep.subr.mxu0 0.0
        %2186 = vmatpush1.msra.mxu0 0.0
        %2187 = vmatprep.subr.mxu0 0.0
        %2188 = vmatpush1.msra.mxu0 0.0
        %2189 = vmatprep.subr.mxu0 0.0
        %2190 = vmatpush1.msra.mxu0 0.0
        %2191 = vmatprep.subr.mxu0 0.0
        %2192 = vmatpush1.msra.mxu0 0.0
        %2193 = vmatprep.subr.mxu0 0.0
        %2194 = vmatpush1.msra.mxu0 0.0
        %2195 = vmatprep.subr.mxu0 0.0
        %2196 = vmatpush1.msra.mxu0 0.0
        %2197 = vmatprep.subr.mxu0 0.0
        %2198 = vmatpush1.msra.mxu0 0.0
        %2199 = vmatprep.subr.mxu0 0.0
        %2200 = vmatpush1.msra.mxu0 0.0
        %2201 = vmatprep.subr.mxu0 0.0
        %2202 = vmatpush1.msra.mxu0 0.0
        %2203 = vmatprep.subr.mxu0 0.0
        %2204 = vmatpush1.msra.mxu0 0.0
        %2205 = vmatprep.subr.mxu0 0.0
        %2206 = vmatpush1.msra.mxu0 0.0
        %2207 = vmatprep.subr.mxu0 0.0
        %2208 = vmatpush1.msra.mxu0 0.0
        %2209 = vmatprep.subr.mxu0 0.0
        %2210 = vmatpush1.msra.mxu0 0.0
        %2211 = vmatprep.subr.mxu0 0.0
        %2212 = vmatpush1.msra.mxu0 0.0
        %2213 = vmatprep.subr.mxu0 0.0
        %2214 = vmatpush1.msra.mxu0 0.0
        %2215 = vmatprep.subr.mxu0 0.0
        %2216 = vmatpush1.msra.mxu0 0.0
        %2217 = vmatprep.subr.mxu0 0.0
        %2218 = vmatpush1.msra.mxu0 0.0
        %2219 = vmatprep.subr.mxu0 0.0
        %2220 = vmatpush1.msra.mxu0 0.0
        %2221 = vmatprep.subr.mxu0 0.0
        %2222 = vmatpush1.msra.mxu0 0.0
        %2223 = vmatprep.subr.mxu0 0.0
        %2224 = vmatpush1.msra.mxu0 0.0
        %2225 = vmatprep.subr.mxu0 0.0
        %2226 = vmatpush1.msra.mxu0 0.0
        %2227 = vmatprep.subr.mxu0 0.0
        %2228 = vmatpush1.msra.mxu0 0.0
        %2229 = vmatprep.subr.mxu0 0.0
        %2230 = vmatpush1.msra.mxu0 0.0
        %2231 = vmatprep.mubr.f32.mxu0 0.0
        %2232 = vmatmul.mubr.f32.gmra.mrb[0].mxu0 %v2165
        %v2233 = vpop.f32.mrb[0].mxu0
        %v2234 = vadd.f32 0.0, %v2233
        %v2235 = vpop.f32.mrb[0].mxu0
        %2236 = vdwg.mxu0
        %2237 = vrot.lane.b32.xlu0 %v672, 96
        %v2238 = vpop.permute.xlu0 %2237
        %v2241 = vsel %vm683, %v1775, 0
        %2243 = vmatprep.subr.mxu0 0.0
        %2244 = vmatpush1.msra.mxu0 %v2238
        %2245 = vmatprep.subr.mxu0 0.0
        %2246 = vmatpush1.msra.mxu0 0.0
        %2247 = vmatprep.subr.mxu0 0.0
        %2248 = vmatpush1.msra.mxu0 0.0
        %2249 = vmatprep.subr.mxu0 0.0
        %2250 = vmatpush1.msra.mxu0 0.0
        %2251 = vmatprep.subr.mxu0 0.0
        %2252 = vmatpush1.msra.mxu0 0.0
        %2253 = vmatprep.subr.mxu0 0.0
        %2254 = vmatpush1.msra.mxu0 0.0
        %2255 = vmatprep.subr.mxu0 0.0
        %2256 = vmatpush1.msra.mxu0 0.0
        %2257 = vmatprep.subr.mxu0 0.0
        %2258 = vmatpush1.msra.mxu0 0.0
        %2259 = vmatprep.subr.mxu0 0.0
        %2260 = vmatpush1.msra.mxu0 0.0
        %2261 = vmatprep.subr.mxu0 0.0
        %2262 = vmatpush1.msra.mxu0 0.0
        %2263 = vmatprep.subr.mxu0 0.0
        %2264 = vmatpush1.msra.mxu0 0.0
        %2265 = vmatprep.subr.mxu0 0.0
        %2266 = vmatpush1.msra.mxu0 0.0
        %2267 = vmatprep.subr.mxu0 0.0
        %2268 = vmatpush1.msra.mxu0 0.0
        %2269 = vmatprep.subr.mxu0 0.0
        %2270 = vmatpush1.msra.mxu0 0.0
        %2271 = vmatprep.subr.mxu0 0.0
        %2272 = vmatpush1.msra.mxu0 0.0
        %2273 = vmatprep.subr.mxu0 0.0
        %2274 = vmatpush1.msra.mxu0 0.0
        %2275 = vmatprep.subr.mxu0 0.0
        %2276 = vmatpush1.msra.mxu0 0.0
        %2277 = vmatprep.subr.mxu0 0.0
        %2278 = vmatpush1.msra.mxu0 0.0
        %2279 = vmatprep.subr.mxu0 0.0
        %2280 = vmatpush1.msra.mxu0 0.0
        %2281 = vmatprep.subr.mxu0 0.0
        %2282 = vmatpush1.msra.mxu0 0.0
        %2283 = vmatprep.subr.mxu0 0.0
        %2284 = vmatpush1.msra.mxu0 0.0
        %2285 = vmatprep.subr.mxu0 0.0
        %2286 = vmatpush1.msra.mxu0 0.0
        %2287 = vmatprep.subr.mxu0 0.0
        %2288 = vmatpush1.msra.mxu0 0.0
        %2289 = vmatprep.subr.mxu0 0.0
        %2290 = vmatpush1.msra.mxu0 0.0
        %2291 = vmatprep.subr.mxu0 0.0
        %2292 = vmatpush1.msra.mxu0 0.0
        %2293 = vmatprep.subr.mxu0 0.0
        %2294 = vmatpush1.msra.mxu0 0.0
        %2295 = vmatprep.subr.mxu0 0.0
        %2296 = vmatpush1.msra.mxu0 0.0
        %2297 = vmatprep.subr.mxu0 0.0
        %2298 = vmatpush1.msra.mxu0 0.0
        %2299 = vmatprep.subr.mxu0 0.0
        %2300 = vmatpush1.msra.mxu0 0.0
        %2301 = vmatprep.subr.mxu0 0.0
        %2302 = vmatpush1.msra.mxu0 0.0
        %2303 = vmatprep.subr.mxu0 0.0
        %2304 = vmatpush1.msra.mxu0 0.0
        %2305 = vmatprep.subr.mxu0 0.0
        %2306 = vmatpush1.msra.mxu0 0.0
        %2307 = vmatprep.mubr.f32.mxu0 0.0
        %2308 = vmatmul.mubr.f32.gmra.mrb[0].mxu0 %v2241
        %v2309 = vpop.f32.mrb[0].mxu0
        %v2310 = vadd.f32 0.0, %v2309
        %v2311 = vpop.f32.mrb[0].mxu0
        %2312 = vdwg.mxu0
        %2313 = vrot.lane.b32.xlu0 %v674, 96
        %v2314 = vpop.permute.xlu0 %2313
        %v2317 = vsel %vm683, %v1776, 0
        %2319 = vmatprep.subr.mxu0 0.0
        %2320 = vmatpush1.msra.mxu0 %v2314
        %2321 = vmatprep.subr.mxu0 0.0
        %2322 = vmatpush1.msra.mxu0 0.0
        %2323 = vmatprep.subr.mxu0 0.0
        %2324 = vmatpush1.msra.mxu0 0.0
        %2325 = vmatprep.subr.mxu0 0.0
        %2326 = vmatpush1.msra.mxu0 0.0
        %2327 = vmatprep.subr.mxu0 0.0
        %2328 = vmatpush1.msra.mxu0 0.0
        %2329 = vmatprep.subr.mxu0 0.0
        %2330 = vmatpush1.msra.mxu0 0.0
        %2331 = vmatprep.subr.mxu0 0.0
        %2332 = vmatpush1.msra.mxu0 0.0
        %2333 = vmatprep.subr.mxu0 0.0
        %2334 = vmatpush1.msra.mxu0 0.0
        %2335 = vmatprep.subr.mxu0 0.0
        %2336 = vmatpush1.msra.mxu0 0.0
        %2337 = vmatprep.subr.mxu0 0.0
        %2338 = vmatpush1.msra.mxu0 0.0
        %2339 = vmatprep.subr.mxu0 0.0
        %2340 = vmatpush1.msra.mxu0 0.0
        %2341 = vmatprep.subr.mxu0 0.0
        %2342 = vmatpush1.msra.mxu0 0.0
        %2343 = vmatprep.subr.mxu0 0.0
        %2344 = vmatpush1.msra.mxu0 0.0
        %2345 = vmatprep.subr.mxu0 0.0
        %2346 = vmatpush1.msra.mxu0 0.0
        %2347 = vmatprep.subr.mxu0 0.0
        %2348 = vmatpush1.msra.mxu0 0.0
        %2349 = vmatprep.subr.mxu0 0.0
        %2350 = vmatpush1.msra.mxu0 0.0
        %2351 = vmatprep.subr.mxu0 0.0
        %2352 = vmatpush1.msra.mxu0 0.0
        %2353 = vmatprep.subr.mxu0 0.0
        %2354 = vmatpush1.msra.mxu0 0.0
        %2355 = vmatprep.subr.mxu0 0.0
        %2356 = vmatpush1.msra.mxu0 0.0
        %2357 = vmatprep.subr.mxu0 0.0
        %2358 = vmatpush1.msra.mxu0 0.0
        %2359 = vmatprep.subr.mxu0 0.0
        %2360 = vmatpush1.msra.mxu0 0.0
        %2361 = vmatprep.subr.mxu0 0.0
        %2362 = vmatpush1.msra.mxu0 0.0
        %2363 = vmatprep.subr.mxu0 0.0
        %2364 = vmatpush1.msra.mxu0 0.0
        %2365 = vmatprep.subr.mxu0 0.0
        %2366 = vmatpush1.msra.mxu0 0.0
        %2367 = vmatprep.subr.mxu0 0.0
        %2368 = vmatpush1.msra.mxu0 0.0
        %2369 = vmatprep.subr.mxu0 0.0
        %2370 = vmatpush1.msra.mxu0 0.0
        %2371 = vmatprep.subr.mxu0 0.0
        %2372 = vmatpush1.msra.mxu0 0.0
        %2373 = vmatprep.subr.mxu0 0.0
        %2374 = vmatpush1.msra.mxu0 0.0
        %2375 = vmatprep.subr.mxu0 0.0
        %2376 = vmatpush1.msra.mxu0 0.0
        %2377 = vmatprep.subr.mxu0 0.0
        %2378 = vmatpush1.msra.mxu0 0.0
        %2379 = vmatprep.subr.mxu0 0.0
        %2380 = vmatpush1.msra.mxu0 0.0
        %2381 = vmatprep.subr.mxu0 0.0
        %2382 = vmatpush1.msra.mxu0 0.0
        %2383 = vmatprep.mubr.f32.mxu0 0.0
        %2384 = vmatmul.mubr.f32.gmra.mrb[0].mxu0 %v2317
        %v2385 = vpop.f32.mrb[0].mxu0
        %v2386 = vadd.f32 0.0, %v2385
        %v2387 = vpop.f32.mrb[0].mxu0
        %2388 = vdwg.mxu0
        %2389 = vrot.lane.b32.xlu0 %v676, 96
        %v2390 = vpop.permute.xlu0 %2389
        %v2393 = vsel %vm683, %v1777, 0
        %2395 = vmatprep.subr.mxu0 0.0
        %2396 = vmatpush1.msra.mxu0 %v2390
        %2397 = vmatprep.subr.mxu0 0.0
        %2398 = vmatpush1.msra.mxu0 0.0
        %2399 = vmatprep.subr.mxu0 0.0
        %2400 = vmatpush1.msra.mxu0 0.0
        %2401 = vmatprep.subr.mxu0 0.0
        %2402 = vmatpush1.msra.mxu0 0.0
        %2403 = vmatprep.subr.mxu0 0.0
        %2404 = vmatpush1.msra.mxu0 0.0
        %2405 = vmatprep.subr.mxu0 0.0
        %2406 = vmatpush1.msra.mxu0 0.0
        %2407 = vmatprep.subr.mxu0 0.0
        %2408 = vmatpush1.msra.mxu0 0.0
        %2409 = vmatprep.subr.mxu0 0.0
        %2410 = vmatpush1.msra.mxu0 0.0
        %2411 = vmatprep.subr.mxu0 0.0
        %2412 = vmatpush1.msra.mxu0 0.0
        %2413 = vmatprep.subr.mxu0 0.0
        %2414 = vmatpush1.msra.mxu0 0.0
        %2415 = vmatprep.subr.mxu0 0.0
        %2416 = vmatpush1.msra.mxu0 0.0
        %2417 = vmatprep.subr.mxu0 0.0
        %2418 = vmatpush1.msra.mxu0 0.0
        %2419 = vmatprep.subr.mxu0 0.0
        %2420 = vmatpush1.msra.mxu0 0.0
        %2421 = vmatprep.subr.mxu0 0.0
        %2422 = vmatpush1.msra.mxu0 0.0
        %2423 = vmatprep.subr.mxu0 0.0
        %2424 = vmatpush1.msra.mxu0 0.0
        %2425 = vmatprep.subr.mxu0 0.0
        %2426 = vmatpush1.msra.mxu0 0.0
        %2427 = vmatprep.subr.mxu0 0.0
        %2428 = vmatpush1.msra.mxu0 0.0
        %2429 = vmatprep.subr.mxu0 0.0
        %2430 = vmatpush1.msra.mxu0 0.0
        %2431 = vmatprep.subr.mxu0 0.0
        %2432 = vmatpush1.msra.mxu0 0.0
        %2433 = vmatprep.subr.mxu0 0.0
        %2434 = vmatpush1.msra.mxu0 0.0
        %2435 = vmatprep.subr.mxu0 0.0
        %2436 = vmatpush1.msra.mxu0 0.0
        %2437 = vmatprep.subr.mxu0 0.0
        %2438 = vmatpush1.msra.mxu0 0.0
        %2439 = vmatprep.subr.mxu0 0.0
        %2440 = vmatpush1.msra.mxu0 0.0
        %2441 = vmatprep.subr.mxu0 0.0
        %2442 = vmatpush1.msra.mxu0 0.0
        %2443 = vmatprep.subr.mxu0 0.0
        %2444 = vmatpush1.msra.mxu0 0.0
        %2445 = vmatprep.subr.mxu0 0.0
        %2446 = vmatpush1.msra.mxu0 0.0
        %2447 = vmatprep.subr.mxu0 0.0
        %2448 = vmatpush1.msra.mxu0 0.0
        %2449 = vmatprep.subr.mxu0 0.0
        %2450 = vmatpush1.msra.mxu0 0.0
        %2451 = vmatprep.subr.mxu0 0.0
        %2452 = vmatpush1.msra.mxu0 0.0
        %2453 = vmatprep.subr.mxu0 0.0
        %2454 = vmatpush1.msra.mxu0 0.0
        %2455 = vmatprep.subr.mxu0 0.0
        %2456 = vmatpush1.msra.mxu0 0.0
        %2457 = vmatprep.subr.mxu0 0.0
        %2458 = vmatpush1.msra.mxu0 0.0
        %2459 = vmatprep.mubr.f32.mxu0 0.0
        %2460 = vmatmul.mubr.f32.gmra.mrb[0].mxu0 %v2393
        %v2461 = vpop.f32.mrb[0].mxu0
        %v2462 = vadd.f32 0.0, %v2461
        %v2463 = vpop.f32.mrb[0].mxu0
        %2464 = vdwg.mxu0
        %2465 = vrot.lane.b32.xlu0 %v678, 96
        %v2466 = vpop.permute.xlu0 %2465
        %v2469 = vsel %vm683, %v1778, 0
        %2471 = vmatprep.subr.mxu0 0.0
        %2472 = vmatpush1.msra.mxu0 %v2466
        %2473 = vmatprep.subr.mxu0 0.0
        %2474 = vmatpush1.msra.mxu0 0.0
        %2475 = vmatprep.subr.mxu0 0.0
        %2476 = vmatpush1.msra.mxu0 0.0
        %2477 = vmatprep.subr.mxu0 0.0
        %2478 = vmatpush1.msra.mxu0 0.0
        %2479 = vmatprep.subr.mxu0 0.0
        %2480 = vmatpush1.msra.mxu0 0.0
        %2481 = vmatprep.subr.mxu0 0.0
        %2482 = vmatpush1.msra.mxu0 0.0
        %2483 = vmatprep.subr.mxu0 0.0
        %2484 = vmatpush1.msra.mxu0 0.0
        %2485 = vmatprep.subr.mxu0 0.0
        %2486 = vmatpush1.msra.mxu0 0.0
        %2487 = vmatprep.subr.mxu0 0.0
        %2488 = vmatpush1.msra.mxu0 0.0
        %2489 = vmatprep.subr.mxu0 0.0
        %2490 = vmatpush1.msra.mxu0 0.0
        %2491 = vmatprep.subr.mxu0 0.0
        %2492 = vmatpush1.msra.mxu0 0.0
        %2493 = vmatprep.subr.mxu0 0.0
        %2494 = vmatpush1.msra.mxu0 0.0
        %2495 = vmatprep.subr.mxu0 0.0
        %2496 = vmatpush1.msra.mxu0 0.0
        %2497 = vmatprep.subr.mxu0 0.0
        %2498 = vmatpush1.msra.mxu0 0.0
        %2499 = vmatprep.subr.mxu0 0.0
        %2500 = vmatpush1.msra.mxu0 0.0
        %2501 = vmatprep.subr.mxu0 0.0
        %2502 = vmatpush1.msra.mxu0 0.0
        %2503 = vmatprep.subr.mxu0 0.0
        %2504 = vmatpush1.msra.mxu0 0.0
        %2505 = vmatprep.subr.mxu0 0.0
        %2506 = vmatpush1.msra.mxu0 0.0
        %2507 = vmatprep.subr.mxu0 0.0
        %2508 = vmatpush1.msra.mxu0 0.0
        %2509 = vmatprep.subr.mxu0 0.0
        %2510 = vmatpush1.msra.mxu0 0.0
        %2511 = vmatprep.subr.mxu0 0.0
        %2512 = vmatpush1.msra.mxu0 0.0
        %2513 = vmatprep.subr.mxu0 0.0
        %2514 = vmatpush1.msra.mxu0 0.0
        %2515 = vmatprep.subr.mxu0 0.0
        %2516 = vmatpush1.msra.mxu0 0.0
        %2517 = vmatprep.subr.mxu0 0.0
        %2518 = vmatpush1.msra.mxu0 0.0
        %2519 = vmatprep.subr.mxu0 0.0
        %2520 = vmatpush1.msra.mxu0 0.0
        %2521 = vmatprep.subr.mxu0 0.0
        %2522 = vmatpush1.msra.mxu0 0.0
        %2523 = vmatprep.subr.mxu0 0.0
        %2524 = vmatpush1.msra.mxu0 0.0
        %2525 = vmatprep.subr.mxu0 0.0
        %2526 = vmatpush1.msra.mxu0 0.0
        %2527 = vmatprep.subr.mxu0 0.0
        %2528 = vmatpush1.msra.mxu0 0.0
        %2529 = vmatprep.subr.mxu0 0.0
        %2530 = vmatpush1.msra.mxu0 0.0
        %2531 = vmatprep.subr.mxu0 0.0
        %2532 = vmatpush1.msra.mxu0 0.0
        %2533 = vmatprep.subr.mxu0 0.0
        %2534 = vmatpush1.msra.mxu0 0.0
        %2535 = vmatprep.mubr.f32.mxu0 0.0
        %2536 = vmatmul.mubr.f32.gmra.mrb[0].mxu0 %v2469
        %v2537 = vpop.f32.mrb[0].mxu0
        %v2538 = vadd.f32 0.0, %v2537
        %v2539 = vpop.f32.mrb[0].mxu0
        %2540 = vdwg.mxu0
        %2541 = vrot.lane.b32.xlu0 %v680, 96
        %v2542 = vpop.permute.xlu0 %2541
        %v2545 = vsel %vm683, %v1779, 0
        %2547 = vmatprep.subr.mxu0 0.0
        %2548 = vmatpush1.msra.mxu0 %v2542
        %2549 = vmatprep.subr.mxu0 0.0
        %2550 = vmatpush1.msra.mxu0 0.0
        %2551 = vmatprep.subr.mxu0 0.0
        %2552 = vmatpush1.msra.mxu0 0.0
        %2553 = vmatprep.subr.mxu0 0.0
        %2554 = vmatpush1.msra.mxu0 0.0
        %2555 = vmatprep.subr.mxu0 0.0
        %2556 = vmatpush1.msra.mxu0 0.0
        %2557 = vmatprep.subr.mxu0 0.0
        %2558 = vmatpush1.msra.mxu0 0.0
        %2559 = vmatprep.subr.mxu0 0.0
        %2560 = vmatpush1.msra.mxu0 0.0
        %2561 = vmatprep.subr.mxu0 0.0
        %2562 = vmatpush1.msra.mxu0 0.0
        %2563 = vmatprep.subr.mxu0 0.0
        %2564 = vmatpush1.msra.mxu0 0.0
        %2565 = vmatprep.subr.mxu0 0.0
        %2566 = vmatpush1.msra.mxu0 0.0
        %2567 = vmatprep.subr.mxu0 0.0
        %2568 = vmatpush1.msra.mxu0 0.0
        %2569 = vmatprep.subr.mxu0 0.0
        %2570 = vmatpush1.msra.mxu0 0.0
        %2571 = vmatprep.subr.mxu0 0.0
        %2572 = vmatpush1.msra.mxu0 0.0
        %2573 = vmatprep.subr.mxu0 0.0
        %2574 = vmatpush1.msra.mxu0 0.0
        %2575 = vmatprep.subr.mxu0 0.0
        %2576 = vmatpush1.msra.mxu0 0.0
        %2577 = vmatprep.subr.mxu0 0.0
        %2578 = vmatpush1.msra.mxu0 0.0
        %2579 = vmatprep.subr.mxu0 0.0
        %2580 = vmatpush1.msra.mxu0 0.0
        %2581 = vmatprep.subr.mxu0 0.0
        %2582 = vmatpush1.msra.mxu0 0.0
        %2583 = vmatprep.subr.mxu0 0.0
        %2584 = vmatpush1.msra.mxu0 0.0
        %2585 = vmatprep.subr.mxu0 0.0
        %2586 = vmatpush1.msra.mxu0 0.0
        %2587 = vmatprep.subr.mxu0 0.0
        %2588 = vmatpush1.msra.mxu0 0.0
        %2589 = vmatprep.subr.mxu0 0.0
        %2590 = vmatpush1.msra.mxu0 0.0
        %2591 = vmatprep.subr.mxu0 0.0
        %2592 = vmatpush1.msra.mxu0 0.0
        %2593 = vmatprep.subr.mxu0 0.0
        %2594 = vmatpush1.msra.mxu0 0.0
        %2595 = vmatprep.subr.mxu0 0.0
        %2596 = vmatpush1.msra.mxu0 0.0
        %2597 = vmatprep.subr.mxu0 0.0
        %2598 = vmatpush1.msra.mxu0 0.0
        %2599 = vmatprep.subr.mxu0 0.0
        %2600 = vmatpush1.msra.mxu0 0.0
        %2601 = vmatprep.subr.mxu0 0.0
        %2602 = vmatpush1.msra.mxu0 0.0
        %2603 = vmatprep.subr.mxu0 0.0
        %2604 = vmatpush1.msra.mxu0 0.0
        %2605 = vmatprep.subr.mxu0 0.0
        %2606 = vmatpush1.msra.mxu0 0.0
        %2607 = vmatprep.subr.mxu0 0.0
        %2608 = vmatpush1.msra.mxu0 0.0
        %2609 = vmatprep.subr.mxu0 0.0
        %2610 = vmatpush1.msra.mxu0 0.0
        %2611 = vmatprep.mubr.f32.mxu0 0.0
        %2612 = vmatmul.mubr.f32.gmra.mrb[0].mxu0 %v2545
        %v2613 = vpop.f32.mrb[0].mxu0
        %v2614 = vadd.f32 0.0, %v2613
        %v2615 = vpop.f32.mrb[0].mxu0
        %2616 = vdwg.mxu0
        %2617 = vrot.lane.b32.xlu0 %v682, 96
        %v2618 = vpop.permute.xlu0 %2617
        %v2621 = vsel %vm683, %v1780, 0
        %2623 = vmatprep.subr.mxu0 0.0
        %2624 = vmatpush1.msra.mxu0 %v2618
        %2625 = vmatprep.subr.mxu0 0.0
        %2626 = vmatpush1.msra.mxu0 0.0
        %2627 = vmatprep.subr.mxu0 0.0
        %2628 = vmatpush1.msra.mxu0 0.0
        %2629 = vmatprep.subr.mxu0 0.0
        %2630 = vmatpush1.msra.mxu0 0.0
        %2631 = vmatprep.subr.mxu0 0.0
        %2632 = vmatpush1.msra.mxu0 0.0
        %2633 = vmatprep.subr.mxu0 0.0
        %2634 = vmatpush1.msra.mxu0 0.0
        %2635 = vmatprep.subr.mxu0 0.0
        %2636 = vmatpush1.msra.mxu0 0.0
        %2637 = vmatprep.subr.mxu0 0.0
        %2638 = vmatpush1.msra.mxu0 0.0
        %2639 = vmatprep.subr.mxu0 0.0
        %2640 = vmatpush1.msra.mxu0 0.0
        %2641 = vmatprep.subr.mxu0 0.0
        %2642 = vmatpush1.msra.mxu0 0.0
        %2643 = vmatprep.subr.mxu0 0.0
        %2644 = vmatpush1.msra.mxu0 0.0
        %2645 = vmatprep.subr.mxu0 0.0
        %2646 = vmatpush1.msra.mxu0 0.0
        %2647 = vmatprep.subr.mxu0 0.0
        %2648 = vmatpush1.msra.mxu0 0.0
        %2649 = vmatprep.subr.mxu0 0.0
        %2650 = vmatpush1.msra.mxu0 0.0
        %2651 = vmatprep.subr.mxu0 0.0
        %2652 = vmatpush1.msra.mxu0 0.0
        %2653 = vmatprep.subr.mxu0 0.0
        %2654 = vmatpush1.msra.mxu0 0.0
        %2655 = vmatprep.subr.mxu0 0.0
        %2656 = vmatpush1.msra.mxu0 0.0
        %2657 = vmatprep.subr.mxu0 0.0
        %2658 = vmatpush1.msra.mxu0 0.0
        %2659 = vmatprep.subr.mxu0 0.0
        %2660 = vmatpush1.msra.mxu0 0.0
        %2661 = vmatprep.subr.mxu0 0.0
        %2662 = vmatpush1.msra.mxu0 0.0
        %2663 = vmatprep.subr.mxu0 0.0
        %2664 = vmatpush1.msra.mxu0 0.0
        %2665 = vmatprep.subr.mxu0 0.0
        %2666 = vmatpush1.msra.mxu0 0.0
        %2667 = vmatprep.subr.mxu0 0.0
        %2668 = vmatpush1.msra.mxu0 0.0
        %2669 = vmatprep.subr.mxu0 0.0
        %2670 = vmatpush1.msra.mxu0 0.0
        %2671 = vmatprep.subr.mxu0 0.0
        %2672 = vmatpush1.msra.mxu0 0.0
        %2673 = vmatprep.subr.mxu0 0.0
        %2674 = vmatpush1.msra.mxu0 0.0
        %2675 = vmatprep.subr.mxu0 0.0
        %2676 = vmatpush1.msra.mxu0 0.0
        %2677 = vmatprep.subr.mxu0 0.0
        %2678 = vmatpush1.msra.mxu0 0.0
        %2679 = vmatprep.subr.mxu0 0.0
        %2680 = vmatpush1.msra.mxu0 0.0
        %2681 = vmatprep.subr.mxu0 0.0
        %2682 = vmatpush1.msra.mxu0 0.0
        %2683 = vmatprep.subr.mxu0 0.0
        %2684 = vmatpush1.msra.mxu0 0.0
        %2685 = vmatprep.subr.mxu0 0.0
        %2686 = vmatpush1.msra.mxu0 0.0
        %2687 = vmatprep.mubr.f32.mxu0 0.0
        %2688 = vmatmul.mubr.f32.gmra.mrb[0].mxu0 %v2621
        %v2689 = vpop.f32.mrb[0].mxu0
        %v2690 = vadd.f32 0.0, %v2689
        %v2691 = vpop.f32.mrb[0].mxu0
        %2692 = vdwg.mxu0
        %v2693 = vsel %vm683, %v1854, 0.0
        %v2694 = vsel %vm683, %v1930, 0.0
        %v2695 = vadd.f32 %v2693, %v2694
        %v2696 = vsel %vm683, %v2006, 0.0
        %v2697 = vadd.f32 %v2695, %v2696
        %v2698 = vsel %vm683, %v2082, 0.0
        %v2699 = vsel %vm683, %v2158, 0.0
        %v2700 = vadd.f32 %v2698, %v2699
        %v2701 = vsel %vm683, %v2234, 0.0
        %v2702 = vadd.f32 %v2700, %v2701
        %v2703 = vsel %vm683, %v2310, 0.0
        %v2704 = vsel %vm683, %v2386, 0.0
        %v2705 = vadd.f32 %v2703, %v2704
        %v2706 = vsel %vm683, %v2462, 0.0
        %v2707 = vadd.f32 %v2705, %v2706
        %v2708 = vsel %vm683, %v2538, 0.0
        %v2709 = vsel %vm683, %v2614, 0.0
        %v2710 = vadd.f32 %v2708, %v2709
        %v2711 = vsel %vm683, %v2690, 0.0
        %v2712 = vadd.f32 %v2710, %v2711
        %2714 = vrot.lane.b32.xlu0 %v2702, 8
        %v2715 = vpop.permute.xlu0 %2714
        %2718 = vrot.lane.b32.xlu0 %v2707, 16
        %v2719 = vpop.permute.xlu0 %2718
        %2722 = vrot.lane.b32.xlu0 %v2712, 24
        %v2723 = vpop.permute.xlu0 %2722
        %v2725 = vsel %vm683, %v2697, %v2715
        %vm2726 = vcmask 130048
        %v2727 = vsel %vm2726, %v2725, %v2719
        %vm2728 = vcmask 195584
        %v2729 = vsel %vm2728, %v2727, %v2723
        %v2730 = vpack.c.bf16 %v2729, %v2729
        %v2731 = vld [vmem:[%s9] sm:$0xf]
        %v2732 = vld [vmem:[%s9 + $0x4] sm:$0xf]
        %v2733 = vld [vmem:[%s9 + $0x8] sm:$0xf]
        %v2734 = vld [vmem:[%s9 + $0xc] sm:$0xf]
        %v2735 = vld [vmem:[%s10] sm:$0x1]
        %v2737 = vlaneseq
        %v2738 = vshrl.u32 %v2737, 7
        %v2739 = vsub.s32 0, %v2738
        %v2740 = vrot.slane %v2735, %v2739
        %v2746 = vunpack.c.l.b16 %v2731
        %v2747 = vunpack.c.l.b16 %v2732
        %v2748 = vunpack.c.l.b16 %v2733
        %v2749 = vunpack.c.l.b16 %v2734
        %v2750 = vpack.c.b16 %v2747, %v2746
        %v2751 = vpack.c.b16 %v2749, %v2748
        %v2755 = vsel %vm455, %v2730, 0
        %2757 = vmatprep.subr.bf16.mxu0 0
        %2758 = vmatpush1.bf16.msra.mxu0 %v2750
        %2759 = vmatprep.subr.bf16.mxu0 0
        %2760 = vmatpush1.bf16.msra.mxu0 %v2751
        %2761 = vmatprep.subr.bf16.mxu0 0
        %2762 = vmatpush1.bf16.msra.mxu0 0
        %2763 = vmatprep.subr.bf16.mxu0 0
        %2764 = vmatpush1.bf16.msra.mxu0 0
        %2765 = vmatprep.subr.bf16.mxu0 0
        %2766 = vmatpush1.bf16.msra.mxu0 0
        %2767 = vmatprep.subr.bf16.mxu0 0
        %2768 = vmatpush1.bf16.msra.mxu0 0
        %2769 = vmatprep.subr.bf16.mxu0 0
        %2770 = vmatpush1.bf16.msra.mxu0 0
        %2771 = vmatprep.subr.bf16.mxu0 0
        %2772 = vmatpush1.bf16.msra.mxu0 0
        %2773 = vmatprep.subr.bf16.mxu0 0
        %2774 = vmatpush1.bf16.msra.mxu0 0
        %2775 = vmatprep.subr.bf16.mxu0 0
        %2776 = vmatpush1.bf16.msra.mxu0 0
        %2777 = vmatprep.subr.bf16.mxu0 0
        %2778 = vmatpush1.bf16.msra.mxu0 0
        %2779 = vmatprep.subr.bf16.mxu0 0
        %2780 = vmatpush1.bf16.msra.mxu0 0
        %2781 = vmatprep.subr.bf16.mxu0 0
        %2782 = vmatpush1.bf16.msra.mxu0 0
        %2783 = vmatprep.subr.bf16.mxu0 0
        %2784 = vmatpush1.bf16.msra.mxu0 0
        %2785 = vmatprep.subr.bf16.mxu0 0
        %2786 = vmatpush1.bf16.msra.mxu0 0
        %2787 = vmatprep.subr.bf16.mxu0 0
        %2788 = vmatpush1.bf16.msra.mxu0 0
        %2789 = vmatprep.mubr.bf16.mxu0 0
        %2790 = vmatmul.mubr.bf16.gmra.mrb[0].mxu0 %v2755
        %v2791 = vpop.f32.mrb[0].mxu0
        %v2792 = vadd.f32 %v2740, %v2791
        %v2793 = vpop.f32.mrb[0].mxu0
        %v2794 = vpop.f32.mrb[0].mxu0
        %v2795 = vpop.f32.mrb[0].mxu0
        %2796 = vdwg.mxu0
        %v2797 = vadd.f32 %v2792, %v454
        %2798 = vst.msk [vmem:[%s431] sm:$0xff] %vm455, %v2797
        %s2799 = sand.u32 %s289, 1
        %s2800 = scalar_lea.sflag [#allocation3], %s2799
        %s2801 = sand.u32 %s289, 1
        %s2802 = smul.addr %s2801, 8
        %s2803 = scalar_lea.vmem [#allocation2], %s2802
        // Predicated region
        $region65: #{hcam_block_forward.3} parent=63 // pred_check
          %p2804 = pneg %p299
        $region66: #{hcam_block_forward.3} parent=63 // pred_check_branch
          %2806 = sbr.rel (%p2804) target = $region68
        $region67: #{hcam_block_forward.3} parent=63 // pred_region
          %s2808 = ssub.s32 128, 128
          %2809 = vsyncadd %s2800, %s2808
          %s2810 = smul.addr %s25, 128
          %s2811 = scalar_lea.hbm %s11, %s2810
          %s2813 = sshll.u32 %s2803, 4
          %s2814 = int_to_ptr.vmem [resolvable:$true] %s2813
          %2816 = dma.vmem_to_hbm [thread:$0]  %s2814, 128, %s2811, %s2800
        $region68: #{hcam_block_forward.3} parent=63 // pred_fallthru
          _
      $region64: #{hcam_block_forward.3} parent=5 // pred_fallthru
        _
      %p2817 = scmp.le.s32.totalorder 2, %s20
      // Predicated region
      $region69: #{hcam_block_forward.3} parent=5 // pred_check
        %p2818 = pneg %p2817
      $region70: #{hcam_block_forward.3} parent=5 // pred_check_branch
        %2820 = sbr.rel (%p2818) target = $region72
      $region71: #{hcam_block_forward.3} parent=5 // pred_region
        %s2821 = ssub.s32 %s20, 2
        // Predicated region
        $region73: #{hcam_block_forward.3} parent=71 // pred_check
          %p2822 = pneg %p305
        $region74: #{hcam_block_forward.3} parent=71 // pred_check_branch
          %2824 = sbr.rel (%p2822) target = $region76
        $region75: #{hcam_block_forward.3} parent=71 // pred_region
          %s2825 = sand.u32 %s290, 1
          %s2826 = scalar_lea.sflag [#allocation3], %s2825
          %s2827 = sand.u32 %s290, 1
          %s2828 = smul.addr %s2827, 8
          %s2829 = scalar_lea.vmem [#allocation2], %s2828
          %2830 = dma.done %s2826, 128
        $region76: #{hcam_block_forward.3} parent=71 // pred_fallthru
          _
      $region72: #{hcam_block_forward.3} parent=5 // pred_fallthru
        _
    $region6: #{hcam_block_forward.3} parent=1 // loop_footer
      %s24 = sadd.s32 1, %s20
    $region7: #{hcam_block_forward.3} parent=1 // loop_footer_branch
      %19 = sbr.rel target = $region3
    $region8: #{hcam_block_forward.3} parent=1 // loop_exit
      _
    %2831 = vsyncpa [#allocation3], 1
    %s2832 = scalar_lea.sflag [#allocation3], 1
    %2833 = vsyncpa %s2832, 1

</llo_original>
